<compile_context>
chip_gen: v7x
topology: tpu7x:2x2x1
jax: 0.10.0
libtpu: 0.0.40
codegen_flags: <defaults>
</compile_context>

<pallas_src>
import functools
import numpy as np

import jax
import jax.numpy as jnp
from jax import lax
from jax.experimental import pallas as pl
from jax.experimental.pallas import tpu as pltpu


BF16 = jnp.bfloat16
F32 = jnp.float32
NEG = -1e9


# -----------------------------------------------------------------------------
# helpers
# -----------------------------------------------------------------------------
def _round_up(x, m):
    return ((x + m - 1) // m) * m


def _pad2(a, rows, cols, dtype):
    a = a.astype(dtype)
    pr, pc = rows - a.shape[0], cols - a.shape[1]
    if pr or pc:
        a = jnp.pad(a, ((0, pr), (0, pc)))
    return a


# -----------------------------------------------------------------------------
# Pallas kernel: tiled linear  y = x @ w (+ b) (+ relu), bf16 operands, f32 acc
# -----------------------------------------------------------------------------
def _linear_kernel(x_ref, w_ref, b_ref, o_ref, acc_ref, *, activation):
    @pl.when(pl.program_id(2) == 0)
    def _init():
        acc_ref[...] = jnp.zeros_like(acc_ref)

    acc_ref[...] += jnp.dot(x_ref[...], w_ref[...],
                            preferred_element_type=jnp.float32)

    @pl.when(pl.program_id(2) == pl.num_programs(2) - 1)
    def _done():
        y = acc_ref[...] + b_ref[...]
        if activation == "relu":
            y = jnp.maximum(y, 0.0)
        o_ref[...] = y.astype(o_ref.dtype)


def pallas_linear(x, w, b=None, activation=None, out_dtype=F32):
    """y = x @ w (+ b) (+ relu).  x: (..., K), w: (K, N).  bf16 in, f32 acc."""
    orig_shape = x.shape
    K = orig_shape[-1]
    M = int(np.prod(orig_shape[:-1])) if len(orig_shape) > 1 else 1
    N = w.shape[1]
    x2 = x.reshape(M, K)

    # pad to lane-dense, (8,128)-aligned shapes, then pick tiles (<=512/512/1024)
    Mp = _round_up(M, 8)
    Kp = _round_up(K, 128)
    Np = _round_up(N, 128)
    TM = min(512, Mp)
    TN = min(512, Np)
    TK = min(1024, Kp)
    Mp = _round_up(Mp, TM)
    Kp = _round_up(Kp, TK)
    Np = _round_up(Np, TN)

    xb = _pad2(x2, Mp, Kp, BF16)
    wb = _pad2(w, Kp, Np, BF16)
    if b is None:
        bb = jnp.zeros((1, Np), F32)
    else:
        bb = _pad2(b.reshape(1, N), 1, Np, F32)

    grid = (Mp // TM, Np // TN, Kp // TK)
    flops = 2 * Mp * Np * Kp
    out_bytes = 2 if out_dtype == BF16 else 4
    bytes_acc = (Mp * Kp + Kp * Np) * 2 + Mp * Np * out_bytes + Np * 4

    out = pl.pallas_call(
        functools.partial(_linear_kernel, activation=activation),
        out_shape=jax.ShapeDtypeStruct((Mp, Np), out_dtype),
        grid=grid,
        in_specs=[pl.BlockSpec((TM, TK), lambda i, j, k: (i, k)),
                  pl.BlockSpec((TK, TN), lambda i, j, k: (k, j)),
                  pl.BlockSpec((1, TN), lambda i, j, k: (0, j))],
        out_specs=pl.BlockSpec((TM, TN), lambda i, j, k: (i, j)),
        scratch_shapes=[pltpu.VMEM((TM, TN), jnp.float32)],
        compiler_params=pltpu.CompilerParams(
            dimension_semantics=("parallel", "parallel", "arbitrary"),
            vmem_limit_bytes=48 * 1024 * 1024),
        cost_estimate=pl.CostEstimate(flops=int(flops), transcendentals=0,
                                      bytes_accessed=int(bytes_acc)),
    )(xb, wb, bb)
    out = out[:M, :N]
    return out.reshape(orig_shape[:-1] + (N,))


# -----------------------------------------------------------------------------
# Pallas kernel: fused VideoAdjLearner + 2-layer GCN (both streams stacked)
#   adj = softmax_row(relu(relu(xW1)W2) @ (.)^T + col_bias)   (never leaves VMEM)
#   g   = relu(adj @ (x @ G1 + b1)); out = relu(adj @ (g @ G2 + b2))
# -----------------------------------------------------------------------------
def _adj_gcn_kernel(x_ref, bias_ref, aw1_ref, ab1_ref, aw2_ref, ab2_ref,
                    gw1_ref, gb1_ref, gw2_ref, gb2_ref, o_ref):
    x = x_ref[0, 0]                                            # (N, H) bf16
    bias = bias_ref[0]                                         # (1, N) f32

    h = jnp.dot(x, aw1_ref[0], preferred_element_type=jnp.float32) + ab1_ref[0]
    h = jnp.maximum(h, 0.0)
    h = jnp.dot(h.astype(BF16), aw2_ref[0],
                preferred_element_type=jnp.float32) + ab2_ref[0]
    h = jnp.maximum(h, 0.0)
    hb = h.astype(BF16)
    e = lax.dot_general(hb, hb, (((1,), (1,)), ((), ())),
                        preferred_element_type=jnp.float32)    # (N, N)
    e = e + bias                                               # column mask bias
    e = e - jnp.max(e, axis=-1, keepdims=True)
    p = jnp.exp(e)
    adj = (p * pl.reciprocal(jnp.sum(p, axis=-1, keepdims=True),
                             approx=True)).astype(BF16)

    g = jnp.dot(x, gw1_ref[0], preferred_element_type=jnp.float32) + gb1_ref[0]
    g = jnp.maximum(jnp.dot(adj, g.astype(BF16),
                            preferred_element_type=jnp.float32), 0.0)
    g = jnp.dot(g.astype(BF16), gw2_ref[0],
                preferred_element_type=jnp.float32) + gb2_ref[0]
    g = jnp.maximum(jnp.dot(adj, g.astype(BF16),
                            preferred_element_type=jnp.float32), 0.0)
    o_ref[0, 0] = g.astype(o_ref.dtype)


def pallas_adj_gcn(x, v_bias, aw1, ab1, aw2, ab2, gw1, gb1, gw2, gb2):
    S, B, N, H = x.shape                                       # S = 2 streams
    flops = S * B * (8 * N * H * H + 6 * N * N * H)
    bytes_acc = S * B * N * H * 4 + B * N * 4 + S * H * H * 12 + S * H * 24
    return pl.pallas_call(
        _adj_gcn_kernel,
        out_shape=jax.ShapeDtypeStruct((S, B, N, H), BF16),
        grid=(S, B),
        in_specs=[pl.BlockSpec((1, 1, N, H), lambda s, b: (s, b, 0, 0)),
                  pl.BlockSpec((1, 1, N), lambda s, b: (b, 0, 0)),
                  pl.BlockSpec((1, H, H), lambda s, b: (s, 0, 0)),
                  pl.BlockSpec((1, 1, H), lambda s, b: (s, 0, 0)),
                  pl.BlockSpec((1, H, H), lambda s, b: (s, 0, 0)),
                  pl.BlockSpec((1, 1, H), lambda s, b: (s, 0, 0)),
                  pl.BlockSpec((1, H, H), lambda s, b: (s, 0, 0)),
                  pl.BlockSpec((1, 1, H), lambda s, b: (s, 0, 0)),
                  pl.BlockSpec((1, H, H), lambda s, b: (s, 0, 0)),
                  pl.BlockSpec((1, 1, H), lambda s, b: (s, 0, 0))],
        out_specs=pl.BlockSpec((1, 1, N, H), lambda s, b: (s, b, 0, 0)),
        compiler_params=pltpu.CompilerParams(
            dimension_semantics=("parallel", "parallel")),
        cost_estimate=pl.CostEstimate(flops=int(flops),
                                      transcendentals=int(S * B * N * N),
                                      bytes_accessed=int(bytes_acc)),
    )(x, v_bias, aw1, ab1, aw2, ab2, gw1, gb1, gw2, gb2)


# -----------------------------------------------------------------------------
# Pallas kernel: fused BAN (all glimpses, both streams stacked)
#   per glimpse g: logits = q @ (v att_w[g])^T + row_bias + col_bias
#                  att = global softmax;  ctx = att @ v
#                  b_emb = sum_q(ctx * q);  q += b_emb @ proj_w[g] + proj_b[g]
# -----------------------------------------------------------------------------
def _ban_kernel(v_ref, q_ref, qb_ref, vb_ref, aw_ref, pw_ref, pb_ref, o_ref,
                *, glimpse):
    v = v_ref[0, 0]                                            # (Nv, H) bf16
    q = q_ref[0]                                               # (Nq, H) f32
    bq = qb_ref[0]                                             # (Nq, 1)
    bv = vb_ref[0]                                             # (1, Nv)
    for g in range(glimpse):
        vW = jnp.dot(v, aw_ref[0, g],
                     preferred_element_type=jnp.float32)       # (Nv, H)
        logits = lax.dot_general(q.astype(BF16), vW.astype(BF16),
                                 (((1,), (1,)), ((), ())),
                                 preferred_element_type=jnp.float32)  # (Nq, Nv)
        logits = logits + bq + bv                              # row+col mask bias
        m = jnp.max(jnp.max(logits, axis=-1, keepdims=True), axis=-2, keepdims=True)
        p = jnp.exp(logits - m)
        s = jnp.sum(jnp.sum(p, axis=-1, keepdims=True), axis=-2, keepdims=True)
        att = p * pl.reciprocal(s, approx=True)
        ctx = jnp.dot(att.astype(BF16), v,
                      preferred_element_type=jnp.float32)      # (Nq, H)
        b_emb = jnp.sum(ctx * q, axis=0, keepdims=True)        # (1, H)
        delta = jnp.dot(b_emb.astype(BF16), pw_ref[0, g],
                        preferred_element_type=jnp.float32) + pb_ref[0, g]
        q = q + delta
    o_ref[0, 0] = q


def pallas_ban(v, q, q_bias, v_bias, att_w, proj_w, proj_b):
    S, B, Nv, H = v.shape
    Nq = q.shape[1]
    G = att_w.shape[1]
    flops = S * B * G * (2 * Nv * H * H + 4 * Nq * Nv * H + 2 * H * H)
    bytes_acc = (S * B * Nv * H * 2 + B * Nq * H * 4 + S * G * H * H * 4
                 + S * B * Nq * H * 4)
    return pl.pallas_call(
        functools.partial(_ban_kernel, glimpse=G),
        out_shape=jax.ShapeDtypeStruct((S, B, Nq, H), F32),
        grid=(S, B),
        in_specs=[pl.BlockSpec((1, 1, Nv, H), lambda s, b: (s, b, 0, 0)),
                  pl.BlockSpec((1, Nq, H), lambda s, b: (b, 0, 0)),
                  pl.BlockSpec((1, Nq, 1), lambda s, b: (b, 0, 0)),
                  pl.BlockSpec((1, 1, Nv), lambda s, b: (b, 0, 0)),
                  pl.BlockSpec((1, G, H, H), lambda s, b: (s, 0, 0, 0)),
                  pl.BlockSpec((1, G, H, H), lambda s, b: (s, 0, 0, 0)),
                  pl.BlockSpec((1, G, 1, H), lambda s, b: (s, 0, 0, 0))],
        out_specs=pl.BlockSpec((1, 1, Nq, H), lambda s, b: (s, b, 0, 0)),
        compiler_params=pltpu.CompilerParams(
            dimension_semantics=("parallel", "parallel")),
        cost_estimate=pl.CostEstimate(flops=int(flops),
                                      transcendentals=int(S * B * G * Nq * Nv),
                                      bytes_accessed=int(bytes_acc)),
    )(v, q, q_bias, v_bias, att_w, proj_w, proj_b)


# -----------------------------------------------------------------------------
# Pallas kernel: fused MotionApprFusion self-attention
#   h = relu(hU + h_bias);  Q/K/V = h @ Wq/Wk/Wv (separate refs, no lane slicing)
#   att = softmax_row(QK^T/sqrt(H) + col_bias);  out = relu(att V @ Wo + bo + h)
# -----------------------------------------------------------------------------
def _fusion_kernel(hU_ref, hb_ref, cb_ref, wq_ref, wk_ref, wv_ref, wo_ref,
                   bo_ref, o_ref, *, scale):
    h = jnp.maximum(hU_ref[0].astype(jnp.float32) + hb_ref[0], 0.0)   # (L, H)
    h16 = h.astype(BF16)
    Q = jnp.dot(h16, wq_ref[...], preferred_element_type=jnp.float32)
    K = jnp.dot(h16, wk_ref[...], preferred_element_type=jnp.float32)
    V = jnp.dot(h16, wv_ref[...], preferred_element_type=jnp.float32)
    logits = lax.dot_general(Q.astype(BF16), K.astype(BF16),
                             (((1,), (1,)), ((), ())),
                             preferred_element_type=jnp.float32) * scale
    logits = logits + cb_ref[0]                                       # col bias
    logits = logits - jnp.max(logits, axis=-1, keepdims=True)
    p = jnp.exp(logits)
    att = p * pl.reciprocal(jnp.sum(p, axis=-1, keepdims=True), approx=True)
    ctx = jnp.dot(att.astype(BF16), V.astype(BF16),
                  preferred_element_type=jnp.float32)                 # (L, H)
    out = jnp.dot(ctx.astype(BF16), wo_ref[...],
                  preferred_element_type=jnp.float32) + bo_ref[...]
    o_ref[0] = jnp.maximum(out + h, 0.0)


def pallas_fusion_attn(hU, h_bias, col_bias, wq, wk, wv, wo, bo):
    B, L, H = hU.shape
    scale = 1.0 / float(np.sqrt(H))
    flops = B * (8 * L * H * H + 4 * L * L * H)
    bytes_acc = B * L * H * 2 + 4 * H * H * 2 + B * L * H * 4
    return pl.pallas_call(
        functools.partial(_fusion_kernel, scale=scale),
        out_shape=jax.ShapeDtypeStruct((B, L, H), F32),
        grid=(B,),
        in_specs=[pl.BlockSpec((1, L, H), lambda i: (i, 0, 0)),
                  pl.BlockSpec((1, 1, H), lambda i: (i, 0, 0)),
                  pl.BlockSpec((1, 1, L), lambda i: (i, 0, 0)),
                  pl.BlockSpec((H, H), lambda i: (0, 0)),
                  pl.BlockSpec((H, H), lambda i: (0, 0)),
                  pl.BlockSpec((H, H), lambda i: (0, 0)),
                  pl.BlockSpec((H, H), lambda i: (0, 0)),
                  pl.BlockSpec((1, H), lambda i: (0, 0))],
        out_specs=pl.BlockSpec((1, L, H), lambda i: (i, 0, 0)),
        compiler_params=pltpu.CompilerParams(dimension_semantics=("parallel",)),
        cost_estimate=pl.CostEstimate(flops=int(flops),
                                      transcendentals=int(B * L * L),
                                      bytes_accessed=int(bytes_acc)),
    )(hU, h_bias, col_bias, wq, wk, wv, wo, bo)


# -----------------------------------------------------------------------------
# Model glue (plain JAX for light/sequential parts, Pallas for heavy compute)
# -----------------------------------------------------------------------------
def make_mask(seq2d, lengths):
    # Reproduces MASN.make_mask quirk: zeroes from min(L-1, length) onward.
    L = seq2d.shape[1]
    idx = jnp.arange(L)[None, :]
    cutoff = jnp.minimum(L - 1, lengths)[:, None]
    return (idx < cutoff).astype(F32)


def position_encoding(n_filters, max_len):
    pos = np.arange(max_len)[:, None].astype(np.float32)
    div = np.exp(np.arange(0, n_filters, 2).astype(np.float32)
                 * -(np.log(10000.0) / n_filters))
    pe = np.zeros((max_len, n_filters), np.float32)
    pe[:, 0::2] = np.sin(pos * div)
    pe[:, 1::2] = np.cos(pos * div)
    return jnp.asarray(pe)


def _lstm_direction(x_proj, w_hh, b_hh, reverse):
    # TODO(synk): pack_padded_sequence / sequential LSTM recurrence has no clean
    # Pallas equivalent; recurrence stays in lax.scan (input projections are
    # done with the tiled Pallas linear kernel).
    B = x_proj.shape[0]
    Hd = w_hh.shape[0]

    def step(carry, xt):
        h, c = carry
        gates = xt + h @ w_hh + b_hh
        i, f, g, o = jnp.split(gates, 4, axis=-1)
        i = jax.nn.sigmoid(i); f = jax.nn.sigmoid(f)
        g = jnp.tanh(g);       o = jax.nn.sigmoid(o)
        c = f * c + i * g
        h = o * jnp.tanh(c)
        return (h, c), h

    xs = jnp.swapaxes(x_proj, 0, 1)
    if reverse:
        xs = xs[::-1]
    init = (jnp.zeros((B, Hd), F32), jnp.zeros((B, Hd), F32))
    (h_last, _), hs = jax.lax.scan(step, init, xs)
    hs = jnp.swapaxes(hs, 0, 1)
    if reverse:
        hs = hs[:, ::-1]
    return hs, h_last


def sentence_encoder(p, q_emb):
    # Bidirectional LSTM (hidden//2 per direction); both input projections are
    # stacked into one lane-dense matmul.
    wih = jnp.concatenate([p['lstm_wih_f'], p['lstm_wih_b']], axis=1)   # (H, 8*Hd)
    bih = jnp.concatenate([p['lstm_bih_f'], p['lstm_bih_b']], axis=0)
    xproj = pallas_linear(q_emb, wih, bih)
    G = p['lstm_wih_f'].shape[1]
    xf = xproj[..., :G]
    xb = xproj[..., G:]
    hs_f, h_f = _lstm_direction(xf, p['lstm_whh_f'], p['lstm_bhh_f'], False)
    hs_b, h_b = _lstm_direction(xb, p['lstm_whh_b'], p['lstm_bhh_b'], True)
    q_output = jnp.concatenate([hs_f, hs_b], axis=-1)
    q_hidden = jnp.concatenate([h_f, h_b], axis=-1)
    return q_output, q_hidden


def attflat(p, x, x_mask):
    a = pallas_linear(x, p['w1'], p['b1'], activation="relu")          # (B,L,H)
    # N=1 projection kept in plain JAX (too narrow for a lane-dense Pallas store)
    logits = jnp.einsum('blh,ho->blo', a, p['w2']) + p['b2']           # (B,L,1)
    logits = jnp.where(x_mask[..., None] > 0, logits, NEG)
    w = jax.nn.softmax(logits, axis=1)
    x_att = jnp.sum(w * x, axis=1)                                     # (B,H)
    return pallas_linear(x_att, p['merge_w'], p['merge_b'])


def model_block(params, res_avg, i3d_avg, res_obj, bbox, i3d_obj,
                video_length, all_sen_inputs, all_ques_length):
    H = params['emb_proj_w'].shape[1]          # static hidden size
    bsz, v_len, obj_num, _ = res_obj.shape

    q_mask = make_mask(all_sen_inputs, all_ques_length)                # (B,Q)
    v_mask = make_mask(res_avg[:, :, 0], video_length)                 # (B,V)

    # ---- question pathway --------------------------------------------------
    q_emb0 = jnp.take(params['glove'], all_sen_inputs, axis=0)
    q_emb = pallas_linear(q_emb0, params['emb_proj_w'], activation="relu",
                          out_dtype=BF16)
    q_output, q_hidden = sentence_encoder(params, q_emb)
    q_len = q_output.shape[1]
    q_mask = q_mask[:, :q_len]

    # ---- per-object / per-frame features (bf16, concat -> split-weight) -----
    res_obj_c = pallas_linear(res_obj, params['comp_appr_local'], out_dtype=BF16)
    i3d_obj_c = pallas_linear(i3d_obj, params['comp_mot_local'], out_dtype=BF16)
    res_avg_c = pallas_linear(res_avg, params['comp_appr_global'])     # (B,V,H) f32
    i3d_avg_c = pallas_linear(i3d_avg, params['comp_mot_global'])
    bbox_e = pallas_linear(bbox, params['bbox_w'], params['bbox_b'],
                           out_dtype=BF16)                             # (B,V,O,64)

    pe64 = params['pe64'][:v_len]                                      # (V,64)
    peH = params['peH'][:v_len]                                        # (V,H)

    # split local-proj / v-proj weights (concat(a,b) @ W == a@W_top + b@W_bot)
    a_loc_w, a_loc_pe_w = params['appr_local_w'][:H + 64], params['appr_local_w'][H + 64:]
    m_loc_w, m_loc_pe_w = params['mot_local_w'][:H + 64], params['mot_local_w'][H + 64:]
    a_v_top, a_v_bot = params['appr_v_w'][:H], params['appr_v_w'][H:]
    m_v_top, m_v_bot = params['mot_v_w'][:H], params['mot_v_w'][H:]

    appr_obj_in = jnp.concatenate([res_obj_c, bbox_e], axis=-1)        # (B,V,O,H+64)
    mot_obj_in = jnp.concatenate([i3d_obj_c, bbox_e], axis=-1)
    appr_local = pallas_linear(appr_obj_in, a_loc_w, params['appr_local_b'],
                               out_dtype=BF16)
    motion_local = pallas_linear(mot_obj_in, m_loc_w, params['mot_local_b'],
                                 out_dtype=BF16)

    appr_v_main = pallas_linear(appr_local, a_v_top, out_dtype=BF16)   # (B,V,O,H)
    motion_v_main = pallas_linear(motion_local, m_v_top, out_dtype=BF16)

    # per-(b,v) additive terms: pos-encoding half of the local proj (folded
    # through the v-proj top) and the global-feature half (computed once,
    # broadcast over objects -- no obj_num x redundant FLOPs / HBM).
    pe_to_apprv = (pe64 @ a_loc_pe_w) @ a_v_top                        # (V,H)
    pe_to_motv = (pe64 @ m_loc_pe_w) @ m_v_top
    per_bv_appr = (pe_to_apprv[None] * v_mask[:, :, None]
                   + (res_avg_c + peH[None]) @ a_v_bot
                   + params['appr_v_b'][None, None])                   # (B,V,H)
    per_bv_mot = (pe_to_motv[None] * v_mask[:, :, None]
                  + (i3d_avg_c + peH[None]) @ m_v_bot
                  + params['mot_v_b'][None, None])

    N = v_len * obj_num
    appr_v = (appr_v_main + per_bv_appr[:, :, None, :].astype(BF16)
              ).reshape(bsz, N, H)
    motion_v = (motion_v_main + per_bv_mot[:, :, None, :].astype(BF16)
                ).reshape(bsz, N, H)

    v_mask_expand = jnp.broadcast_to(
        v_mask[:, :, None], (bsz, v_len, obj_num)).reshape(bsz, N)
    v_bias = jnp.where(v_mask_expand > 0, 0.0, NEG)[:, None, :]        # (B,1,N)
    q_bias = jnp.where(q_mask > 0, 0.0, NEG)[:, :, None]               # (B,Q,1)

    # ---- fused adjacency + GCN, both streams in one call ---------------------
    def stk(a, b, dt):
        return jnp.stack([a, b]).astype(dt)

    pa, pm = params['appr_adj'], params['mot_adj']
    pga, pgm = params['appr_gcn'], params['mot_gcn']
    x_stacked = jnp.stack([appr_v, motion_v], axis=0)                  # (2,B,N,H)
    gcn_out = pallas_adj_gcn(
        x_stacked, v_bias,
        stk(pa['w1'], pm['w1'], BF16), stk(pa['b1'], pm['b1'], F32)[:, None, :],
        stk(pa['w2'], pm['w2'], BF16), stk(pa['b2'], pm['b2'], F32)[:, None, :],
        stk(pga['w1'], pgm['w1'], BF16), stk(pga['b1'], pgm['b1'], F32)[:, None, :],
        stk(pga['w2'], pgm['w2'], BF16), stk(pga['b2'], pgm['b2'], F32)[:, None, :],
    )                                                                  # (2,B,N,H) bf16

    # ---- fused BAN (all 4 glimpses, both streams) ----------------------------
    pba, pbm = params['ban_appr'], params['ban_mot']
    att_w = stk(pba['att_w'], pbm['att_w'], BF16)                      # (2,4,H,H)
    proj_w = stk(pba['proj_w'], pbm['proj_w'], BF16)                   # (2,4,H,H)
    proj_b = stk(pba['proj_b'], pbm['proj_b'], F32)[:, :, None, :]     # (2,4,1,H)
    vq = pallas_ban(gcn_out, q_output.astype(F32), q_bias, v_bias,
                    att_w, proj_w, proj_b)                             # (2,B,Q,H)

    U = jnp.concatenate([vq[0], vq[1]], axis=1)                        # (B,2Q,H)
    q_mask_ = jnp.concatenate([q_mask, q_mask], axis=1)                # (B,2Q)

    # ---- fused MotionApprFusion self-attention -------------------------------
    pf = params['fusion']
    hU = pallas_linear(U, pf['in_w'][:H], out_dtype=BF16)              # (B,2Q,H)
    h_bias = (q_hidden @ pf['in_w'][H:] + pf['in_b'])[:, None, :]      # (B,1,H)
    col_bias = jnp.where(q_mask_ > 0, 0.0, NEG)[:, None, :]            # (B,1,2Q)
    fusion_out = pallas_fusion_attn(
        hU, h_bias, col_bias,
        pf['wq'].astype(BF16), pf['wk'].astype(BF16), pf['wv'].astype(BF16),
        pf['out_w'].astype(BF16), pf['out_b'].reshape(1, H).astype(F32))

    flat = attflat(params['attflat'], fusion_out, q_mask_)
    out = flat @ params['fc_w'] + params['fc_b']                       # (B,1) plain JAX (N=1)
    return jnp.squeeze(out, axis=-1)


def forward_count(params, res_avg, i3d_avg, res_obj, bbox, i3d_obj,
                  video_length, all_sen_inputs, all_ques_length, answers):
    out = model_block(params, res_avg, i3d_avg, res_obj, bbox, i3d_obj,
                      video_length, all_sen_inputs, all_ques_length)
    predictions = jnp.clip(jnp.round(out), 1, 10).astype(jnp.int32)
    return out, predictions, answers


# -----------------------------------------------------------------------------
# Deterministic parameter init
# -----------------------------------------------------------------------------
def init_params(key, vocab_size, resnet_in, i3d_in, hidden, v_max_len, glimpse=4):
    emb = hidden        # s_embedding is None -> embedding_dim = hidden_size
    Hd = hidden // 2
    keys = iter(jax.random.split(key, 128))

    def w(shape, scale=0.08):
        return scale * jax.random.normal(next(keys), shape, dtype=F32)

    def z(shape):
        return jnp.zeros(shape, F32)

    glove = w((vocab_size, emb))
    glove = glove.at[0].set(0.0)   # padding_idx=0

    p = {
        'glove': glove,
        'emb_proj_w': w((emb, hidden)),
        'lstm_wih_f': w((hidden, 4 * Hd)), 'lstm_bih_f': z((4 * Hd,)),
        'lstm_whh_f': w((Hd, 4 * Hd)),     'lstm_bhh_f': z((4 * Hd,)),
        'lstm_wih_b': w((hidden, 4 * Hd)), 'lstm_bih_b': z((4 * Hd,)),
        'lstm_whh_b': w((Hd, 4 * Hd)),     'lstm_bhh_b': z((4 * Hd,)),
        'comp_appr_local': w((resnet_in, hidden)),
        'comp_mot_local': w((i3d_in, hidden)),
        'comp_appr_global': w((resnet_in, hidden)),
        'comp_mot_global': w((i3d_in, hidden)),
        'bbox_w': w((6, 64)), 'bbox_b': z((64,)),
        'pe64': position_encoding(64, v_max_len),
        'peH': position_encoding(hidden, v_max_len),
        'appr_local_w': w((hidden + 128, hidden)), 'appr_local_b': z((hidden,)),
        'mot_local_w': w((hidden + 128, hidden)),  'mot_local_b': z((hidden,)),
        'appr_v_w': w((2 * hidden, hidden)), 'appr_v_b': z((hidden,)),
        'mot_v_w': w((2 * hidden, hidden)),  'mot_v_b': z((hidden,)),
        'appr_adj': {'w1': w((hidden, hidden)), 'b1': z((hidden,)),
                     'w2': w((hidden, hidden)), 'b2': z((hidden,))},
        'mot_adj':  {'w1': w((hidden, hidden)), 'b1': z((hidden,)),
                     'w2': w((hidden, hidden)), 'b2': z((hidden,))},
        'appr_gcn': {'w1': w((hidden, hidden)), 'b1': z((hidden,)),
                     'w2': w((hidden, hidden)), 'b2': z((hidden,))},
        'mot_gcn':  {'w1': w((hidden, hidden)), 'b1': z((hidden,)),
                     'w2': w((hidden, hidden)), 'b2': z((hidden,))},
        'ban_appr': {'att_w': w((glimpse, hidden, hidden)),
                     'proj_w': w((glimpse, hidden, hidden)),
                     'proj_b': z((glimpse, hidden))},
        'ban_mot':  {'att_w': w((glimpse, hidden, hidden)),
                     'proj_w': w((glimpse, hidden, hidden)),
                     'proj_b': z((glimpse, hidden))},
        'fusion': {'in_w': w((2 * hidden, hidden)), 'in_b': z((hidden,)),
                   'wq': w((hidden, hidden)), 'wk': w((hidden, hidden)),
                   'wv': w((hidden, hidden)),
                   'out_w': w((hidden, hidden)), 'out_b': z((hidden,))},
        'attflat': {'w1': w((hidden, hidden)), 'b1': z((hidden,)),
                    'w2': w((hidden, 1)), 'b2': z((1,)),
                    'merge_w': w((hidden, hidden)), 'merge_b': z((hidden,))},
        'fc_w': w((hidden, 1)), 'fc_b': z((1,)),
    }
    return p


# -----------------------------------------------------------------------------
# Main
# -----------------------------------------------------------------------------
if __name__ == "__main__":
    bsz, v_len, obj_num, q_max = 2, 8, 3, 6
    resnet_in, i3d_in, hidden, vocab = 64, 64, 32, 50

    key = jax.random.PRNGKey(0)
    kp, k1, k2, k3, k4, k5, k6 = jax.random.split(key, 7)

    params = init_params(kp, vocab, resnet_in, i3d_in, hidden, v_max_len=v_len)

    res_avg_inp = jax.random.normal(k1, (bsz, v_len, resnet_in), F32)
    i3d_avg_inp = jax.random.normal(k2, (bsz, v_len, i3d_in), F32)
    res_obj_inp = jax.random.normal(k3, (bsz, v_len, obj_num, resnet_in), F32)
    i3d_obj_inp = jax.random.normal(k4, (bsz, v_len, obj_num, i3d_in), F32)
    bbox_inp = jax.random.uniform(k5, (bsz, v_len, obj_num, 6), F32)
    all_sen_inputs = jax.random.randint(k6, (bsz, q_max), 1, vocab, jnp.int32)
    video_length = jnp.array([8, 6], jnp.int32)
    all_ques_length = jnp.array([6, 4], jnp.int32)
    answers = jnp.array([3, 5], jnp.int32)

    run = jax.jit(forward_count)
    out, predictions, ans = run(params, res_avg_inp, i3d_avg_inp, res_obj_inp,
                                bbox_inp, i3d_obj_inp, video_length,
                                all_sen_inputs, all_ques_length, answers)
    jax.block_until_ready((out, predictions, ans))

    assert out.shape == (bsz,)
    assert predictions.shape == (bsz,)
    assert bool(jnp.all(jnp.isfinite(out)))
    print("KERNEL_OK")
</pallas_src>

<mosaic_0001>
module attributes {stable_mosaic.version = 11 : i64} {
  func.func @_linear_kernel(%arg0: i32, %arg1: i32, %arg2: i32, %arg3: memref<48x128xbf16, #tpu.memory_space<vmem>>, %arg4: memref<128x128xbf16, #tpu.memory_space<vmem>>, %arg5: memref<1x128xf32, #tpu.memory_space<vmem>>, %arg6: memref<48x128xbf16, #tpu.memory_space<vmem>>, %arg7: memref<48x128xf32, #tpu.memory_space<vmem>>) attributes {dimension_semantics = [#tpu.dimension_semantics<parallel>, #tpu.dimension_semantics<parallel>, #tpu.dimension_semantics<arbitrary>], iteration_bounds = array<i64: 1, 1, 1>, scalar_prefetch = 0 : i64, scratch_operands = 1 : i64, tpu.core_type = #tpu.core_type<tc>, window_params = [{transform_indices = @transform_0, window_bounds = array<i64: 48, 128>}, {transform_indices = @transform_1, window_bounds = array<i64: 128, 128>}, {transform_indices = @transform_2, window_bounds = array<i64: 1, 128>}, {transform_indices = @transform_3, window_bounds = array<i64: 48, 128>}]} {
    %c0_i32 = arith.constant 0 : i32
    %0 = arith.cmpi eq, %arg2, %c0_i32 : i32
    %1 = arith.extui %0 : i1 to i32
    %c0_i32_0 = arith.constant 0 : i32
    %2 = arith.cmpi ne, %1, %c0_i32_0 : i32
    scf.if %2 {
      %cst_10 = arith.constant 0.000000e+00 : f32
      %12 = vector.broadcast %cst_10 : f32 to vector<48x128xf32>
      %c0_11 = arith.constant 0 : index
      %c0_12 = arith.constant 0 : index
      %13 = vector.load %arg7[%c0_11, %c0_12] : memref<48x128xf32, #tpu.memory_space<vmem>>, vector<48x128xf32>
      tpu.vector_store %arg7[%c0_11, %c0_12], %12 {strides = array<i32>} : memref<48x128xf32, #tpu.memory_space<vmem>>, vector<48x128xf32>,
    } else {
    }
    %c0 = arith.constant 0 : index
    %c0_1 = arith.constant 0 : index
    %3 = vector.load %arg7[%c0, %c0_1] : memref<48x128xf32, #tpu.memory_space<vmem>>, vector<48x128xf32>
    %c0_2 = arith.constant 0 : index
    %c0_3 = arith.constant 0 : index
    %4 = vector.load %arg3[%c0_2, %c0_3] : memref<48x128xbf16, #tpu.memory_space<vmem>>, vector<48x128xbf16>
    %c0_4 = arith.constant 0 : index
    %c0_5 = arith.constant 0 : index
    %5 = vector.load %arg4[%c0_4, %c0_5] : memref<128x128xbf16, #tpu.memory_space<vmem>>, vector<128x128xbf16>
    %cst = arith.constant dense<0.000000e+00> : vector<48x128xf32>
    %6 = tpu.matmul %4, %5, %cst {dimension_numbers = #tpu.dot_dimension_numbers<[1], [0], [0], [1], [0, 0, 1, 1], [], []>} : vector<48x128xbf16>, vector<128x128xbf16>, vector<48x128xf32> -> vector<48x128xf32>
    %7 = arith.addf %3, %6 : vector<48x128xf32>
    %c0_6 = arith.constant 0 : index
    %c0_7 = arith.constant 0 : index
    %8 = vector.load %arg7[%c0_6, %c0_7] : memref<48x128xf32, #tpu.memory_space<vmem>>, vector<48x128xf32>
    tpu.vector_store %arg7[%c0_6, %c0_7], %7 {strides = array<i32>} : memref<48x128xf32, #tpu.memory_space<vmem>>, vector<48x128xf32>,
    %c0_i32_8 = arith.constant 0 : i32
    %9 = arith.cmpi eq, %arg2, %c0_i32_8 : i32
    %10 = arith.extui %9 : i1 to i32
    %c0_i32_9 = arith.constant 0 : i32
    %11 = arith.cmpi ne, %10, %c0_i32_9 : i32
    scf.if %11 {
      %c0_10 = arith.constant 0 : index
      %c0_11 = arith.constant 0 : index
      %12 = vector.load %arg7[%c0_10, %c0_11] : memref<48x128xf32, #tpu.memory_space<vmem>>, vector<48x128xf32>
      %c0_12 = arith.constant 0 : index
      %c0_13 = arith.constant 0 : index
      %13 = vector.load %arg5[%c0_12, %c0_13] : memref<1x128xf32, #tpu.memory_space<vmem>>, vector<1x128xf32>
      %14 = vector.broadcast %13 : vector<1x128xf32> to vector<48x128xf32>
      %15 = arith.addf %12, %14 : vector<48x128xf32>
      %16 = arith.truncf %15 : vector<48x128xf32> to vector<48x128xbf16>
      %c0_14 = arith.constant 0 : index
      %c0_15 = arith.constant 0 : index
      %17 = vector.load %arg6[%c0_14, %c0_15] : memref<48x128xbf16, #tpu.memory_space<vmem>>, vector<48x128xbf16>
      tpu.vector_store %arg6[%c0_14, %c0_15], %16 {strides = array<i32>} : memref<48x128xbf16, #tpu.memory_space<vmem>>, vector<48x128xbf16>,
    } else {
    }
    return
  }
  func.func @transform_0(%arg0: i32, %arg1: i32, %arg2: i32) -> (i32, i32) {
    %c0_i32 = arith.constant 0 : i32
    return %arg0, %arg2 : i32, i32
  }
  func.func @transform_1(%arg0: i32, %arg1: i32, %arg2: i32) -> (i32, i32) {
    %c0_i32 = arith.constant 0 : i32
    return %arg2, %arg1 : i32, i32
  }
  func.func @transform_2(%arg0: i32, %arg1: i32, %arg2: i32) -> (i32, i32) {
    %c0_i32 = arith.constant 0 : i32
    %c0_i32_0 = arith.constant 0 : i32
    return %c0_i32, %arg1 : i32, i32
  }
  func.func @transform_3(%arg0: i32, %arg1: i32, %arg2: i32) -> (i32, i32) {
    %c0_i32 = arith.constant 0 : i32
    return %arg0, %arg1 : i32, i32
  }
}

module attributes {stable_mosaic.version = 11 : i64} {
  func.func @_linear_kernel(%arg0: i32, %arg1: i32, %arg2: i32, %arg3: memref<16x128xbf16, #tpu.memory_space<vmem>>, %arg4: memref<128x128xbf16, #tpu.memory_space<vmem>>, %arg5: memref<1x128xf32, #tpu.memory_space<vmem>>, %arg6: memref<16x128xf32, #tpu.memory_space<vmem>>, %arg7: memref<16x128xf32, #tpu.memory_space<vmem>>) attributes {dimension_semantics = [#tpu.dimension_semantics<parallel>, #tpu.dimension_semantics<parallel>, #tpu.dimension_semantics<arbitrary>], iteration_bounds = array<i64: 1, 1, 1>, scalar_prefetch = 0 : i64, scratch_operands = 1 : i64, tpu.core_type = #tpu.core_type<tc>, window_params = [{transform_indices = @transform_0, window_bounds = array<i64: 16, 128>}, {transform_indices = @transform_1, window_bounds = array<i64: 128, 128>}, {transform_indices = @transform_2, window_bounds = array<i64: 1, 128>}, {transform_indices = @transform_3, window_bounds = array<i64: 16, 128>}]} {
    %c0_i32 = arith.constant 0 : i32
    %0 = arith.cmpi eq, %arg2, %c0_i32 : i32
    %1 = arith.extui %0 : i1 to i32
    %c0_i32_0 = arith.constant 0 : i32
    %2 = arith.cmpi ne, %1, %c0_i32_0 : i32
    scf.if %2 {
      %cst_10 = arith.constant 0.000000e+00 : f32
      %12 = vector.broadcast %cst_10 : f32 to vector<16x128xf32>
      %c0_11 = arith.constant 0 : index
      %c0_12 = arith.constant 0 : index
      %13 = vector.load %arg7[%c0_11, %c0_12] : memref<16x128xf32, #tpu.memory_space<vmem>>, vector<16x128xf32>
      tpu.vector_store %arg7[%c0_11, %c0_12], %12 {strides = array<i32>} : memref<16x128xf32, #tpu.memory_space<vmem>>, vector<16x128xf32>,
    } else {
    }
    %c0 = arith.constant 0 : index
    %c0_1 = arith.constant 0 : index
    %3 = vector.load %arg7[%c0, %c0_1] : memref<16x128xf32, #tpu.memory_space<vmem>>, vector<16x128xf32>
    %c0_2 = arith.constant 0 : index
    %c0_3 = arith.constant 0 : index
    %4 = vector.load %arg3[%c0_2, %c0_3] : memref<16x128xbf16, #tpu.memory_space<vmem>>, vector<16x128xbf16>
    %c0_4 = arith.constant 0 : index
    %c0_5 = arith.constant 0 : index
    %5 = vector.load %arg4[%c0_4, %c0_5] : memref<128x128xbf16, #tpu.memory_space<vmem>>, vector<128x128xbf16>
    %cst = arith.constant dense<0.000000e+00> : vector<16x128xf32>
    %6 = tpu.matmul %4, %5, %cst {dimension_numbers = #tpu.dot_dimension_numbers<[1], [0], [0], [1], [0, 0, 1, 1], [], []>} : vector<16x128xbf16>, vector<128x128xbf16>, vector<16x128xf32> -> vector<16x128xf32>
    %7 = arith.addf %3, %6 : vector<16x128xf32>
    %c0_6 = arith.constant 0 : index
    %c0_7 = arith.constant 0 : index
    %8 = vector.load %arg7[%c0_6, %c0_7] : memref<16x128xf32, #tpu.memory_space<vmem>>, vector<16x128xf32>
    tpu.vector_store %arg7[%c0_6, %c0_7], %7 {strides = array<i32>} : memref<16x128xf32, #tpu.memory_space<vmem>>, vector<16x128xf32>,
    %c0_i32_8 = arith.constant 0 : i32
    %9 = arith.cmpi eq, %arg2, %c0_i32_8 : i32
    %10 = arith.extui %9 : i1 to i32
    %c0_i32_9 = arith.constant 0 : i32
    %11 = arith.cmpi ne, %10, %c0_i32_9 : i32
    scf.if %11 {
      %c0_10 = arith.constant 0 : index
      %c0_11 = arith.constant 0 : index
      %12 = vector.load %arg7[%c0_10, %c0_11] : memref<16x128xf32, #tpu.memory_space<vmem>>, vector<16x128xf32>
      %c0_12 = arith.constant 0 : index
      %c0_13 = arith.constant 0 : index
      %13 = vector.load %arg5[%c0_12, %c0_13] : memref<1x128xf32, #tpu.memory_space<vmem>>, vector<1x128xf32>
      %14 = vector.broadcast %13 : vector<1x128xf32> to vector<16x128xf32>
      %15 = arith.addf %12, %14 : vector<16x128xf32>
      %c0_14 = arith.constant 0 : index
      %c0_15 = arith.constant 0 : index
      %16 = vector.load %arg6[%c0_14, %c0_15] : memref<16x128xf32, #tpu.memory_space<vmem>>, vector<16x128xf32>
      tpu.vector_store %arg6[%c0_14, %c0_15], %15 {strides = array<i32>} : memref<16x128xf32, #tpu.memory_space<vmem>>, vector<16x128xf32>,
    } else {
    }
    return
  }
  func.func @transform_0(%arg0: i32, %arg1: i32, %arg2: i32) -> (i32, i32) {
    %c0_i32 = arith.constant 0 : i32
    return %arg0, %arg2 : i32, i32
  }
  func.func @transform_1(%arg0: i32, %arg1: i32, %arg2: i32) -> (i32, i32) {
    %c0_i32 = arith.constant 0 : i32
    return %arg2, %arg1 : i32, i32
  }
  func.func @transform_2(%arg0: i32, %arg1: i32, %arg2: i32) -> (i32, i32) {
    %c0_i32 = arith.constant 0 : i32
    %c0_i32_0 = arith.constant 0 : i32
    return %c0_i32, %arg1 : i32, i32
  }
  func.func @transform_3(%arg0: i32, %arg1: i32, %arg2: i32) -> (i32, i32) {
    %c0_i32 = arith.constant 0 : i32
    return %arg0, %arg1 : i32, i32
  }
}

module attributes {stable_mosaic.version = 11 : i64} {
  func.func @_adj_gcn_kernel(%arg0: i32, %arg1: i32, %arg2: memref<1x1x24x32xbf16, #tpu.memory_space<vmem>>, %arg3: memref<1x1x24xf32, #tpu.memory_space<vmem>>, %arg4: memref<1x32x32xbf16, #tpu.memory_space<vmem>>, %arg5: memref<1x1x32xf32, #tpu.memory_space<vmem>>, %arg6: memref<1x32x32xbf16, #tpu.memory_space<vmem>>, %arg7: memref<1x1x32xf32, #tpu.memory_space<vmem>>, %arg8: memref<1x32x32xbf16, #tpu.memory_space<vmem>>, %arg9: memref<1x1x32xf32, #tpu.memory_space<vmem>>, %arg10: memref<1x32x32xbf16, #tpu.memory_space<vmem>>, %arg11: memref<1x1x32xf32, #tpu.memory_space<vmem>>, %arg12: memref<1x1x24x32xbf16, #tpu.memory_space<vmem>>) attributes {dimension_semantics = [#tpu.dimension_semantics<parallel>, #tpu.dimension_semantics<parallel>], iteration_bounds = array<i64: 2, 2>, scalar_prefetch = 0 : i64, scratch_operands = 0 : i64, tpu.core_type = #tpu.core_type<tc>, window_params = [{transform_indices = @transform_0, window_bounds = array<i64: 1, 1, 24, 32>}, {transform_indices = @transform_1, window_bounds = array<i64: 1, 1, 24>}, {transform_indices = @transform_2, window_bounds = array<i64: 1, 32, 32>}, {transform_indices = @transform_3, window_bounds = array<i64: 1, 1, 32>}, {transform_indices = @transform_4, window_bounds = array<i64: 1, 32, 32>}, {transform_indices = @transform_5, window_bounds = array<i64: 1, 1, 32>}, {transform_indices = @transform_6, window_bounds = array<i64: 1, 32, 32>}, {transform_indices = @transform_7, window_bounds = array<i64: 1, 1, 32>}, {transform_indices = @transform_8, window_bounds = array<i64: 1, 32, 32>}, {transform_indices = @transform_9, window_bounds = array<i64: 1, 1, 32>}, {transform_indices = @transform_10, window_bounds = array<i64: 1, 1, 24, 32>}]} {
    %c0 = arith.constant 0 : index
    %c0_0 = arith.constant 0 : index
    %c0_1 = arith.constant 0 : index
    %c0_2 = arith.constant 0 : index
    %0 = vector.load %arg2[%c0, %c0_0, %c0_1, %c0_2] : memref<1x1x24x32xbf16, #tpu.memory_space<vmem>>, vector<1x1x24x32xbf16>
    %1 = vector.shape_cast %0 : vector<1x1x24x32xbf16> to vector<24x32xbf16>
    %c0_3 = arith.constant 0 : index
    %c0_4 = arith.constant 0 : index
    %c0_5 = arith.constant 0 : index
    %2 = vector.load %arg3[%c0_3, %c0_4, %c0_5] : memref<1x1x24xf32, #tpu.memory_space<vmem>>, vector<1x1x24xf32>
    %3 = vector.shape_cast %2 : vector<1x1x24xf32> to vector<1x24xf32>
    %c0_6 = arith.constant 0 : index
    %c0_7 = arith.constant 0 : index
    %c0_8 = arith.constant 0 : index
    %4 = vector.load %arg4[%c0_6, %c0_7, %c0_8] : memref<1x32x32xbf16, #tpu.memory_space<vmem>>, vector<1x32x32xbf16>
    %5 = vector.shape_cast %4 : vector<1x32x32xbf16> to vector<32x32xbf16>
    %cst = arith.constant dense<0.000000e+00> : vector<24x32xf32>
    %6 = tpu.matmul %1, %5, %cst {dimension_numbers = #tpu.dot_dimension_numbers<[1], [0], [0], [1], [0, 0, 1, 1], [], []>} : vector<24x32xbf16>, vector<32x32xbf16>, vector<24x32xf32> -> vector<24x32xf32>
    %c0_9 = arith.constant 0 : index
    %c0_10 = arith.constant 0 : index
    %c0_11 = arith.constant 0 : index
    %7 = vector.load %arg5[%c0_9, %c0_10, %c0_11] : memref<1x1x32xf32, #tpu.memory_space<vmem>>, vector<1x1x32xf32>
    %8 = vector.shape_cast %7 : vector<1x1x32xf32> to vector<1x32xf32>
    %9 = vector.broadcast %8 : vector<1x32xf32> to vector<24x32xf32>
    %10 = arith.addf %6, %9 : vector<24x32xf32>
    %cst_12 = arith.constant 0.000000e+00 : f32
    %11 = vector.broadcast %cst_12 : f32 to vector<24x32xf32>
    %12 = arith.maximumf %10, %11 : vector<24x32xf32>
    %13 = arith.truncf %12 : vector<24x32xf32> to vector<24x32xbf16>
    %c0_13 = arith.constant 0 : index
    %c0_14 = arith.constant 0 : index
    %c0_15 = arith.constant 0 : index
    %14 = vector.load %arg6[%c0_13, %c0_14, %c0_15] : memref<1x32x32xbf16, #tpu.memory_space<vmem>>, vector<1x32x32xbf16>
    %15 = vector.shape_cast %14 : vector<1x32x32xbf16> to vector<32x32xbf16>
    %cst_16 = arith.constant dense<0.000000e+00> : vector<24x32xf32>
    %16 = tpu.matmul %13, %15, %cst_16 {dimension_numbers = #tpu.dot_dimension_numbers<[1], [0], [0], [1], [0, 0, 1, 1], [], []>} : vector<24x32xbf16>, vector<32x32xbf16>, vector<24x32xf32> -> vector<24x32xf32>
    %c0_17 = arith.constant 0 : index
    %c0_18 = arith.constant 0 : index
    %c0_19 = arith.constant 0 : index
    %17 = vector.load %arg7[%c0_17, %c0_18, %c0_19] : memref<1x1x32xf32, #tpu.memory_space<vmem>>, vector<1x1x32xf32>
    %18 = vector.shape_cast %17 : vector<1x1x32xf32> to vector<1x32xf32>
    %19 = vector.broadcast %18 : vector<1x32xf32> to vector<24x32xf32>
    %20 = arith.addf %16, %19 : vector<24x32xf32>
    %cst_20 = arith.constant 0.000000e+00 : f32
    %21 = vector.broadcast %cst_20 : f32 to vector<24x32xf32>
    %22 = arith.maximumf %20, %21 : vector<24x32xf32>
    %23 = arith.truncf %22 : vector<24x32xf32> to vector<24x32xbf16>
    %cst_21 = arith.constant dense<0.000000e+00> : vector<24x24xf32>
    %24 = tpu.matmul %23, %23, %cst_21 {dimension_numbers = #tpu.dot_dimension_numbers<[1], [1], [0], [0], [0, 0, 1, 0], [], []>} : vector<24x32xbf16>, vector<24x32xbf16>, vector<24x24xf32> -> vector<24x24xf32>
    %25 = vector.broadcast %3 : vector<1x24xf32> to vector<24x24xf32>
    %26 = arith.addf %24, %25 : vector<24x24xf32>
    %cst_22 = arith.constant dense<0xFF800000> : vector<24xf32>
    %27 = vector.multi_reduction <maximumf>, %26, %cst_22 [1] : vector<24x24xf32> to vector<24xf32>
    %28 = vector.shape_cast %27 : vector<24xf32> to vector<24x1xf32>
    %29 = vector.broadcast %28 : vector<24x1xf32> to vector<24x24xf32>
    %30 = arith.subf %26, %29 : vector<24x24xf32>
    %31 = math.exp %30 : vector<24x24xf32>
    %cst_23 = arith.constant dense<0.000000e+00> : vector<24xf32>
    %32 = vector.multi_reduction <add>, %31, %cst_23 [1] : vector<24x24xf32> to vector<24xf32>
    %33 = vector.shape_cast %32 : vector<24xf32> to vector<24x1xf32>
    %34 = tpu.reciprocal %33 {approx = true} : vector<24x1xf32> -> vector<24x1xf32>
    %35 = vector.broadcast %34 : vector<24x1xf32> to vector<24x24xf32>
    %36 = arith.mulf %31, %35 : vector<24x24xf32>
    %37 = arith.truncf %36 : vector<24x24xf32> to vector<24x24xbf16>
    %c0_24 = arith.constant 0 : index
    %c0_25 = arith.constant 0 : index
    %c0_26 = arith.constant 0 : index
    %38 = vector.load %arg8[%c0_24, %c0_25, %c0_26] : memref<1x32x32xbf16, #tpu.memory_space<vmem>>, vector<1x32x32xbf16>
    %39 = vector.shape_cast %38 : vector<1x32x32xbf16> to vector<32x32xbf16>
    %cst_27 = arith.constant dense<0.000000e+00> : vector<24x32xf32>
    %40 = tpu.matmul %1, %39, %cst_27 {dimension_numbers = #tpu.dot_dimension_numbers<[1], [0], [0], [1], [0, 0, 1, 1], [], []>} : vector<24x32xbf16>, vector<32x32xbf16>, vector<24x32xf32> -> vector<24x32xf32>
    %c0_28 = arith.constant 0 : index
    %c0_29 = arith.constant 0 : index
    %c0_30 = arith.constant 0 : index
    %41 = vector.load %arg9[%c0_28, %c0_29, %c0_30] : memref<1x1x32xf32, #tpu.memory_space<vmem>>, vector<1x1x32xf32>
    %42 = vector.shape_cast %41 : vector<1x1x32xf32> to vector<1x32xf32>
    %43 = vector.broadcast %42 : vector<1x32xf32> to vector<24x32xf32>
    %44 = arith.addf %40, %43 : vector<24x32xf32>
    %45 = arith.truncf %44 : vector<24x32xf32> to vector<24x32xbf16>
    %cst_31 = arith.constant dense<0.000000e+00> : vector<24x32xf32>
    %46 = tpu.matmul %37, %45, %cst_31 {dimension_numbers = #tpu.dot_dimension_numbers<[1], [0], [0], [1], [0, 0, 1, 1], [], []>} : vector<24x24xbf16>, vector<24x32xbf16>, vector<24x32xf32> -> vector<24x32xf32>
    %cst_32 = arith.constant 0.000000e+00 : f32
    %47 = vector.broadcast %cst_32 : f32 to vector<24x32xf32>
    %48 = arith.maximumf %46, %47 : vector<24x32xf32>
    %49 = arith.truncf %48 : vector<24x32xf32> to vector<24x32xbf16>
    %c0_33 = arith.constant 0 : index
    %c0_34 = arith.constant 0 : index
    %c0_35 = arith.constant 0 : index
    %50 = vector.load %arg10[%c0_33, %c0_34, %c0_35] : memref<1x32x32xbf16, #tpu.memory_space<vmem>>, vector<1x32x32xbf16>
    %51 = vector.shape_cast %50 : vector<1x32x32xbf16> to vector<32x32xbf16>
    %cst_36 = arith.constant dense<0.000000e+00> : vector<24x32xf32>
    %52 = tpu.matmul %49, %51, %cst_36 {dimension_numbers = #tpu.dot_dimension_numbers<[1], [0], [0], [1], [0, 0, 1, 1], [], []>} : vector<24x32xbf16>, vector<32x32xbf16>, vector<24x32xf32> -> vector<24x32xf32>
    %c0_37 = arith.constant 0 : index
    %c0_38 = arith.constant 0 : index
    %c0_39 = arith.constant 0 : index
    %53 = vector.load %arg11[%c0_37, %c0_38, %c0_39] : memref<1x1x32xf32, #tpu.memory_space<vmem>>, vector<1x1x32xf32>
    %54 = vector.shape_cast %53 : vector<1x1x32xf32> to vector<1x32xf32>
    %55 = vector.broadcast %54 : vector<1x32xf32> to vector<24x32xf32>
    %56 = arith.addf %52, %55 : vector<24x32xf32>
    %57 = arith.truncf %56 : vector<24x32xf32> to vector<24x32xbf16>
    %cst_40 = arith.constant dense<0.000000e+00> : vector<24x32xf32>
    %58 = tpu.matmul %37, %57, %cst_40 {dimension_numbers = #tpu.dot_dimension_numbers<[1], [0], [0], [1], [0, 0, 1, 1], [], []>} : vector<24x24xbf16>, vector<24x32xbf16>, vector<24x32xf32> -> vector<24x32xf32>
    %cst_41 = arith.constant 0.000000e+00 : f32
    %59 = vector.broadcast %cst_41 : f32 to vector<24x32xf32>
    %60 = arith.maximumf %58, %59 : vector<24x32xf32>
    %61 = arith.truncf %60 : vector<24x32xf32> to vector<24x32xbf16>
    %c0_42 = arith.constant 0 : index
    %c0_43 = arith.constant 0 : index
    %c0_44 = arith.constant 0 : index
    %c0_45 = arith.constant 0 : index
    %62 = vector.load %arg12[%c0_42, %c0_43, %c0_44, %c0_45] : memref<1x1x24x32xbf16, #tpu.memory_space<vmem>>, vector<1x1x24x32xbf16>
    %63 = vector.shape_cast %62 : vector<1x1x24x32xbf16> to vector<24x32xbf16>
    %64 = vector.shape_cast %61 : vector<24x32xbf16> to vector<1x1x24x32xbf16>
    tpu.vector_store %arg12[%c0_42, %c0_43, %c0_44, %c0_45], %64 {strides = array<i32>} : memref<1x1x24x32xbf16, #tpu.memory_space<vmem>>, vector<1x1x24x32xbf16>,
    return
  }
  func.func @transform_0(%arg0: i32, %arg1: i32) -> (i32, i32, i32, i32) {
    %c0_i32 = arith.constant 0 : i32
    %c0_i32_0 = arith.constant 0 : i32
    %c0_i32_1 = arith.constant 0 : i32
    return %arg0, %arg1, %c0_i32, %c0_i32_0 : i32, i32, i32, i32
  }
  func.func @transform_1(%arg0: i32, %arg1: i32) -> (i32, i32, i32) {
    %c0_i32 = arith.constant 0 : i32
    %c0_i32_0 = arith.constant 0 : i32
    %c0_i32_1 = arith.constant 0 : i32
    return %arg1, %c0_i32, %c0_i32_0 : i32, i32, i32
  }
  func.func @transform_2(%arg0: i32, %arg1: i32) -> (i32, i32, i32) {
    %c0_i32 = arith.constant 0 : i32
    %c0_i32_0 = arith.constant 0 : i32
    %c0_i32_1 = arith.constant 0 : i32
    return %arg0, %c0_i32, %c0_i32_0 : i32, i32, i32
  }
  func.func @transform_3(%arg0: i32, %arg1: i32) -> (i32, i32, i32) {
    %c0_i32 = arith.constant 0 : i32
    %c0_i32_0 = arith.constant 0 : i32
    %c0_i32_1 = arith.constant 0 : i32
    return %arg0, %c0_i32, %c0_i32_0 : i32, i32, i32
  }
  func.func @transform_4(%arg0: i32, %arg1: i32) -> (i32, i32, i32) {
    %c0_i32 = arith.constant 0 : i32
    %c0_i32_0 = arith.constant 0 : i32
    %c0_i32_1 = arith.constant 0 : i32
    return %arg0, %c0_i32, %c0_i32_0 : i32, i32, i32
  }
  func.func @transform_5(%arg0: i32, %arg1: i32) -> (i32, i32, i32) {
    %c0_i32 = arith.constant 0 : i32
    %c0_i32_0 = arith.constant 0 : i32
    %c0_i32_1 = arith.constant 0 : i32
    return %arg0, %c0_i32, %c0_i32_0 : i32, i32, i32
  }
  func.func @transform_6(%arg0: i32, %arg1: i32) -> (i32, i32, i32) {
    %c0_i32 = arith.constant 0 : i32
    %c0_i32_0 = arith.constant 0 : i32
    %c0_i32_1 = arith.constant 0 : i32
    return %arg0, %c0_i32, %c0_i32_0 : i32, i32, i32
  }
  func.func @transform_7(%arg0: i32, %arg1: i32) -> (i32, i32, i32) {
    %c0_i32 = arith.constant 0 : i32
    %c0_i32_0 = arith.constant 0 : i32
    %c0_i32_1 = arith.constant 0 : i32
    return %arg0, %c0_i32, %c0_i32_0 : i32, i32, i32
  }
  func.func @transform_8(%arg0: i32, %arg1: i32) -> (i32, i32, i32) {
    %c0_i32 = arith.constant 0 : i32
    %c0_i32_0 = arith.constant 0 : i32
    %c0_i32_1 = arith.constant 0 : i32
    return %arg0, %c0_i32, %c0_i32_0 : i32, i32, i32
  }
  func.func @transform_9(%arg0: i32, %arg1: i32) -> (i32, i32, i32) {
    %c0_i32 = arith.constant 0 : i32
    %c0_i32_0 = arith.constant 0 : i32
    %c0_i32_1 = arith.constant 0 : i32
    return %arg0, %c0_i32, %c0_i32_0 : i32, i32, i32
  }
  func.func @transform_10(%arg0: i32, %arg1: i32) -> (i32, i32, i32, i32) {
    %c0_i32 = arith.constant 0 : i32
    %c0_i32_0 = arith.constant 0 : i32
    %c0_i32_1 = arith.constant 0 : i32
    return %arg0, %arg1, %c0_i32, %c0_i32_0 : i32, i32, i32, i32
  }
}

module attributes {stable_mosaic.version = 11 : i64} {
  func.func @_linear_kernel(%arg0: i32, %arg1: i32, %arg2: i32, %arg3: memref<16x128xbf16, #tpu.memory_space<vmem>>, %arg4: memref<128x128xbf16, #tpu.memory_space<vmem>>, %arg5: memref<1x128xf32, #tpu.memory_space<vmem>>, %arg6: memref<16x128xbf16, #tpu.memory_space<vmem>>, %arg7: memref<16x128xf32, #tpu.memory_space<vmem>>) attributes {dimension_semantics = [#tpu.dimension_semantics<parallel>, #tpu.dimension_semantics<parallel>, #tpu.dimension_semantics<arbitrary>], iteration_bounds = array<i64: 1, 1, 1>, scalar_prefetch = 0 : i64, scratch_operands = 1 : i64, tpu.core_type = #tpu.core_type<tc>, window_params = [{transform_indices = @transform_0, window_bounds = array<i64: 16, 128>}, {transform_indices = @transform_1, window_bounds = array<i64: 128, 128>}, {transform_indices = @transform_2, window_bounds = array<i64: 1, 128>}, {transform_indices = @transform_3, window_bounds = array<i64: 16, 128>}]} {
    %c0_i32 = arith.constant 0 : i32
    %0 = arith.cmpi eq, %arg2, %c0_i32 : i32
    %1 = arith.extui %0 : i1 to i32
    %c0_i32_0 = arith.constant 0 : i32
    %2 = arith.cmpi ne, %1, %c0_i32_0 : i32
    scf.if %2 {
      %cst_10 = arith.constant 0.000000e+00 : f32
      %12 = vector.broadcast %cst_10 : f32 to vector<16x128xf32>
      %c0_11 = arith.constant 0 : index
      %c0_12 = arith.constant 0 : index
      %13 = vector.load %arg7[%c0_11, %c0_12] : memref<16x128xf32, #tpu.memory_space<vmem>>, vector<16x128xf32>
      tpu.vector_store %arg7[%c0_11, %c0_12], %12 {strides = array<i32>} : memref<16x128xf32, #tpu.memory_space<vmem>>, vector<16x128xf32>,
    } else {
    }
    %c0 = arith.constant 0 : index
    %c0_1 = arith.constant 0 : index
    %3 = vector.load %arg7[%c0, %c0_1] : memref<16x128xf32, #tpu.memory_space<vmem>>, vector<16x128xf32>
    %c0_2 = arith.constant 0 : index
    %c0_3 = arith.constant 0 : index
    %4 = vector.load %arg3[%c0_2, %c0_3] : memref<16x128xbf16, #tpu.memory_space<vmem>>, vector<16x128xbf16>
    %c0_4 = arith.constant 0 : index
    %c0_5 = arith.constant 0 : index
    %5 = vector.load %arg4[%c0_4, %c0_5] : memref<128x128xbf16, #tpu.memory_space<vmem>>, vector<128x128xbf16>
    %cst = arith.constant dense<0.000000e+00> : vector<16x128xf32>
    %6 = tpu.matmul %4, %5, %cst {dimension_numbers = #tpu.dot_dimension_numbers<[1], [0], [0], [1], [0, 0, 1, 1], [], []>} : vector<16x128xbf16>, vector<128x128xbf16>, vector<16x128xf32> -> vector<16x128xf32>
    %7 = arith.addf %3, %6 : vector<16x128xf32>
    %c0_6 = arith.constant 0 : index
    %c0_7 = arith.constant 0 : index
    %8 = vector.load %arg7[%c0_6, %c0_7] : memref<16x128xf32, #tpu.memory_space<vmem>>, vector<16x128xf32>
    tpu.vector_store %arg7[%c0_6, %c0_7], %7 {strides = array<i32>} : memref<16x128xf32, #tpu.memory_space<vmem>>, vector<16x128xf32>,
    %c0_i32_8 = arith.constant 0 : i32
    %9 = arith.cmpi eq, %arg2, %c0_i32_8 : i32
    %10 = arith.extui %9 : i1 to i32
    %c0_i32_9 = arith.constant 0 : i32
    %11 = arith.cmpi ne, %10, %c0_i32_9 : i32
    scf.if %11 {
      %c0_10 = arith.constant 0 : index
      %c0_11 = arith.constant 0 : index
      %12 = vector.load %arg7[%c0_10, %c0_11] : memref<16x128xf32, #tpu.memory_space<vmem>>, vector<16x128xf32>
      %c0_12 = arith.constant 0 : index
      %c0_13 = arith.constant 0 : index
      %13 = vector.load %arg5[%c0_12, %c0_13] : memref<1x128xf32, #tpu.memory_space<vmem>>, vector<1x128xf32>
      %14 = vector.broadcast %13 : vector<1x128xf32> to vector<16x128xf32>
      %15 = arith.addf %12, %14 : vector<16x128xf32>
      %cst_14 = arith.constant 0.000000e+00 : f32
      %16 = vector.broadcast %cst_14 : f32 to vector<16x128xf32>
      %17 = arith.maximumf %15, %16 : vector<16x128xf32>
      %18 = arith.truncf %17 : vector<16x128xf32> to vector<16x128xbf16>
      %c0_15 = arith.constant 0 : index
      %c0_16 = arith.constant 0 : index
      %19 = vector.load %arg6[%c0_15, %c0_16] : memref<16x128xbf16, #tpu.memory_space<vmem>>, vector<16x128xbf16>
      tpu.vector_store %arg6[%c0_15, %c0_16], %18 {strides = array<i32>} : memref<16x128xbf16, #tpu.memory_space<vmem>>, vector<16x128xbf16>,
    } else {
    }
    return
  }
  func.func @transform_0(%arg0: i32, %arg1: i32, %arg2: i32) -> (i32, i32) {
    %c0_i32 = arith.constant 0 : i32
    return %arg0, %arg2 : i32, i32
  }
  func.func @transform_1(%arg0: i32, %arg1: i32, %arg2: i32) -> (i32, i32) {
    %c0_i32 = arith.constant 0 : i32
    return %arg2, %arg1 : i32, i32
  }
  func.func @transform_2(%arg0: i32, %arg1: i32, %arg2: i32) -> (i32, i32) {
    %c0_i32 = arith.constant 0 : i32
    %c0_i32_0 = arith.constant 0 : i32
    return %c0_i32, %arg1 : i32, i32
  }
  func.func @transform_3(%arg0: i32, %arg1: i32, %arg2: i32) -> (i32, i32) {
    %c0_i32 = arith.constant 0 : i32
    return %arg0, %arg1 : i32, i32
  }
}

module attributes {stable_mosaic.version = 11 : i64} {
  func.func @_ban_kernel(%arg0: i32, %arg1: i32, %arg2: memref<1x1x24x32xbf16, #tpu.memory_space<vmem>>, %arg3: memref<1x6x32xf32, #tpu.memory_space<vmem>>, %arg4: memref<1x6x1xf32, #tpu.memory_space<vmem>>, %arg5: memref<1x1x24xf32, #tpu.memory_space<vmem>>, %arg6: memref<1x4x32x32xbf16, #tpu.memory_space<vmem>>, %arg7: memref<1x4x32x32xbf16, #tpu.memory_space<vmem>>, %arg8: memref<1x4x1x32xf32, #tpu.memory_space<vmem>>, %arg9: memref<1x1x6x32xf32, #tpu.memory_space<vmem>>) attributes {dimension_semantics = [#tpu.dimension_semantics<parallel>, #tpu.dimension_semantics<parallel>], iteration_bounds = array<i64: 2, 2>, scalar_prefetch = 0 : i64, scratch_operands = 0 : i64, tpu.core_type = #tpu.core_type<tc>, window_params = [{transform_indices = @transform_0, window_bounds = array<i64: 1, 1, 24, 32>}, {transform_indices = @transform_1, window_bounds = array<i64: 1, 6, 32>}, {transform_indices = @transform_2, window_bounds = array<i64: 1, 6, 1>}, {transform_indices = @transform_3, window_bounds = array<i64: 1, 1, 24>}, {transform_indices = @transform_4, window_bounds = array<i64: 1, 4, 32, 32>}, {transform_indices = @transform_5, window_bounds = array<i64: 1, 4, 32, 32>}, {transform_indices = @transform_6, window_bounds = array<i64: 1, 4, 1, 32>}, {transform_indices = @transform_7, window_bounds = array<i64: 1, 1, 6, 32>}]} {
    %c0 = arith.constant 0 : index
    %c0_0 = arith.constant 0 : index
    %c0_1 = arith.constant 0 : index
    %c0_2 = arith.constant 0 : index
    %0 = vector.load %arg2[%c0, %c0_0, %c0_1, %c0_2] : memref<1x1x24x32xbf16, #tpu.memory_space<vmem>>, vector<1x1x24x32xbf16>
    %1 = vector.shape_cast %0 : vector<1x1x24x32xbf16> to vector<24x32xbf16>
    %c0_3 = arith.constant 0 : index
    %c0_4 = arith.constant 0 : index
    %c0_5 = arith.constant 0 : index
    %2 = vector.load %arg3[%c0_3, %c0_4, %c0_5] : memref<1x6x32xf32, #tpu.memory_space<vmem>>, vector<1x6x32xf32>
    %3 = vector.shape_cast %2 : vector<1x6x32xf32> to vector<6x32xf32>
    %c0_6 = arith.constant 0 : index
    %c0_7 = arith.constant 0 : index
    %c0_8 = arith.constant 0 : index
    %4 = vector.load %arg4[%c0_6, %c0_7, %c0_8] : memref<1x6x1xf32, #tpu.memory_space<vmem>>, vector<1x6x1xf32>
    %5 = vector.shape_cast %4 : vector<1x6x1xf32> to vector<6x1xf32>
    %c0_9 = arith.constant 0 : index
    %c0_10 = arith.constant 0 : index
    %c0_11 = arith.constant 0 : index
    %6 = vector.load %arg5[%c0_9, %c0_10, %c0_11] : memref<1x1x24xf32, #tpu.memory_space<vmem>>, vector<1x1x24xf32>
    %7 = vector.shape_cast %6 : vector<1x1x24xf32> to vector<1x24xf32>
    %c0_12 = arith.constant 0 : index
    %c0_13 = arith.constant 0 : index
    %c0_14 = arith.constant 0 : index
    %c0_15 = arith.constant 0 : index
    %8 = vector.load %arg6[%c0_12, %c0_13, %c0_14, %c0_15] : memref<1x4x32x32xbf16, #tpu.memory_space<vmem>>, vector<1x1x32x32xbf16>
    %9 = vector.shape_cast %8 : vector<1x1x32x32xbf16> to vector<32x32xbf16>
    %cst = arith.constant dense<0.000000e+00> : vector<24x32xf32>
    %10 = tpu.matmul %1, %9, %cst {dimension_numbers = #tpu.dot_dimension_numbers<[1], [0], [0], [1], [0, 0, 1, 1], [], []>} : vector<24x32xbf16>, vector<32x32xbf16>, vector<24x32xf32> -> vector<24x32xf32>
    %11 = arith.truncf %3 : vector<6x32xf32> to vector<6x32xbf16>
    %12 = arith.truncf %10 : vector<24x32xf32> to vector<24x32xbf16>
    %cst_16 = arith.constant dense<0.000000e+00> : vector<6x24xf32>
    %13 = tpu.matmul %11, %12, %cst_16 {dimension_numbers = #tpu.dot_dimension_numbers<[1], [1], [0], [0], [0, 0, 1, 0], [], []>} : vector<6x32xbf16>, vector<24x32xbf16>, vector<6x24xf32> -> vector<6x24xf32>
    %14 = vector.broadcast %5 : vector<6x1xf32> to vector<6x24xf32>
    %15 = arith.addf %13, %14 : vector<6x24xf32>
    %16 = vector.broadcast %7 : vector<1x24xf32> to vector<6x24xf32>
    %17 = arith.addf %15, %16 : vector<6x24xf32>
    %cst_17 = arith.constant dense<0xFF800000> : vector<6xf32>
    %18 = vector.multi_reduction <maximumf>, %17, %cst_17 [1] : vector<6x24xf32> to vector<6xf32>
    %19 = vector.shape_cast %18 : vector<6xf32> to vector<6x1xf32>
    %cst_18 = arith.constant dense<0xFF800000> : vector<1xf32>
    %20 = vector.multi_reduction <maximumf>, %19, %cst_18 [0] : vector<6x1xf32> to vector<1xf32>
    %21 = vector.shape_cast %20 : vector<1xf32> to vector<1x1xf32>
    %22 = vector.broadcast %21 : vector<1x1xf32> to vector<6x24xf32>
    %23 = arith.subf %17, %22 : vector<6x24xf32>
    %24 = math.exp %23 : vector<6x24xf32>
    %cst_19 = arith.constant dense<0.000000e+00> : vector<6xf32>
    %25 = vector.multi_reduction <add>, %24, %cst_19 [1] : vector<6x24xf32> to vector<6xf32>
    %26 = vector.shape_cast %25 : vector<6xf32> to vector<6x1xf32>
    %cst_20 = arith.constant dense<0.000000e+00> : vector<1xf32>
    %27 = vector.multi_reduction <add>, %26, %cst_20 [0] : vector<6x1xf32> to vector<1xf32>
    %28 = vector.shape_cast %27 : vector<1xf32> to vector<1x1xf32>
    %29 = tpu.reciprocal %28 {approx = true} : vector<1x1xf32> -> vector<1x1xf32>
    %30 = vector.broadcast %29 : vector<1x1xf32> to vector<6x24xf32>
    %31 = arith.mulf %24, %30 : vector<6x24xf32>
    %32 = arith.truncf %31 : vector<6x24xf32> to vector<6x24xbf16>
    %cst_21 = arith.constant dense<0.000000e+00> : vector<6x32xf32>
    %33 = tpu.matmul %32, %1, %cst_21 {dimension_numbers = #tpu.dot_dimension_numbers<[1], [0], [0], [1], [0, 0, 1, 1], [], []>} : vector<6x24xbf16>, vector<24x32xbf16>, vector<6x32xf32> -> vector<6x32xf32>
    %34 = arith.mulf %33, %3 : vector<6x32xf32>
    %cst_22 = arith.constant dense<0.000000e+00> : vector<32xf32>
    %35 = vector.multi_reduction <add>, %34, %cst_22 [0] : vector<6x32xf32> to vector<32xf32>
    %36 = vector.shape_cast %35 : vector<32xf32> to vector<1x32xf32>
    %37 = arith.truncf %36 : vector<1x32xf32> to vector<1x32xbf16>
    %c0_23 = arith.constant 0 : index
    %c0_24 = arith.constant 0 : index
    %c0_25 = arith.constant 0 : index
    %c0_26 = arith.constant 0 : index
    %38 = vector.load %arg7[%c0_23, %c0_24, %c0_25, %c0_26] : memref<1x4x32x32xbf16, #tpu.memory_space<vmem>>, vector<1x1x32x32xbf16>
    %39 = vector.shape_cast %38 : vector<1x1x32x32xbf16> to vector<32x32xbf16>
    %cst_27 = arith.constant dense<0.000000e+00> : vector<1x32xf32>
    %40 = tpu.matmul %37, %39, %cst_27 {dimension_numbers = #tpu.dot_dimension_numbers<[1], [0], [0], [1], [0, 0, 1, 1], [], []>} : vector<1x32xbf16>, vector<32x32xbf16>, vector<1x32xf32> -> vector<1x32xf32>
    %c0_28 = arith.constant 0 : index
    %c0_29 = arith.constant 0 : index
    %c0_30 = arith.constant 0 : index
    %c0_31 = arith.constant 0 : index
    %41 = vector.load %arg8[%c0_28, %c0_29, %c0_30, %c0_31] : memref<1x4x1x32xf32, #tpu.memory_space<vmem>>, vector<1x1x1x32xf32>
    %42 = vector.shape_cast %41 : vector<1x1x1x32xf32> to vector<1x32xf32>
    %43 = arith.addf %40, %42 : vector<1x32xf32>
    %44 = vector.broadcast %43 : vector<1x32xf32> to vector<6x32xf32>
    %45 = arith.addf %3, %44 : vector<6x32xf32>
    %c0_32 = arith.constant 0 : index
    %c1 = arith.constant 1 : index
    %c0_33 = arith.constant 0 : index
    %c0_34 = arith.constant 0 : index
    %46 = vector.load %arg6[%c0_32, %c1, %c0_33, %c0_34] : memref<1x4x32x32xbf16, #tpu.memory_space<vmem>>, vector<1x1x32x32xbf16>
    %47 = vector.shape_cast %46 : vector<1x1x32x32xbf16> to vector<32x32xbf16>
    %cst_35 = arith.constant dense<0.000000e+00> : vector<24x32xf32>
    %48 = tpu.matmul %1, %47, %cst_35 {dimension_numbers = #tpu.dot_dimension_numbers<[1], [0], [0], [1], [0, 0, 1, 1], [], []>} : vector<24x32xbf16>, vector<32x32xbf16>, vector<24x32xf32> -> vector<24x32xf32>
    %49 = arith.truncf %45 : vector<6x32xf32> to vector<6x32xbf16>
    %50 = arith.truncf %48 : vector<24x32xf32> to vector<24x32xbf16>
    %cst_36 = arith.constant dense<0.000000e+00> : vector<6x24xf32>
    %51 = tpu.matmul %49, %50, %cst_36 {dimension_numbers = #tpu.dot_dimension_numbers<[1], [1], [0], [0], [0, 0, 1, 0], [], []>} : vector<6x32xbf16>, vector<24x32xbf16>, vector<6x24xf32> -> vector<6x24xf32>
    %52 = vector.broadcast %5 : vector<6x1xf32> to vector<6x24xf32>
    %53 = arith.addf %51, %52 : vector<6x24xf32>
    %54 = vector.broadcast %7 : vector<1x24xf32> to vector<6x24xf32>
    %55 = arith.addf %53, %54 : vector<6x24xf32>
    %cst_37 = arith.constant dense<0xFF800000> : vector<6xf32>
    %56 = vector.multi_reduction <maximumf>, %55, %cst_37 [1] : vector<6x24xf32> to vector<6xf32>
    %57 = vector.shape_cast %56 : vector<6xf32> to vector<6x1xf32>
    %cst_38 = arith.constant dense<0xFF800000> : vector<1xf32>
    %58 = vector.multi_reduction <maximumf>, %57, %cst_38 [0] : vector<6x1xf32> to vector<1xf32>
    %59 = vector.shape_cast %58 : vector<1xf32> to vector<1x1xf32>
    %60 = vector.broadcast %59 : vector<1x1xf32> to vector<6x24xf32>
    %61 = arith.subf %55, %60 : vector<6x24xf32>
    %62 = math.exp %61 : vector<6x24xf32>
    %cst_39 = arith.constant dense<0.000000e+00> : vector<6xf32>
    %63 = vector.multi_reduction <add>, %62, %cst_39 [1] : vector<6x24xf32> to vector<6xf32>
    %64 = vector.shape_cast %63 : vector<6xf32> to vector<6x1xf32>
    %cst_40 = arith.constant dense<0.000000e+00> : vector<1xf32>
    %65 = vector.multi_reduction <add>, %64, %cst_40 [0] : vector<6x1xf32> to vector<1xf32>
    %66 = vector.shape_cast %65 : vector<1xf32> to vector<1x1xf32>
    %67 = tpu.reciprocal %66 {approx = true} : vector<1x1xf32> -> vector<1x1xf32>
    %68 = vector.broadcast %67 : vector<1x1xf32> to vector<6x24xf32>
    %69 = arith.mulf %62, %68 : vector<6x24xf32>
    %70 = arith.truncf %69 : vector<6x24xf32> to vector<6x24xbf16>
    %cst_41 = arith.constant dense<0.000000e+00> : vector<6x32xf32>
    %71 = tpu.matmul %70, %1, %cst_41 {dimension_numbers = #tpu.dot_dimension_numbers<[1], [0], [0], [1], [0, 0, 1, 1], [], []>} : vector<6x24xbf16>, vector<24x32xbf16>, vector<6x32xf32> -> vector<6x32xf32>
    %72 = arith.mulf %71, %45 : vector<6x32xf32>
    %cst_42 = arith.constant dense<0.000000e+00> : vector<32xf32>
    %73 = vector.multi_reduction <add>, %72, %cst_42 [0] : vector<6x32xf32> to vector<32xf32>
    %74 = vector.shape_cast %73 : vector<32xf32> to vector<1x32xf32>
    %75 = arith.truncf %74 : vector<1x32xf32> to vector<1x32xbf16>
    %c0_43 = arith.constant 0 : index
    %c1_44 = arith.constant 1 : index
    %c0_45 = arith.constant 0 : index
    %c0_46 = arith.constant 0 : index
    %76 = vector.load %arg7[%c0_43, %c1_44, %c0_45, %c0_46] : memref<1x4x32x32xbf16, #tpu.memory_space<vmem>>, vector<1x1x32x32xbf16>
    %77 = vector.shape_cast %76 : vector<1x1x32x32xbf16> to vector<32x32xbf16>
    %cst_47 = arith.constant dense<0.000000e+00> : vector<1x32xf32>
    %78 = tpu.matmul %75, %77, %cst_47 {dimension_numbers = #tpu.dot_dimension_numbers<[1], [0], [0], [1], [0, 0, 1, 1], [], []>} : vector<1x32xbf16>, vector<32x32xbf16>, vector<1x32xf32> -> vector<1x32xf32>
    %c0_48 = arith.constant 0 : index
    %c1_49 = arith.constant 1 : index
    %c0_50 = arith.constant 0 : index
    %c0_51 = arith.constant 0 : index
    %79 = vector.load %arg8[%c0_48, %c1_49, %c0_50, %c0_51] : memref<1x4x1x32xf32, #tpu.memory_space<vmem>>, vector<1x1x1x32xf32>
    %80 = vector.shape_cast %79 : vector<1x1x1x32xf32> to vector<1x32xf32>
    %81 = arith.addf %78, %80 : vector<1x32xf32>
    %82 = vector.broadcast %81 : vector<1x32xf32> to vector<6x32xf32>
    %83 = arith.addf %45, %82 : vector<6x32xf32>
    %c0_52 = arith.constant 0 : index
    %c2 = arith.constant 2 : index
    %c0_53 = arith.constant 0 : index
    %c0_54 = arith.constant 0 : index
    %84 = vector.load %arg6[%c0_52, %c2, %c0_53, %c0_54] : memref<1x4x32x32xbf16, #tpu.memory_space<vmem>>, vector<1x1x32x32xbf16>
    %85 = vector.shape_cast %84 : vector<1x1x32x32xbf16> to vector<32x32xbf16>
    %cst_55 = arith.constant dense<0.000000e+00> : vector<24x32xf32>
    %86 = tpu.matmul %1, %85, %cst_55 {dimension_numbers = #tpu.dot_dimension_numbers<[1], [0], [0], [1], [0, 0, 1, 1], [], []>} : vector<24x32xbf16>, vector<32x32xbf16>, vector<24x32xf32> -> vector<24x32xf32>
    %87 = arith.truncf %83 : vector<6x32xf32> to vector<6x32xbf16>
    %88 = arith.truncf %86 : vector<24x32xf32> to vector<24x32xbf16>
    %cst_56 = arith.constant dense<0.000000e+00> : vector<6x24xf32>
    %89 = tpu.matmul %87, %88, %cst_56 {dimension_numbers = #tpu.dot_dimension_numbers<[1], [1], [0], [0], [0, 0, 1, 0], [], []>} : vector<6x32xbf16>, vector<24x32xbf16>, vector<6x24xf32> -> vector<6x24xf32>
    %90 = vector.broadcast %5 : vector<6x1xf32> to vector<6x24xf32>
    %91 = arith.addf %89, %90 : vector<6x24xf32>
    %92 = vector.broadcast %7 : vector<1x24xf32> to vector<6x24xf32>
    %93 = arith.addf %91, %92 : vector<6x24xf32>
    %cst_57 = arith.constant dense<0xFF800000> : vector<6xf32>
    %94 = vector.multi_reduction <maximumf>, %93, %cst_57 [1] : vector<6x24xf32> to vector<6xf32>
    %95 = vector.shape_cast %94 : vector<6xf32> to vector<6x1xf32>
    %cst_58 = arith.constant dense<0xFF800000> : vector<1xf32>
    %96 = vector.multi_reduction <maximumf>, %95, %cst_58 [0] : vector<6x1xf32> to vector<1xf32>
    %97 = vector.shape_cast %96 : vector<1xf32> to vector<1x1xf32>
    %98 = vector.broadcast %97 : vector<1x1xf32> to vector<6x24xf32>
    %99 = arith.subf %93, %98 : vector<6x24xf32>
    %100 = math.exp %99 : vector<6x24xf32>
    %cst_59 = arith.constant dense<0.000000e+00> : vector<6xf32>
    %101 = vector.multi_reduction <add>, %100, %cst_59 [1] : vector<6x24xf32> to vector<6xf32>
    %102 = vector.shape_cast %101 : vector<6xf32> to vector<6x1xf32>
    %cst_60 = arith.constant dense<0.000000e+00> : vector<1xf32>
    %103 = vector.multi_reduction <add>, %102, %cst_60 [0] : vector<6x1xf32> to vector<1xf32>
    %104 = vector.shape_cast %103 : vector<1xf32> to vector<1x1xf32>
    %105 = tpu.reciprocal %104 {approx = true} : vector<1x1xf32> -> vector<1x1xf32>
    %106 = vector.broadcast %105 : vector<1x1xf32> to vector<6x24xf32>
    %107 = arith.mulf %100, %106 : vector<6x24xf32>
    %108 = arith.truncf %107 : vector<6x24xf32> to vector<6x24xbf16>
    %cst_61 = arith.constant dense<0.000000e+00> : vector<6x32xf32>
    %109 = tpu.matmul %108, %1, %cst_61 {dimension_numbers = #tpu.dot_dimension_numbers<[1], [0], [0], [1], [0, 0, 1, 1], [], []>} : vector<6x24xbf16>, vector<24x32xbf16>, vector<6x32xf32> -> vector<6x32xf32>
    %110 = arith.mulf %109, %83 : vector<6x32xf32>
    %cst_62 = arith.constant dense<0.000000e+00> : vector<32xf32>
    %111 = vector.multi_reduction <add>, %110, %cst_62 [0] : vector<6x32xf32> to vector<32xf32>
    %112 = vector.shape_cast %111 : vector<32xf32> to vector<1x32xf32>
    %113 = arith.truncf %112 : vector<1x32xf32> to vector<1x32xbf16>
    %c0_63 = arith.constant 0 : index
    %c2_64 = arith.constant 2 : index
    %c0_65 = arith.constant 0 : index
    %c0_66 = arith.constant 0 : index
    %114 = vector.load %arg7[%c0_63, %c2_64, %c0_65, %c0_66] : memref<1x4x32x32xbf16, #tpu.memory_space<vmem>>, vector<1x1x32x32xbf16>
    %115 = vector.shape_cast %114 : vector<1x1x32x32xbf16> to vector<32x32xbf16>
    %cst_67 = arith.constant dense<0.000000e+00> : vector<1x32xf32>
    %116 = tpu.matmul %113, %115, %cst_67 {dimension_numbers = #tpu.dot_dimension_numbers<[1], [0], [0], [1], [0, 0, 1, 1], [], []>} : vector<1x32xbf16>, vector<32x32xbf16>, vector<1x32xf32> -> vector<1x32xf32>
    %c0_68 = arith.constant 0 : index
    %c2_69 = arith.constant 2 : index
    %c0_70 = arith.constant 0 : index
    %c0_71 = arith.constant 0 : index
    %117 = vector.load %arg8[%c0_68, %c2_69, %c0_70, %c0_71] : memref<1x4x1x32xf32, #tpu.memory_space<vmem>>, vector<1x1x1x32xf32>
    %118 = vector.shape_cast %117 : vector<1x1x1x32xf32> to vector<1x32xf32>
    %119 = arith.addf %116, %118 : vector<1x32xf32>
    %120 = vector.broadcast %119 : vector<1x32xf32> to vector<6x32xf32>
    %121 = arith.addf %83, %120 : vector<6x32xf32>
    %c0_72 = arith.constant 0 : index
    %c3 = arith.constant 3 : index
    %c0_73 = arith.constant 0 : index
    %c0_74 = arith.constant 0 : index
    %122 = vector.load %arg6[%c0_72, %c3, %c0_73, %c0_74] : memref<1x4x32x32xbf16, #tpu.memory_space<vmem>>, vector<1x1x32x32xbf16>
    %123 = vector.shape_cast %122 : vector<1x1x32x32xbf16> to vector<32x32xbf16>
    %cst_75 = arith.constant dense<0.000000e+00> : vector<24x32xf32>
    %124 = tpu.matmul %1, %123, %cst_75 {dimension_numbers = #tpu.dot_dimension_numbers<[1], [0], [0], [1], [0, 0, 1, 1], [], []>} : vector<24x32xbf16>, vector<32x32xbf16>, vector<24x32xf32> -> vector<24x32xf32>
    %125 = arith.truncf %121 : vector<6x32xf32> to vector<6x32xbf16>
    %126 = arith.truncf %124 : vector<24x32xf32> to vector<24x32xbf16>
    %cst_76 = arith.constant dense<0.000000e+00> : vector<6x24xf32>
    %127 = tpu.matmul %125, %126, %cst_76 {dimension_numbers = #tpu.dot_dimension_numbers<[1], [1], [0], [0], [0, 0, 1, 0], [], []>} : vector<6x32xbf16>, vector<24x32xbf16>, vector<6x24xf32> -> vector<6x24xf32>
    %128 = vector.broadcast %5 : vector<6x1xf32> to vector<6x24xf32>
    %129 = arith.addf %127, %128 : vector<6x24xf32>
    %130 = vector.broadcast %7 : vector<1x24xf32> to vector<6x24xf32>
    %131 = arith.addf %129, %130 : vector<6x24xf32>
    %cst_77 = arith.constant dense<0xFF800000> : vector<6xf32>
    %132 = vector.multi_reduction <maximumf>, %131, %cst_77 [1] : vector<6x24xf32> to vector<6xf32>
    %133 = vector.shape_cast %132 : vector<6xf32> to vector<6x1xf32>
    %cst_78 = arith.constant dense<0xFF800000> : vector<1xf32>
    %134 = vector.multi_reduction <maximumf>, %133, %cst_78 [0] : vector<6x1xf32> to vector<1xf32>
    %135 = vector.shape_cast %134 : vector<1xf32> to vector<1x1xf32>
    %136 = vector.broadcast %135 : vector<1x1xf32> to vector<6x24xf32>
    %137 = arith.subf %131, %136 : vector<6x24xf32>
    %138 = math.exp %137 : vector<6x24xf32>
    %cst_79 = arith.constant dense<0.000000e+00> : vector<6xf32>
    %139 = vector.multi_reduction <add>, %138, %cst_79 [1] : vector<6x24xf32> to vector<6xf32>
    %140 = vector.shape_cast %139 : vector<6xf32> to vector<6x1xf32>
    %cst_80 = arith.constant dense<0.000000e+00> : vector<1xf32>
    %141 = vector.multi_reduction <add>, %140, %cst_80 [0] : vector<6x1xf32> to vector<1xf32>
    %142 = vector.shape_cast %141 : vector<1xf32> to vector<1x1xf32>
    %143 = tpu.reciprocal %142 {approx = true} : vector<1x1xf32> -> vector<1x1xf32>
    %144 = vector.broadcast %143 : vector<1x1xf32> to vector<6x24xf32>
    %145 = arith.mulf %138, %144 : vector<6x24xf32>
    %146 = arith.truncf %145 : vector<6x24xf32> to vector<6x24xbf16>
    %cst_81 = arith.constant dense<0.000000e+00> : vector<6x32xf32>
    %147 = tpu.matmul %146, %1, %cst_81 {dimension_numbers = #tpu.dot_dimension_numbers<[1], [0], [0], [1], [0, 0, 1, 1], [], []>} : vector<6x24xbf16>, vector<24x32xbf16>, vector<6x32xf32> -> vector<6x32xf32>
    %148 = arith.mulf %147, %121 : vector<6x32xf32>
    %cst_82 = arith.constant dense<0.000000e+00> : vector<32xf32>
    %149 = vector.multi_reduction <add>, %148, %cst_82 [0] : vector<6x32xf32> to vector<32xf32>
    %150 = vector.shape_cast %149 : vector<32xf32> to vector<1x32xf32>
    %151 = arith.truncf %150 : vector<1x32xf32> to vector<1x32xbf16>
    %c0_83 = arith.constant 0 : index
    %c3_84 = arith.constant 3 : index
    %c0_85 = arith.constant 0 : index
    %c0_86 = arith.constant 0 : index
    %152 = vector.load %arg7[%c0_83, %c3_84, %c0_85, %c0_86] : memref<1x4x32x32xbf16, #tpu.memory_space<vmem>>, vector<1x1x32x32xbf16>
    %153 = vector.shape_cast %152 : vector<1x1x32x32xbf16> to vector<32x32xbf16>
    %cst_87 = arith.constant dense<0.000000e+00> : vector<1x32xf32>
    %154 = tpu.matmul %151, %153, %cst_87 {dimension_numbers = #tpu.dot_dimension_numbers<[1], [0], [0], [1], [0, 0, 1, 1], [], []>} : vector<1x32xbf16>, vector<32x32xbf16>, vector<1x32xf32> -> vector<1x32xf32>
    %c0_88 = arith.constant 0 : index
    %c3_89 = arith.constant 3 : index
    %c0_90 = arith.constant 0 : index
    %c0_91 = arith.constant 0 : index
    %155 = vector.load %arg8[%c0_88, %c3_89, %c0_90, %c0_91] : memref<1x4x1x32xf32, #tpu.memory_space<vmem>>, vector<1x1x1x32xf32>
    %156 = vector.shape_cast %155 : vector<1x1x1x32xf32> to vector<1x32xf32>
    %157 = arith.addf %154, %156 : vector<1x32xf32>
    %158 = vector.broadcast %157 : vector<1x32xf32> to vector<6x32xf32>
    %159 = arith.addf %121, %158 : vector<6x32xf32>
    %c0_92 = arith.constant 0 : index
    %c0_93 = arith.constant 0 : index
    %c0_94 = arith.constant 0 : index
    %c0_95 = arith.constant 0 : index
    %160 = vector.load %arg9[%c0_92, %c0_93, %c0_94, %c0_95] : memref<1x1x6x32xf32, #tpu.memory_space<vmem>>, vector<1x1x6x32xf32>
    %161 = vector.shape_cast %160 : vector<1x1x6x32xf32> to vector<6x32xf32>
    %162 = vector.shape_cast %159 : vector<6x32xf32> to vector<1x1x6x32xf32>
    tpu.vector_store %arg9[%c0_92, %c0_93, %c0_94, %c0_95], %162 {strides = array<i32>} : memref<1x1x6x32xf32, #tpu.memory_space<vmem>>, vector<1x1x6x32xf32>,
    return
  }
  func.func @transform_0(%arg0: i32, %arg1: i32) -> (i32, i32, i32, i32) {
    %c0_i32 = arith.constant 0 : i32
    %c0_i32_0 = arith.constant 0 : i32
    %c0_i32_1 = arith.constant 0 : i32
    return %arg0, %arg1, %c0_i32, %c0_i32_0 : i32, i32, i32, i32
  }
  func.func @transform_1(%arg0: i32, %arg1: i32) -> (i32, i32, i32) {
    %c0_i32 = arith.constant 0 : i32
    %c0_i32_0 = arith.constant 0 : i32
    %c0_i32_1 = arith.constant 0 : i32
    return %arg1, %c0_i32, %c0_i32_0 : i32, i32, i32
  }
  func.func @transform_2(%arg0: i32, %arg1: i32) -> (i32, i32, i32) {
    %c0_i32 = arith.constant 0 : i32
    %c0_i32_0 = arith.constant 0 : i32
    %c0_i32_1 = arith.constant 0 : i32
    return %arg1, %c0_i32, %c0_i32_0 : i32, i32, i32
  }
  func.func @transform_3(%arg0: i32, %arg1: i32) -> (i32, i32, i32) {
    %c0_i32 = arith.constant 0 : i32
    %c0_i32_0 = arith.constant 0 : i32
    %c0_i32_1 = arith.constant 0 : i32
    return %arg1, %c0_i32, %c0_i32_0 : i32, i32, i32
  }
  func.func @transform_4(%arg0: i32, %arg1: i32) -> (i32, i32, i32, i32) {
    %c0_i32 = arith.constant 0 : i32
    %c0_i32_0 = arith.constant 0 : i32
    %c0_i32_1 = arith.constant 0 : i32
    %c0_i32_2 = arith.constant 0 : i32
    return %arg0, %c0_i32, %c0_i32_0, %c0_i32_1 : i32, i32, i32, i32
  }
  func.func @transform_5(%arg0: i32, %arg1: i32) -> (i32, i32, i32, i32) {
    %c0_i32 = arith.constant 0 : i32
    %c0_i32_0 = arith.constant 0 : i32
    %c0_i32_1 = arith.constant 0 : i32
    %c0_i32_2 = arith.constant 0 : i32
    return %arg0, %c0_i32, %c0_i32_0, %c0_i32_1 : i32, i32, i32, i32
  }
  func.func @transform_6(%arg0: i32, %arg1: i32) -> (i32, i32, i32, i32) {
    %c0_i32 = arith.constant 0 : i32
    %c0_i32_0 = arith.constant 0 : i32
    %c0_i32_1 = arith.constant 0 : i32
    %c0_i32_2 = arith.constant 0 : i32
    return %arg0, %c0_i32, %c0_i32_0, %c0_i32_1 : i32, i32, i32, i32
  }
  func.func @transform_7(%arg0: i32, %arg1: i32) -> (i32, i32, i32, i32) {
    %c0_i32 = arith.constant 0 : i32
    %c0_i32_0 = arith.constant 0 : i32
    %c0_i32_1 = arith.constant 0 : i32
    return %arg0, %arg1, %c0_i32, %c0_i32_0 : i32, i32, i32, i32
  }
}

module attributes {stable_mosaic.version = 11 : i64} {
  func.func @_linear_kernel(%arg0: i32, %arg1: i32, %arg2: i32, %arg3: memref<24x128xbf16, #tpu.memory_space<vmem>>, %arg4: memref<128x128xbf16, #tpu.memory_space<vmem>>, %arg5: memref<1x128xf32, #tpu.memory_space<vmem>>, %arg6: memref<24x128xbf16, #tpu.memory_space<vmem>>, %arg7: memref<24x128xf32, #tpu.memory_space<vmem>>) attributes {dimension_semantics = [#tpu.dimension_semantics<parallel>, #tpu.dimension_semantics<parallel>, #tpu.dimension_semantics<arbitrary>], iteration_bounds = array<i64: 1, 1, 1>, scalar_prefetch = 0 : i64, scratch_operands = 1 : i64, tpu.core_type = #tpu.core_type<tc>, window_params = [{transform_indices = @transform_0, window_bounds = array<i64: 24, 128>}, {transform_indices = @transform_1, window_bounds = array<i64: 128, 128>}, {transform_indices = @transform_2, window_bounds = array<i64: 1, 128>}, {transform_indices = @transform_3, window_bounds = array<i64: 24, 128>}]} {
    %c0_i32 = arith.constant 0 : i32
    %0 = arith.cmpi eq, %arg2, %c0_i32 : i32
    %1 = arith.extui %0 : i1 to i32
    %c0_i32_0 = arith.constant 0 : i32
    %2 = arith.cmpi ne, %1, %c0_i32_0 : i32
    scf.if %2 {
      %cst_10 = arith.constant 0.000000e+00 : f32
      %12 = vector.broadcast %cst_10 : f32 to vector<24x128xf32>
      %c0_11 = arith.constant 0 : index
      %c0_12 = arith.constant 0 : index
      %13 = vector.load %arg7[%c0_11, %c0_12] : memref<24x128xf32, #tpu.memory_space<vmem>>, vector<24x128xf32>
      tpu.vector_store %arg7[%c0_11, %c0_12], %12 {strides = array<i32>} : memref<24x128xf32, #tpu.memory_space<vmem>>, vector<24x128xf32>,
    } else {
    }
    %c0 = arith.constant 0 : index
    %c0_1 = arith.constant 0 : index
    %3 = vector.load %arg7[%c0, %c0_1] : memref<24x128xf32, #tpu.memory_space<vmem>>, vector<24x128xf32>
    %c0_2 = arith.constant 0 : index
    %c0_3 = arith.constant 0 : index
    %4 = vector.load %arg3[%c0_2, %c0_3] : memref<24x128xbf16, #tpu.memory_space<vmem>>, vector<24x128xbf16>
    %c0_4 = arith.constant 0 : index
    %c0_5 = arith.constant 0 : index
    %5 = vector.load %arg4[%c0_4, %c0_5] : memref<128x128xbf16, #tpu.memory_space<vmem>>, vector<128x128xbf16>
    %cst = arith.constant dense<0.000000e+00> : vector<24x128xf32>
    %6 = tpu.matmul %4, %5, %cst {dimension_numbers = #tpu.dot_dimension_numbers<[1], [0], [0], [1], [0, 0, 1, 1], [], []>} : vector<24x128xbf16>, vector<128x128xbf16>, vector<24x128xf32> -> vector<24x128xf32>
    %7 = arith.addf %3, %6 : vector<24x128xf32>
    %c0_6 = arith.constant 0 : index
    %c0_7 = arith.constant 0 : index
    %8 = vector.load %arg7[%c0_6, %c0_7] : memref<24x128xf32, #tpu.memory_space<vmem>>, vector<24x128xf32>
    tpu.vector_store %arg7[%c0_6, %c0_7], %7 {strides = array<i32>} : memref<24x128xf32, #tpu.memory_space<vmem>>, vector<24x128xf32>,
    %c0_i32_8 = arith.constant 0 : i32
    %9 = arith.cmpi eq, %arg2, %c0_i32_8 : i32
    %10 = arith.extui %9 : i1 to i32
    %c0_i32_9 = arith.constant 0 : i32
    %11 = arith.cmpi ne, %10, %c0_i32_9 : i32
    scf.if %11 {
      %c0_10 = arith.constant 0 : index
      %c0_11 = arith.constant 0 : index
      %12 = vector.load %arg7[%c0_10, %c0_11] : memref<24x128xf32, #tpu.memory_space<vmem>>, vector<24x128xf32>
      %c0_12 = arith.constant 0 : index
      %c0_13 = arith.constant 0 : index
      %13 = vector.load %arg5[%c0_12, %c0_13] : memref<1x128xf32, #tpu.memory_space<vmem>>, vector<1x128xf32>
      %14 = vector.broadcast %13 : vector<1x128xf32> to vector<24x128xf32>
      %15 = arith.addf %12, %14 : vector<24x128xf32>
      %16 = arith.truncf %15 : vector<24x128xf32> to vector<24x128xbf16>
      %c0_14 = arith.constant 0 : index
      %c0_15 = arith.constant 0 : index
      %17 = vector.load %arg6[%c0_14, %c0_15] : memref<24x128xbf16, #tpu.memory_space<vmem>>, vector<24x128xbf16>
      tpu.vector_store %arg6[%c0_14, %c0_15], %16 {strides = array<i32>} : memref<24x128xbf16, #tpu.memory_space<vmem>>, vector<24x128xbf16>,
    } else {
    }
    return
  }
  func.func @transform_0(%arg0: i32, %arg1: i32, %arg2: i32) -> (i32, i32) {
    %c0_i32 = arith.constant 0 : i32
    return %arg0, %arg2 : i32, i32
  }
  func.func @transform_1(%arg0: i32, %arg1: i32, %arg2: i32) -> (i32, i32) {
    %c0_i32 = arith.constant 0 : i32
    return %arg2, %arg1 : i32, i32
  }
  func.func @transform_2(%arg0: i32, %arg1: i32, %arg2: i32) -> (i32, i32) {
    %c0_i32 = arith.constant 0 : i32
    %c0_i32_0 = arith.constant 0 : i32
    return %c0_i32, %arg1 : i32, i32
  }
  func.func @transform_3(%arg0: i32, %arg1: i32, %arg2: i32) -> (i32, i32) {
    %c0_i32 = arith.constant 0 : i32
    return %arg0, %arg1 : i32, i32
  }
}

module attributes {stable_mosaic.version = 11 : i64} {
  func.func @_fusion_kernel(%arg0: i32, %arg1: memref<1x12x32xbf16, #tpu.memory_space<vmem>>, %arg2: memref<1x1x32xf32, #tpu.memory_space<vmem>>, %arg3: memref<1x1x12xf32, #tpu.memory_space<vmem>>, %arg4: memref<32x32xbf16, #tpu.memory_space<vmem>>, %arg5: memref<32x32xbf16, #tpu.memory_space<vmem>>, %arg6: memref<32x32xbf16, #tpu.memory_space<vmem>>, %arg7: memref<32x32xbf16, #tpu.memory_space<vmem>>, %arg8: memref<1x32xf32, #tpu.memory_space<vmem>>, %arg9: memref<1x12x32xf32, #tpu.memory_space<vmem>>) attributes {dimension_semantics = [#tpu.dimension_semantics<parallel>], iteration_bounds = array<i64: 2>, scalar_prefetch = 0 : i64, scratch_operands = 0 : i64, tpu.core_type = #tpu.core_type<tc>, window_params = [{transform_indices = @transform_0, window_bounds = array<i64: 1, 12, 32>}, {transform_indices = @transform_1, window_bounds = array<i64: 1, 1, 32>}, {transform_indices = @transform_2, window_bounds = array<i64: 1, 1, 12>}, {pipeline_mode = #tpu.pipeline_mode<synchronous>, transform_indices = @transform_3, window_bounds = array<i64: 32, 32>}, {pipeline_mode = #tpu.pipeline_mode<synchronous>, transform_indices = @transform_4, window_bounds = array<i64: 32, 32>}, {pipeline_mode = #tpu.pipeline_mode<synchronous>, transform_indices = @transform_5, window_bounds = array<i64: 32, 32>}, {pipeline_mode = #tpu.pipeline_mode<synchronous>, transform_indices = @transform_6, window_bounds = array<i64: 32, 32>}, {pipeline_mode = #tpu.pipeline_mode<synchronous>, transform_indices = @transform_7, window_bounds = array<i64: 1, 32>}, {transform_indices = @transform_8, window_bounds = array<i64: 1, 12, 32>}]} {
    %c0 = arith.constant 0 : index
    %c0_0 = arith.constant 0 : index
    %c0_1 = arith.constant 0 : index
    %0 = vector.load %arg1[%c0, %c0_0, %c0_1] : memref<1x12x32xbf16, #tpu.memory_space<vmem>>, vector<1x12x32xbf16>
    %1 = vector.shape_cast %0 : vector<1x12x32xbf16> to vector<12x32xbf16>
    %2 = arith.extf %1 : vector<12x32xbf16> to vector<12x32xf32>
    %c0_2 = arith.constant 0 : index
    %c0_3 = arith.constant 0 : index
    %c0_4 = arith.constant 0 : index
    %3 = vector.load %arg2[%c0_2, %c0_3, %c0_4] : memref<1x1x32xf32, #tpu.memory_space<vmem>>, vector<1x1x32xf32>
    %4 = vector.shape_cast %3 : vector<1x1x32xf32> to vector<1x32xf32>
    %5 = vector.broadcast %4 : vector<1x32xf32> to vector<12x32xf32>
    %6 = arith.addf %2, %5 : vector<12x32xf32>
    %cst = arith.constant 0.000000e+00 : f32
    %7 = vector.broadcast %cst : f32 to vector<12x32xf32>
    %8 = arith.maximumf %6, %7 : vector<12x32xf32>
    %9 = arith.truncf %8 : vector<12x32xf32> to vector<12x32xbf16>
    %c0_5 = arith.constant 0 : index
    %c0_6 = arith.constant 0 : index
    %10 = vector.load %arg4[%c0_5, %c0_6] : memref<32x32xbf16, #tpu.memory_space<vmem>>, vector<32x32xbf16>
    %cst_7 = arith.constant dense<0.000000e+00> : vector<12x32xf32>
    %11 = tpu.matmul %9, %10, %cst_7 {dimension_numbers = #tpu.dot_dimension_numbers<[1], [0], [0], [1], [0, 0, 1, 1], [], []>} : vector<12x32xbf16>, vector<32x32xbf16>, vector<12x32xf32> -> vector<12x32xf32>
    %c0_8 = arith.constant 0 : index
    %c0_9 = arith.constant 0 : index
    %12 = vector.load %arg5[%c0_8, %c0_9] : memref<32x32xbf16, #tpu.memory_space<vmem>>, vector<32x32xbf16>
    %cst_10 = arith.constant dense<0.000000e+00> : vector<12x32xf32>
    %13 = tpu.matmul %9, %12, %cst_10 {dimension_numbers = #tpu.dot_dimension_numbers<[1], [0], [0], [1], [0, 0, 1, 1], [], []>} : vector<12x32xbf16>, vector<32x32xbf16>, vector<12x32xf32> -> vector<12x32xf32>
    %c0_11 = arith.constant 0 : index
    %c0_12 = arith.constant 0 : index
    %14 = vector.load %arg6[%c0_11, %c0_12] : memref<32x32xbf16, #tpu.memory_space<vmem>>, vector<32x32xbf16>
    %cst_13 = arith.constant dense<0.000000e+00> : vector<12x32xf32>
    %15 = tpu.matmul %9, %14, %cst_13 {dimension_numbers = #tpu.dot_dimension_numbers<[1], [0], [0], [1], [0, 0, 1, 1], [], []>} : vector<12x32xbf16>, vector<32x32xbf16>, vector<12x32xf32> -> vector<12x32xf32>
    %16 = arith.truncf %11 : vector<12x32xf32> to vector<12x32xbf16>
    %17 = arith.truncf %13 : vector<12x32xf32> to vector<12x32xbf16>
    %cst_14 = arith.constant dense<0.000000e+00> : vector<12x12xf32>
    %18 = tpu.matmul %16, %17, %cst_14 {dimension_numbers = #tpu.dot_dimension_numbers<[1], [1], [0], [0], [0, 0, 1, 0], [], []>} : vector<12x32xbf16>, vector<12x32xbf16>, vector<12x12xf32> -> vector<12x12xf32>
    %cst_15 = arith.constant 0.176776692 : f32
    %19 = vector.broadcast %cst_15 : f32 to vector<12x12xf32>
    %20 = arith.mulf %18, %19 : vector<12x12xf32>
    %c0_16 = arith.constant 0 : index
    %c0_17 = arith.constant 0 : index
    %c0_18 = arith.constant 0 : index
    %21 = vector.load %arg3[%c0_16, %c0_17, %c0_18] : memref<1x1x12xf32, #tpu.memory_space<vmem>>, vector<1x1x12xf32>
    %22 = vector.shape_cast %21 : vector<1x1x12xf32> to vector<1x12xf32>
    %23 = vector.broadcast %22 : vector<1x12xf32> to vector<12x12xf32>
    %24 = arith.addf %20, %23 : vector<12x12xf32>
    %cst_19 = arith.constant dense<0xFF800000> : vector<12xf32>
    %25 = vector.multi_reduction <maximumf>, %24, %cst_19 [1] : vector<12x12xf32> to vector<12xf32>
    %26 = vector.shape_cast %25 : vector<12xf32> to vector<12x1xf32>
    %27 = vector.broadcast %26 : vector<12x1xf32> to vector<12x12xf32>
    %28 = arith.subf %24, %27 : vector<12x12xf32>
    %29 = math.exp %28 : vector<12x12xf32>
    %cst_20 = arith.constant dense<0.000000e+00> : vector<12xf32>
    %30 = vector.multi_reduction <add>, %29, %cst_20 [1] : vector<12x12xf32> to vector<12xf32>
    %31 = vector.shape_cast %30 : vector<12xf32> to vector<12x1xf32>
    %32 = tpu.reciprocal %31 {approx = true} : vector<12x1xf32> -> vector<12x1xf32>
    %33 = vector.broadcast %32 : vector<12x1xf32> to vector<12x12xf32>
    %34 = arith.mulf %29, %33 : vector<12x12xf32>
    %35 = arith.truncf %34 : vector<12x12xf32> to vector<12x12xbf16>
    %36 = arith.truncf %15 : vector<12x32xf32> to vector<12x32xbf16>
    %cst_21 = arith.constant dense<0.000000e+00> : vector<12x32xf32>
    %37 = tpu.matmul %35, %36, %cst_21 {dimension_numbers = #tpu.dot_dimension_numbers<[1], [0], [0], [1], [0, 0, 1, 1], [], []>} : vector<12x12xbf16>, vector<12x32xbf16>, vector<12x32xf32> -> vector<12x32xf32>
    %38 = arith.truncf %37 : vector<12x32xf32> to vector<12x32xbf16>
    %c0_22 = arith.constant 0 : index
    %c0_23 = arith.constant 0 : index
    %39 = vector.load %arg7[%c0_22, %c0_23] : memref<32x32xbf16, #tpu.memory_space<vmem>>, vector<32x32xbf16>
    %cst_24 = arith.constant dense<0.000000e+00> : vector<12x32xf32>
    %40 = tpu.matmul %38, %39, %cst_24 {dimension_numbers = #tpu.dot_dimension_numbers<[1], [0], [0], [1], [0, 0, 1, 1], [], []>} : vector<12x32xbf16>, vector<32x32xbf16>, vector<12x32xf32> -> vector<12x32xf32>
    %c0_25 = arith.constant 0 : index
    %c0_26 = arith.constant 0 : index
    %41 = vector.load %arg8[%c0_25, %c0_26] : memref<1x32xf32, #tpu.memory_space<vmem>>, vector<1x32xf32>
    %42 = vector.broadcast %41 : vector<1x32xf32> to vector<12x32xf32>
    %43 = arith.addf %40, %42 : vector<12x32xf32>
    %44 = arith.addf %43, %8 : vector<12x32xf32>
    %cst_27 = arith.constant 0.000000e+00 : f32
    %45 = vector.broadcast %cst_27 : f32 to vector<12x32xf32>
    %46 = arith.maximumf %44, %45 : vector<12x32xf32>
    %c0_28 = arith.constant 0 : index
    %c0_29 = arith.constant 0 : index
    %c0_30 = arith.constant 0 : index
    %47 = vector.load %arg9[%c0_28, %c0_29, %c0_30] : memref<1x12x32xf32, #tpu.memory_space<vmem>>, vector<1x12x32xf32>
    %48 = vector.shape_cast %47 : vector<1x12x32xf32> to vector<12x32xf32>
    %49 = vector.shape_cast %46 : vector<12x32xf32> to vector<1x12x32xf32>
    tpu.vector_store %arg9[%c0_28, %c0_29, %c0_30], %49 {strides = array<i32>} : memref<1x12x32xf32, #tpu.memory_space<vmem>>, vector<1x12x32xf32>,
    return
  }
  func.func @transform_0(%arg0: i32) -> (i32, i32, i32) {
    %c0_i32 = arith.constant 0 : i32
    %c0_i32_0 = arith.constant 0 : i32
    %c0_i32_1 = arith.constant 0 : i32
    return %arg0, %c0_i32, %c0_i32_0 : i32, i32, i32
  }
  func.func @transform_1(%arg0: i32) -> (i32, i32, i32) {
    %c0_i32 = arith.constant 0 : i32
    %c0_i32_0 = arith.constant 0 : i32
    %c0_i32_1 = arith.constant 0 : i32
    return %arg0, %c0_i32, %c0_i32_0 : i32, i32, i32
  }
  func.func @transform_2(%arg0: i32) -> (i32, i32, i32) {
    %c0_i32 = arith.constant 0 : i32
    %c0_i32_0 = arith.constant 0 : i32
    %c0_i32_1 = arith.constant 0 : i32
    return %arg0, %c0_i32, %c0_i32_0 : i32, i32, i32
  }
  func.func @transform_3(%arg0: i32) -> (i32, i32) {
    %c0_i32 = arith.constant 0 : i32
    %c0_i32_0 = arith.constant 0 : i32
    %c0_i32_1 = arith.constant 0 : i32
    return %c0_i32, %c0_i32_0 : i32, i32
  }
  func.func @transform_4(%arg0: i32) -> (i32, i32) {
    %c0_i32 = arith.constant 0 : i32
    %c0_i32_0 = arith.constant 0 : i32
    %c0_i32_1 = arith.constant 0 : i32
    return %c0_i32, %c0_i32_0 : i32, i32
  }
  func.func @transform_5(%arg0: i32) -> (i32, i32) {
    %c0_i32 = arith.constant 0 : i32
    %c0_i32_0 = arith.constant 0 : i32
    %c0_i32_1 = arith.constant 0 : i32
    return %c0_i32, %c0_i32_0 : i32, i32
  }
  func.func @transform_6(%arg0: i32) -> (i32, i32) {
    %c0_i32 = arith.constant 0 : i32
    %c0_i32_0 = arith.constant 0 : i32
    %c0_i32_1 = arith.constant 0 : i32
    return %c0_i32, %c0_i32_0 : i32, i32
  }
  func.func @transform_7(%arg0: i32) -> (i32, i32) {
    %c0_i32 = arith.constant 0 : i32
    %c0_i32_0 = arith.constant 0 : i32
    %c0_i32_1 = arith.constant 0 : i32
    return %c0_i32, %c0_i32_0 : i32, i32
  }
  func.func @transform_8(%arg0: i32) -> (i32, i32, i32) {
    %c0_i32 = arith.constant 0 : i32
    %c0_i32_0 = arith.constant 0 : i32
    %c0_i32_1 = arith.constant 0 : i32
    return %arg0, %c0_i32, %c0_i32_0 : i32, i32, i32
  }
}

module attributes {stable_mosaic.version = 11 : i64} {
  func.func @_linear_kernel(%arg0: i32, %arg1: i32, %arg2: i32, %arg3: memref<24x128xbf16, #tpu.memory_space<vmem>>, %arg4: memref<128x128xbf16, #tpu.memory_space<vmem>>, %arg5: memref<1x128xf32, #tpu.memory_space<vmem>>, %arg6: memref<24x128xf32, #tpu.memory_space<vmem>>, %arg7: memref<24x128xf32, #tpu.memory_space<vmem>>) attributes {dimension_semantics = [#tpu.dimension_semantics<parallel>, #tpu.dimension_semantics<parallel>, #tpu.dimension_semantics<arbitrary>], iteration_bounds = array<i64: 1, 1, 1>, scalar_prefetch = 0 : i64, scratch_operands = 1 : i64, tpu.core_type = #tpu.core_type<tc>, window_params = [{transform_indices = @transform_0, window_bounds = array<i64: 24, 128>}, {transform_indices = @transform_1, window_bounds = array<i64: 128, 128>}, {transform_indices = @transform_2, window_bounds = array<i64: 1, 128>}, {transform_indices = @transform_3, window_bounds = array<i64: 24, 128>}]} {
    %c0_i32 = arith.constant 0 : i32
    %0 = arith.cmpi eq, %arg2, %c0_i32 : i32
    %1 = arith.extui %0 : i1 to i32
    %c0_i32_0 = arith.constant 0 : i32
    %2 = arith.cmpi ne, %1, %c0_i32_0 : i32
    scf.if %2 {
      %cst_10 = arith.constant 0.000000e+00 : f32
      %12 = vector.broadcast %cst_10 : f32 to vector<24x128xf32>
      %c0_11 = arith.constant 0 : index
      %c0_12 = arith.constant 0 : index
      %13 = vector.load %arg7[%c0_11, %c0_12] : memref<24x128xf32, #tpu.memory_space<vmem>>, vector<24x128xf32>
      tpu.vector_store %arg7[%c0_11, %c0_12], %12 {strides = array<i32>} : memref<24x128xf32, #tpu.memory_space<vmem>>, vector<24x128xf32>,
    } else {
    }
    %c0 = arith.constant 0 : index
    %c0_1 = arith.constant 0 : index
    %3 = vector.load %arg7[%c0, %c0_1] : memref<24x128xf32, #tpu.memory_space<vmem>>, vector<24x128xf32>
    %c0_2 = arith.constant 0 : index
    %c0_3 = arith.constant 0 : index
    %4 = vector.load %arg3[%c0_2, %c0_3] : memref<24x128xbf16, #tpu.memory_space<vmem>>, vector<24x128xbf16>
    %c0_4 = arith.constant 0 : index
    %c0_5 = arith.constant 0 : index
    %5 = vector.load %arg4[%c0_4, %c0_5] : memref<128x128xbf16, #tpu.memory_space<vmem>>, vector<128x128xbf16>
    %cst = arith.constant dense<0.000000e+00> : vector<24x128xf32>
    %6 = tpu.matmul %4, %5, %cst {dimension_numbers = #tpu.dot_dimension_numbers<[1], [0], [0], [1], [0, 0, 1, 1], [], []>} : vector<24x128xbf16>, vector<128x128xbf16>, vector<24x128xf32> -> vector<24x128xf32>
    %7 = arith.addf %3, %6 : vector<24x128xf32>
    %c0_6 = arith.constant 0 : index
    %c0_7 = arith.constant 0 : index
    %8 = vector.load %arg7[%c0_6, %c0_7] : memref<24x128xf32, #tpu.memory_space<vmem>>, vector<24x128xf32>
    tpu.vector_store %arg7[%c0_6, %c0_7], %7 {strides = array<i32>} : memref<24x128xf32, #tpu.memory_space<vmem>>, vector<24x128xf32>,
    %c0_i32_8 = arith.constant 0 : i32
    %9 = arith.cmpi eq, %arg2, %c0_i32_8 : i32
    %10 = arith.extui %9 : i1 to i32
    %c0_i32_9 = arith.constant 0 : i32
    %11 = arith.cmpi ne, %10, %c0_i32_9 : i32
    scf.if %11 {
      %c0_10 = arith.constant 0 : index
      %c0_11 = arith.constant 0 : index
      %12 = vector.load %arg7[%c0_10, %c0_11] : memref<24x128xf32, #tpu.memory_space<vmem>>, vector<24x128xf32>
      %c0_12 = arith.constant 0 : index
      %c0_13 = arith.constant 0 : index
      %13 = vector.load %arg5[%c0_12, %c0_13] : memref<1x128xf32, #tpu.memory_space<vmem>>, vector<1x128xf32>
      %14 = vector.broadcast %13 : vector<1x128xf32> to vector<24x128xf32>
      %15 = arith.addf %12, %14 : vector<24x128xf32>
      %cst_14 = arith.constant 0.000000e+00 : f32
      %16 = vector.broadcast %cst_14 : f32 to vector<24x128xf32>
      %17 = arith.maximumf %15, %16 : vector<24x128xf32>
      %c0_15 = arith.constant 0 : index
      %c0_16 = arith.constant 0 : index
      %18 = vector.load %arg6[%c0_15, %c0_16] : memref<24x128xf32, #tpu.memory_space<vmem>>, vector<24x128xf32>
      tpu.vector_store %arg6[%c0_15, %c0_16], %17 {strides = array<i32>} : memref<24x128xf32, #tpu.memory_space<vmem>>, vector<24x128xf32>,
    } else {
    }
    return
  }
  func.func @transform_0(%arg0: i32, %arg1: i32, %arg2: i32) -> (i32, i32) {
    %c0_i32 = arith.constant 0 : i32
    return %arg0, %arg2 : i32, i32
  }
  func.func @transform_1(%arg0: i32, %arg1: i32, %arg2: i32) -> (i32, i32) {
    %c0_i32 = arith.constant 0 : i32
    return %arg2, %arg1 : i32, i32
  }
  func.func @transform_2(%arg0: i32, %arg1: i32, %arg2: i32) -> (i32, i32) {
    %c0_i32 = arith.constant 0 : i32
    %c0_i32_0 = arith.constant 0 : i32
    return %c0_i32, %arg1 : i32, i32
  }
  func.func @transform_3(%arg0: i32, %arg1: i32, %arg2: i32) -> (i32, i32) {
    %c0_i32 = arith.constant 0 : i32
    return %arg0, %arg1 : i32, i32
  }
}

module attributes {stable_mosaic.version = 11 : i64} {
  func.func @_linear_kernel(%arg0: i32, %arg1: i32, %arg2: i32, %arg3: memref<8x128xbf16, #tpu.memory_space<vmem>>, %arg4: memref<128x128xbf16, #tpu.memory_space<vmem>>, %arg5: memref<1x128xf32, #tpu.memory_space<vmem>>, %arg6: memref<8x128xf32, #tpu.memory_space<vmem>>, %arg7: memref<8x128xf32, #tpu.memory_space<vmem>>) attributes {dimension_semantics = [#tpu.dimension_semantics<parallel>, #tpu.dimension_semantics<parallel>, #tpu.dimension_semantics<arbitrary>], iteration_bounds = array<i64: 1, 1, 1>, scalar_prefetch = 0 : i64, scratch_operands = 1 : i64, tpu.core_type = #tpu.core_type<tc>, window_params = [{transform_indices = @transform_0, window_bounds = array<i64: 8, 128>}, {transform_indices = @transform_1, window_bounds = array<i64: 128, 128>}, {transform_indices = @transform_2, window_bounds = array<i64: 1, 128>}, {transform_indices = @transform_3, window_bounds = array<i64: 8, 128>}]} {
    %c0_i32 = arith.constant 0 : i32
    %0 = arith.cmpi eq, %arg2, %c0_i32 : i32
    %1 = arith.extui %0 : i1 to i32
    %c0_i32_0 = arith.constant 0 : i32
    %2 = arith.cmpi ne, %1, %c0_i32_0 : i32
    scf.if %2 {
      %cst_10 = arith.constant 0.000000e+00 : f32
      %12 = vector.broadcast %cst_10 : f32 to vector<8x128xf32>
      %c0_11 = arith.constant 0 : index
      %c0_12 = arith.constant 0 : index
      %13 = vector.load %arg7[%c0_11, %c0_12] : memref<8x128xf32, #tpu.memory_space<vmem>>, vector<8x128xf32>
      tpu.vector_store %arg7[%c0_11, %c0_12], %12 {strides = array<i32>} : memref<8x128xf32, #tpu.memory_space<vmem>>, vector<8x128xf32>,
    } else {
    }
    %c0 = arith.constant 0 : index
    %c0_1 = arith.constant 0 : index
    %3 = vector.load %arg7[%c0, %c0_1] : memref<8x128xf32, #tpu.memory_space<vmem>>, vector<8x128xf32>
    %c0_2 = arith.constant 0 : index
    %c0_3 = arith.constant 0 : index
    %4 = vector.load %arg3[%c0_2, %c0_3] : memref<8x128xbf16, #tpu.memory_space<vmem>>, vector<8x128xbf16>
    %c0_4 = arith.constant 0 : index
    %c0_5 = arith.constant 0 : index
    %5 = vector.load %arg4[%c0_4, %c0_5] : memref<128x128xbf16, #tpu.memory_space<vmem>>, vector<128x128xbf16>
    %cst = arith.constant dense<0.000000e+00> : vector<8x128xf32>
    %6 = tpu.matmul %4, %5, %cst {dimension_numbers = #tpu.dot_dimension_numbers<[1], [0], [0], [1], [0, 0, 1, 1], [], []>} : vector<8x128xbf16>, vector<128x128xbf16>, vector<8x128xf32> -> vector<8x128xf32>
    %7 = arith.addf %3, %6 : vector<8x128xf32>
    %c0_6 = arith.constant 0 : index
    %c0_7 = arith.constant 0 : index
    %8 = vector.load %arg7[%c0_6, %c0_7] : memref<8x128xf32, #tpu.memory_space<vmem>>, vector<8x128xf32>
    tpu.vector_store %arg7[%c0_6, %c0_7], %7 {strides = array<i32>} : memref<8x128xf32, #tpu.memory_space<vmem>>, vector<8x128xf32>,
    %c0_i32_8 = arith.constant 0 : i32
    %9 = arith.cmpi eq, %arg2, %c0_i32_8 : i32
    %10 = arith.extui %9 : i1 to i32
    %c0_i32_9 = arith.constant 0 : i32
    %11 = arith.cmpi ne, %10, %c0_i32_9 : i32
    scf.if %11 {
      %c0_10 = arith.constant 0 : index
      %c0_11 = arith.constant 0 : index
      %12 = vector.load %arg7[%c0_10, %c0_11] : memref<8x128xf32, #tpu.memory_space<vmem>>, vector<8x128xf32>
      %c0_12 = arith.constant 0 : index
      %c0_13 = arith.constant 0 : index
      %13 = vector.load %arg5[%c0_12, %c0_13] : memref<1x128xf32, #tpu.memory_space<vmem>>, vector<1x128xf32>
      %14 = vector.broadcast %13 : vector<1x128xf32> to vector<8x128xf32>
      %15 = arith.addf %12, %14 : vector<8x128xf32>
      %c0_14 = arith.constant 0 : index
      %c0_15 = arith.constant 0 : index
      %16 = vector.load %arg6[%c0_14, %c0_15] : memref<8x128xf32, #tpu.memory_space<vmem>>, vector<8x128xf32>
      tpu.vector_store %arg6[%c0_14, %c0_15], %15 {strides = array<i32>} : memref<8x128xf32, #tpu.memory_space<vmem>>, vector<8x128xf32>,
    } else {
    }
    return
  }
  func.func @transform_0(%arg0: i32, %arg1: i32, %arg2: i32) -> (i32, i32) {
    %c0_i32 = arith.constant 0 : i32
    return %arg0, %arg2 : i32, i32
  }
  func.func @transform_1(%arg0: i32, %arg1: i32, %arg2: i32) -> (i32, i32) {
    %c0_i32 = arith.constant 0 : i32
    return %arg2, %arg1 : i32, i32
  }
  func.func @transform_2(%arg0: i32, %arg1: i32, %arg2: i32) -> (i32, i32) {
    %c0_i32 = arith.constant 0 : i32
    %c0_i32_0 = arith.constant 0 : i32
    return %c0_i32, %arg1 : i32, i32
  }
  func.func @transform_3(%arg0: i32, %arg1: i32, %arg2: i32) -> (i32, i32) {
    %c0_i32 = arith.constant 0 : i32
    return %arg0, %arg1 : i32, i32
  }
}

</mosaic_0001>

<llo_original>
// kernel: forward_count.19
$region0: #{forward_count.19}
  #allocation0 [shape = 'u32[]', space=smem, size = 0x4, offset = 0x4, fixed_abs, tag = 'smem constant byte address 0x4 - core index']
  #allocation1 [shape = 'u32[144,128]{1,0:T(1,128)}', space=vmem, size = 0x12000, scoped, tag = 'internal scratch']
  #allocation2 [shape = 'f32[48,128]{1,0:T(8,128)}', space=vmem, size = 0x6000, scoped, tag = 'scratch operand']
  %s0 = inlined_call_operand.vmem [shape: bf16[48,128], index: 0, kind: input, shape index: {}]
  %s1 = inlined_call_operand.vmem [shape: bf16[128,128], index: 1, kind: input, shape index: {}]
  %s2 = inlined_call_operand.vmem [shape: f32[1,128], index: 2, kind: input, shape index: {}]
  %s3 = inlined_call_operand.vmem [shape: bf16[48,128], index: 3, kind: output, shape index: {}]
  %s4 = sld [smem:[#allocation0]]
  $region30: #{forward_count.19} parent=0
    _
  %s6 = ssub.s32 1, %s4
  %s7 = scalar_select 0, %s6, %s4
  // Predicated region
  $region2: #{forward_count.19} parent=0 // pred_check
    _
  $region3: #{forward_count.19} parent=0 // pred_check_branch
    %9 = sbr.rel (0) target = $region5
  $region4: #{forward_count.19} parent=0 // pred_region
    _
  $region5: #{forward_count.19} parent=0 // pred_fallthru
    _
  // Predicated region
  $region6: #{forward_count.19} parent=0 // pred_check
    _
  $region7: #{forward_count.19} parent=0 // pred_check_branch
    %11 = sbr.rel (0) target = $region9
  $region8: #{forward_count.19} parent=0 // pred_region
    _
  $region9: #{forward_count.19} parent=0 // pred_fallthru
    _
  // Predicated region
  $region10: #{forward_count.19} parent=0 // pred_check
    _
  $region11: #{forward_count.19} parent=0 // pred_check_branch
    %13 = sbr.rel (0) target = $region13
  $region12: #{forward_count.19} parent=0 // pred_region
    _
  $region13: #{forward_count.19} parent=0 // pred_fallthru
    _
  %p15 = scmp.eq.s32.totalorder 0, 0
  // Predicated region
  $region14: #{forward_count.19} parent=0 // pred_check
    %p16 = pneg %p15
  $region15: #{forward_count.19} parent=0 // pred_check_branch
    %18 = sbr.rel (%p16) target = $region17
  $region16: #{forward_count.19} parent=0 // pred_region
    %19 = vst [vmem:[#allocation2] sm:$0xff] 0.0
    %20 = vst [vmem:[#allocation2 + $0x8] sm:$0xff] 0.0
    %21 = vst [vmem:[#allocation2 + $0x10] sm:$0xff] 0.0
    %22 = vst [vmem:[#allocation2 + $0x18] sm:$0xff] 0.0
    %23 = vst [vmem:[#allocation2 + $0x20] sm:$0xff] 0.0
    %24 = vst [vmem:[#allocation2 + $0x28] sm:$0xff] 0.0
  $region17: #{forward_count.19} parent=0 // pred_fallthru
    _
  %v25 = vld [vmem:[#allocation2] sm:$0xff]
  %v26 = vld [vmem:[#allocation2 + $0x8] sm:$0xff]
  %v27 = vld [vmem:[#allocation2 + $0x10] sm:$0xff]
  %v28 = vld [vmem:[#allocation2 + $0x18] sm:$0xff]
  %v29 = vld [vmem:[#allocation2 + $0x20] sm:$0xff]
  %v30 = vld [vmem:[#allocation2 + $0x28] sm:$0xff]
  %v31 = vld [vmem:[%s0] sm:$0xf]
  %v32 = vld [vmem:[%s0 + $0x4] sm:$0xf]
  %v33 = vld [vmem:[%s0 + $0x8] sm:$0xf]
  %v34 = vld [vmem:[%s0 + $0xc] sm:$0xf]
  %v35 = vld [vmem:[%s0 + $0x10] sm:$0xf]
  %v36 = vld [vmem:[%s0 + $0x14] sm:$0xf]
  %v37 = vld [vmem:[%s1] sm:$0xf]
  %v38 = vld [vmem:[%s1 + $0x4] sm:$0xf]
  %v39 = vld [vmem:[%s1 + $0x8] sm:$0xf]
  %v40 = vld [vmem:[%s1 + $0xc] sm:$0xf]
  %v41 = vld [vmem:[%s1 + $0x10] sm:$0xf]
  %v42 = vld [vmem:[%s1 + $0x14] sm:$0xf]
  %v43 = vld [vmem:[%s1 + $0x18] sm:$0xf]
  %v44 = vld [vmem:[%s1 + $0x1c] sm:$0xf]
  %v45 = vld [vmem:[%s1 + $0x20] sm:$0xf]
  %v46 = vld [vmem:[%s1 + $0x24] sm:$0xf]
  %v47 = vld [vmem:[%s1 + $0x28] sm:$0xf]
  %v48 = vld [vmem:[%s1 + $0x2c] sm:$0xf]
  %v49 = vld [vmem:[%s1 + $0x30] sm:$0xf]
  %v50 = vld [vmem:[%s1 + $0x34] sm:$0xf]
  %v51 = vld [vmem:[%s1 + $0x38] sm:$0xf]
  %v52 = vld [vmem:[%s1 + $0x3c] sm:$0xf]
  %v59 = vunpack.c.l.b16 %v31
  %v60 = vunpack.c.l.b16 %v32
  %v61 = vunpack.c.l.b16 %v33
  %v62 = vunpack.c.l.b16 %v34
  %v63 = vunpack.c.l.b16 %v35
  %v64 = vunpack.c.l.b16 %v36
  %v65 = vpack.c.b16 %v60, %v59
  %v66 = vpack.c.b16 %v62, %v61
  %v67 = vpack.c.b16 %v64, %v63
  %v87 = vunpack.c.l.b16 %v37
  %v88 = vunpack.c.l.b16 %v38
  %v89 = vunpack.c.l.b16 %v39
  %v90 = vunpack.c.l.b16 %v40
  %v91 = vunpack.c.l.b16 %v41
  %v92 = vunpack.c.l.b16 %v42
  %v93 = vunpack.c.l.b16 %v43
  %v94 = vunpack.c.l.b16 %v44
  %v95 = vunpack.c.l.b16 %v45
  %v96 = vunpack.c.l.b16 %v46
  %v97 = vunpack.c.l.b16 %v47
  %v98 = vunpack.c.l.b16 %v48
  %v99 = vunpack.c.l.b16 %v49
  %v100 = vunpack.c.l.b16 %v50
  %v101 = vunpack.c.l.b16 %v51
  %v102 = vunpack.c.l.b16 %v52
  %v103 = vpack.c.b16 %v88, %v87
  %v104 = vpack.c.b16 %v90, %v89
  %v105 = vpack.c.b16 %v92, %v91
  %v106 = vpack.c.b16 %v94, %v93
  %v107 = vpack.c.b16 %v96, %v95
  %v108 = vpack.c.b16 %v98, %v97
  %v109 = vpack.c.b16 %v100, %v99
  %v110 = vpack.c.b16 %v102, %v101
  %119 = vmatprep.subr.bf16.mxu0 0
  %120 = vmatpush1.bf16.msra.mxu0 %v103
  %121 = vmatprep.subr.bf16.mxu0 0
  %122 = vmatpush1.bf16.msra.mxu0 %v104
  %123 = vmatprep.subr.bf16.mxu0 0
  %124 = vmatpush1.bf16.msra.mxu0 %v105
  %125 = vmatprep.subr.bf16.mxu0 0
  %126 = vmatpush1.bf16.msra.mxu0 %v106
  %127 = vmatprep.subr.bf16.mxu0 0
  %128 = vmatpush1.bf16.msra.mxu0 %v107
  %129 = vmatprep.subr.bf16.mxu0 0
  %130 = vmatpush1.bf16.msra.mxu0 %v108
  %131 = vmatprep.subr.bf16.mxu0 0
  %132 = vmatpush1.bf16.msra.mxu0 %v109
  %133 = vmatprep.subr.bf16.mxu0 0
  %134 = vmatpush1.bf16.msra.mxu0 %v110
  %135 = vmatprep.subr.bf16.mxu0 0
  %136 = vmatpush1.bf16.msra.mxu0 0
  %137 = vmatprep.subr.bf16.mxu0 0
  %138 = vmatpush1.bf16.msra.mxu0 0
  %139 = vmatprep.subr.bf16.mxu0 0
  %140 = vmatpush1.bf16.msra.mxu0 0
  %141 = vmatprep.subr.bf16.mxu0 0
  %142 = vmatpush1.bf16.msra.mxu0 0
  %143 = vmatprep.subr.bf16.mxu0 0
  %144 = vmatpush1.bf16.msra.mxu0 0
  %145 = vmatprep.subr.bf16.mxu0 0
  %146 = vmatpush1.bf16.msra.mxu0 0
  %147 = vmatprep.subr.bf16.mxu0 0
  %148 = vmatpush1.bf16.msra.mxu0 0
  %149 = vmatprep.subr.bf16.mxu0 0
  %150 = vmatpush1.bf16.msra.mxu0 0
  %151 = vmatprep.mubr.bf16.mxu0 0
  %152 = vmatmul.mubr.bf16.gmra.mrb[0].mxu0 %v65
  %v153 = vpop.f32.mrb[0].mxu0
  %v154 = vadd.f32 0.0, %v153
  %v155 = vpop.f32.mrb[0].mxu0
  %v156 = vpop.f32.mrb[0].mxu0
  %v157 = vadd.f32 0.0, %v156
  %v158 = vpop.f32.mrb[0].mxu0
  %159 = vmatprep.mubr.bf16.mxu0 0
  %160 = vmatmul.mubr.bf16.gmra.mrb[0].mxu0 %v66
  %v161 = vpop.f32.mrb[0].mxu0
  %v162 = vadd.f32 0.0, %v161
  %v163 = vpop.f32.mrb[0].mxu0
  %v164 = vpop.f32.mrb[0].mxu0
  %v165 = vadd.f32 0.0, %v164
  %v166 = vpop.f32.mrb[0].mxu0
  %167 = vmatprep.mubr.bf16.mxu0 0
  %168 = vmatmul.mubr.bf16.gmra.mrb[0].mxu0 %v67
  %v169 = vpop.f32.mrb[0].mxu0
  %v170 = vadd.f32 0.0, %v169
  %v171 = vpop.f32.mrb[0].mxu0
  %v172 = vpop.f32.mrb[0].mxu0
  %v173 = vadd.f32 0.0, %v172
  %v174 = vpop.f32.mrb[0].mxu0
  %175 = vdwg.mxu0
  %v176 = vadd.f32 %v25, %v154
  %v177 = vadd.f32 %v26, %v157
  %v178 = vadd.f32 %v27, %v162
  %v179 = vadd.f32 %v28, %v165
  %v180 = vadd.f32 %v29, %v170
  %v181 = vadd.f32 %v30, %v173
  %182 = vst [vmem:[#allocation2] sm:$0xff] %v176
  %183 = vst [vmem:[#allocation2 + $0x8] sm:$0xff] %v177
  %184 = vst [vmem:[#allocation2 + $0x10] sm:$0xff] %v178
  %185 = vst [vmem:[#allocation2 + $0x18] sm:$0xff] %v179
  %186 = vst [vmem:[#allocation2 + $0x20] sm:$0xff] %v180
  %187 = vst [vmem:[#allocation2 + $0x28] sm:$0xff] %v181
  // Predicated region
  $region18: #{forward_count.19} parent=0 // pred_check
    %p188 = pneg %p15
  $region19: #{forward_count.19} parent=0 // pred_check_branch
    %190 = sbr.rel (%p188) target = $region21
  $region20: #{forward_count.19} parent=0 // pred_region
    %v191 = vld [vmem:[#allocation2] sm:$0xff]
    %v192 = vld [vmem:[#allocation2 + $0x8] sm:$0xff]
    %v193 = vld [vmem:[#allocation2 + $0x10] sm:$0xff]
    %v194 = vld [vmem:[#allocation2 + $0x18] sm:$0xff]
    %v195 = vld [vmem:[#allocation2 + $0x20] sm:$0xff]
    %v196 = vld [vmem:[#allocation2 + $0x28] sm:$0xff]
    %v197 = vld [vmem:[%s2] sm:$0x1]
    %v199 = vlaneseq
    %v200 = vshrl.u32 %v199, 7
    %v201 = vsub.s32 0, %v200
    %v202 = vrot.slane %v197, %v201
    %v204 = vadd.f32 %v191, %v202
    %v205 = vadd.f32 %v192, %v202
    %v206 = vadd.f32 %v193, %v202
    %v207 = vadd.f32 %v194, %v202
    %v208 = vadd.f32 %v195, %v202
    %v209 = vadd.f32 %v196, %v202
    %v210 = vpack.c.bf16 %v205, %v204
    %v211 = vpack.c.bf16 %v207, %v206
    %v212 = vpack.c.bf16 %v209, %v208
    %v216 = vunpack.c.l.b16 %v210
    %v217 = vunpack.c.h.b16 %v210
    %v218 = vunpack.c.l.b16 %v211
    %v219 = vunpack.c.h.b16 %v211
    %v220 = vunpack.c.l.b16 %v212
    %v221 = vunpack.c.h.b16 %v212
    %v222 = vpack.c.b16 %v216, %v216
    %v223 = vpack.c.b16 %v217, %v217
    %v224 = vpack.c.b16 %v218, %v218
    %v225 = vpack.c.b16 %v219, %v219
    %v226 = vpack.c.b16 %v220, %v220
    %v227 = vpack.c.b16 %v221, %v221
    %234 = vst [vmem:[%s3] sm:$0xf] %v222
    %235 = vst [vmem:[%s3 + $0x4] sm:$0xf] %v223
    %236 = vst [vmem:[%s3 + $0x8] sm:$0xf] %v224
    %237 = vst [vmem:[%s3 + $0xc] sm:$0xf] %v225
    %238 = vst [vmem:[%s3 + $0x10] sm:$0xf] %v226
    %239 = vst [vmem:[%s3 + $0x14] sm:$0xf] %v227
  $region21: #{forward_count.19} parent=0 // pred_fallthru
    _
  // Predicated region
  $region22: #{forward_count.19} parent=0 // pred_check
    _
  $region23: #{forward_count.19} parent=0 // pred_check_branch
    %241 = sbr.rel (0) target = $region25
  $region24: #{forward_count.19} parent=0 // pred_region
    _
  $region25: #{forward_count.19} parent=0 // pred_fallthru
    _
  // Predicated region
  $region26: #{forward_count.19} parent=0 // pred_check
    _
  $region27: #{forward_count.19} parent=0 // pred_check_branch
    %243 = sbr.rel (0) target = $region29
  $region28: #{forward_count.19} parent=0 // pred_region
    _
  $region29: #{forward_count.19} parent=0 // pred_fallthru
    _

// kernel: forward_count.22
$region0: #{forward_count.22}
  #allocation0 [shape = 'u32[]', space=smem, size = 0x4, offset = 0x4, fixed_abs, tag = 'smem constant byte address 0x4 - core index']
  #allocation1 [shape = 'u32[144,128]{1,0:T(1,128)}', space=vmem, size = 0x12000, scoped, tag = 'internal scratch']
  #allocation2 [shape = 'f32[16,128]{1,0:T(8,128)}', space=vmem, size = 0x2000, scoped, tag = 'scratch operand']
  %s0 = inlined_call_operand.vmem [shape: bf16[16,128], index: 0, kind: input, shape index: {}]
  %s1 = inlined_call_operand.vmem [shape: bf16[128,128], index: 1, kind: input, shape index: {}]
  %s2 = inlined_call_operand.vmem [shape: f32[1,128], index: 2, kind: input, shape index: {}]
  %s3 = inlined_call_operand.vmem [shape: f32[16,128], index: 3, kind: output, shape index: {}]
  %s4 = sld [smem:[#allocation0]]
  $region30: #{forward_count.22} parent=0
    _
  %s6 = ssub.s32 1, %s4
  %s7 = scalar_select 0, %s6, %s4
  // Predicated region
  $region2: #{forward_count.22} parent=0 // pred_check
    _
  $region3: #{forward_count.22} parent=0 // pred_check_branch
    %9 = sbr.rel (0) target = $region5
  $region4: #{forward_count.22} parent=0 // pred_region
    _
  $region5: #{forward_count.22} parent=0 // pred_fallthru
    _
  // Predicated region
  $region6: #{forward_count.22} parent=0 // pred_check
    _
  $region7: #{forward_count.22} parent=0 // pred_check_branch
    %11 = sbr.rel (0) target = $region9
  $region8: #{forward_count.22} parent=0 // pred_region
    _
  $region9: #{forward_count.22} parent=0 // pred_fallthru
    _
  // Predicated region
  $region10: #{forward_count.22} parent=0 // pred_check
    _
  $region11: #{forward_count.22} parent=0 // pred_check_branch
    %13 = sbr.rel (0) target = $region13
  $region12: #{forward_count.22} parent=0 // pred_region
    _
  $region13: #{forward_count.22} parent=0 // pred_fallthru
    _
  %p15 = scmp.eq.s32.totalorder 0, 0
  // Predicated region
  $region14: #{forward_count.22} parent=0 // pred_check
    %p16 = pneg %p15
  $region15: #{forward_count.22} parent=0 // pred_check_branch
    %18 = sbr.rel (%p16) target = $region17
  $region16: #{forward_count.22} parent=0 // pred_region
    %19 = vst [vmem:[#allocation2] sm:$0xff] 0.0
    %20 = vst [vmem:[#allocation2 + $0x8] sm:$0xff] 0.0
  $region17: #{forward_count.22} parent=0 // pred_fallthru
    _
  %v21 = vld [vmem:[#allocation2] sm:$0xff]
  %v22 = vld [vmem:[#allocation2 + $0x8] sm:$0xff]
  %v23 = vld [vmem:[%s0] sm:$0xf]
  %v24 = vld [vmem:[%s0 + $0x4] sm:$0xf]
  %v25 = vld [vmem:[%s1] sm:$0xf]
  %v26 = vld [vmem:[%s1 + $0x4] sm:$0xf]
  %v27 = vld [vmem:[%s1 + $0x8] sm:$0xf]
  %v28 = vld [vmem:[%s1 + $0xc] sm:$0xf]
  %v29 = vld [vmem:[%s1 + $0x10] sm:$0xf]
  %v30 = vld [vmem:[%s1 + $0x14] sm:$0xf]
  %v31 = vld [vmem:[%s1 + $0x18] sm:$0xf]
  %v32 = vld [vmem:[%s1 + $0x1c] sm:$0xf]
  %v33 = vld [vmem:[%s1 + $0x20] sm:$0xf]
  %v34 = vld [vmem:[%s1 + $0x24] sm:$0xf]
  %v35 = vld [vmem:[%s1 + $0x28] sm:$0xf]
  %v36 = vld [vmem:[%s1 + $0x2c] sm:$0xf]
  %v37 = vld [vmem:[%s1 + $0x30] sm:$0xf]
  %v38 = vld [vmem:[%s1 + $0x34] sm:$0xf]
  %v39 = vld [vmem:[%s1 + $0x38] sm:$0xf]
  %v40 = vld [vmem:[%s1 + $0x3c] sm:$0xf]
  %v43 = vunpack.c.l.b16 %v23
  %v44 = vunpack.c.l.b16 %v24
  %v45 = vpack.c.b16 %v44, %v43
  %v63 = vunpack.c.l.b16 %v25
  %v64 = vunpack.c.l.b16 %v26
  %v65 = vunpack.c.l.b16 %v27
  %v66 = vunpack.c.l.b16 %v28
  %v67 = vunpack.c.l.b16 %v29
  %v68 = vunpack.c.l.b16 %v30
  %v69 = vunpack.c.l.b16 %v31
  %v70 = vunpack.c.l.b16 %v32
  %v71 = vunpack.c.l.b16 %v33
  %v72 = vunpack.c.l.b16 %v34
  %v73 = vunpack.c.l.b16 %v35
  %v74 = vunpack.c.l.b16 %v36
  %v75 = vunpack.c.l.b16 %v37
  %v76 = vunpack.c.l.b16 %v38
  %v77 = vunpack.c.l.b16 %v39
  %v78 = vunpack.c.l.b16 %v40
  %v79 = vpack.c.b16 %v64, %v63
  %v80 = vpack.c.b16 %v66, %v65
  %v81 = vpack.c.b16 %v68, %v67
  %v82 = vpack.c.b16 %v70, %v69
  %v83 = vpack.c.b16 %v72, %v71
  %v84 = vpack.c.b16 %v74, %v73
  %v85 = vpack.c.b16 %v76, %v75
  %v86 = vpack.c.b16 %v78, %v77
  %95 = vmatprep.subr.bf16.mxu0 0
  %96 = vmatpush1.bf16.msra.mxu0 %v79
  %97 = vmatprep.subr.bf16.mxu0 0
  %98 = vmatpush1.bf16.msra.mxu0 %v80
  %99 = vmatprep.subr.bf16.mxu0 0
  %100 = vmatpush1.bf16.msra.mxu0 %v81
  %101 = vmatprep.subr.bf16.mxu0 0
  %102 = vmatpush1.bf16.msra.mxu0 %v82
  %103 = vmatprep.subr.bf16.mxu0 0
  %104 = vmatpush1.bf16.msra.mxu0 %v83
  %105 = vmatprep.subr.bf16.mxu0 0
  %106 = vmatpush1.bf16.msra.mxu0 %v84
  %107 = vmatprep.subr.bf16.mxu0 0
  %108 = vmatpush1.bf16.msra.mxu0 %v85
  %109 = vmatprep.subr.bf16.mxu0 0
  %110 = vmatpush1.bf16.msra.mxu0 %v86
  %111 = vmatprep.subr.bf16.mxu0 0
  %112 = vmatpush1.bf16.msra.mxu0 0
  %113 = vmatprep.subr.bf16.mxu0 0
  %114 = vmatpush1.bf16.msra.mxu0 0
  %115 = vmatprep.subr.bf16.mxu0 0
  %116 = vmatpush1.bf16.msra.mxu0 0
  %117 = vmatprep.subr.bf16.mxu0 0
  %118 = vmatpush1.bf16.msra.mxu0 0
  %119 = vmatprep.subr.bf16.mxu0 0
  %120 = vmatpush1.bf16.msra.mxu0 0
  %121 = vmatprep.subr.bf16.mxu0 0
  %122 = vmatpush1.bf16.msra.mxu0 0
  %123 = vmatprep.subr.bf16.mxu0 0
  %124 = vmatpush1.bf16.msra.mxu0 0
  %125 = vmatprep.subr.bf16.mxu0 0
  %126 = vmatpush1.bf16.msra.mxu0 0
  %127 = vmatprep.mubr.bf16.mxu0 0
  %128 = vmatmul.mubr.bf16.gmra.mrb[0].mxu0 %v45
  %v129 = vpop.f32.mrb[0].mxu0
  %v130 = vadd.f32 0.0, %v129
  %v131 = vpop.f32.mrb[0].mxu0
  %v132 = vpop.f32.mrb[0].mxu0
  %v133 = vadd.f32 0.0, %v132
  %v134 = vpop.f32.mrb[0].mxu0
  %135 = vdwg.mxu0
  %v136 = vadd.f32 %v21, %v130
  %v137 = vadd.f32 %v22, %v133
  %138 = vst [vmem:[#allocation2] sm:$0xff] %v136
  %139 = vst [vmem:[#allocation2 + $0x8] sm:$0xff] %v137
  // Predicated region
  $region18: #{forward_count.22} parent=0 // pred_check
    %p140 = pneg %p15
  $region19: #{forward_count.22} parent=0 // pred_check_branch
    %142 = sbr.rel (%p140) target = $region21
  $region20: #{forward_count.22} parent=0 // pred_region
    %v143 = vld [vmem:[#allocation2] sm:$0xff]
    %v144 = vld [vmem:[#allocation2 + $0x8] sm:$0xff]
    %v145 = vld [vmem:[%s2] sm:$0x1]
    %v147 = vlaneseq
    %v148 = vshrl.u32 %v147, 7
    %v149 = vsub.s32 0, %v148
    %v150 = vrot.slane %v145, %v149
    %v152 = vadd.f32 %v143, %v150
    %v153 = vadd.f32 %v144, %v150
    %154 = vst [vmem:[%s3] sm:$0xff] %v152
    %155 = vst [vmem:[%s3 + $0x8] sm:$0xff] %v153
  $region21: #{forward_count.22} parent=0 // pred_fallthru
    _
  // Predicated region
  $region22: #{forward_count.22} parent=0 // pred_check
    _
  $region23: #{forward_count.22} parent=0 // pred_check_branch
    %157 = sbr.rel (0) target = $region25
  $region24: #{forward_count.22} parent=0 // pred_region
    _
  $region25: #{forward_count.22} parent=0 // pred_fallthru
    _
  // Predicated region
  $region26: #{forward_count.22} parent=0 // pred_check
    _
  $region27: #{forward_count.22} parent=0 // pred_check_branch
    %159 = sbr.rel (0) target = $region29
  $region28: #{forward_count.22} parent=0 // pred_region
    _
  $region29: #{forward_count.22} parent=0 // pred_fallthru
    _

// kernel: custom-call.2
$region0: #{custom-call.2}
  %s0 = inlined_call_operand.vmem [shape: f32[2,16], index: 0, kind: output, shape index: {}]

// kernel: forward_count.17
$region0: #{forward_count.17}
  #allocation0 [shape = 'u32[]', space=smem, size = 0x4, offset = 0x4, fixed_abs, tag = 'smem constant byte address 0x4 - core index']
  #allocation1 [shape = 'u32[144,128]{1,0:T(1,128)}', space=vmem, size = 0x12000, scoped, tag = 'internal scratch']
  #allocation2 [shape = 'f32[16,128]{1,0:T(8,128)}', space=vmem, size = 0x2000, scoped, tag = 'scratch operand']
  %s0 = inlined_call_operand.vmem [shape: bf16[16,128], index: 0, kind: input, shape index: {}]
  %s1 = inlined_call_operand.vmem [shape: bf16[128,128], index: 1, kind: input, shape index: {}]
  %s2 = inlined_call_operand.vmem [shape: f32[1,128], index: 2, kind: input, shape index: {}]
  %s3 = inlined_call_operand.vmem [shape: bf16[16,128], index: 3, kind: output, shape index: {}]
  %s4 = sld [smem:[#allocation0]]
  $region30: #{forward_count.17} parent=0
    _
  %s6 = ssub.s32 1, %s4
  %s7 = scalar_select 0, %s6, %s4
  // Predicated region
  $region2: #{forward_count.17} parent=0 // pred_check
    _
  $region3: #{forward_count.17} parent=0 // pred_check_branch
    %9 = sbr.rel (0) target = $region5
  $region4: #{forward_count.17} parent=0 // pred_region
    _
  $region5: #{forward_count.17} parent=0 // pred_fallthru
    _
  // Predicated region
  $region6: #{forward_count.17} parent=0 // pred_check
    _
  $region7: #{forward_count.17} parent=0 // pred_check_branch
    %11 = sbr.rel (0) target = $region9
  $region8: #{forward_count.17} parent=0 // pred_region
    _
  $region9: #{forward_count.17} parent=0 // pred_fallthru
    _
  // Predicated region
  $region10: #{forward_count.17} parent=0 // pred_check
    _
  $region11: #{forward_count.17} parent=0 // pred_check_branch
    %13 = sbr.rel (0) target = $region13
  $region12: #{forward_count.17} parent=0 // pred_region
    _
  $region13: #{forward_count.17} parent=0 // pred_fallthru
    _
  %p15 = scmp.eq.s32.totalorder 0, 0
  // Predicated region
  $region14: #{forward_count.17} parent=0 // pred_check
    %p16 = pneg %p15
  $region15: #{forward_count.17} parent=0 // pred_check_branch
    %18 = sbr.rel (%p16) target = $region17
  $region16: #{forward_count.17} parent=0 // pred_region
    %19 = vst [vmem:[#allocation2] sm:$0xff] 0.0
    %20 = vst [vmem:[#allocation2 + $0x8] sm:$0xff] 0.0
  $region17: #{forward_count.17} parent=0 // pred_fallthru
    _
  %v21 = vld [vmem:[#allocation2] sm:$0xff]
  %v22 = vld [vmem:[#allocation2 + $0x8] sm:$0xff]
  %v23 = vld [vmem:[%s0] sm:$0xf]
  %v24 = vld [vmem:[%s0 + $0x4] sm:$0xf]
  %v25 = vld [vmem:[%s1] sm:$0xf]
  %v26 = vld [vmem:[%s1 + $0x4] sm:$0xf]
  %v27 = vld [vmem:[%s1 + $0x8] sm:$0xf]
  %v28 = vld [vmem:[%s1 + $0xc] sm:$0xf]
  %v29 = vld [vmem:[%s1 + $0x10] sm:$0xf]
  %v30 = vld [vmem:[%s1 + $0x14] sm:$0xf]
  %v31 = vld [vmem:[%s1 + $0x18] sm:$0xf]
  %v32 = vld [vmem:[%s1 + $0x1c] sm:$0xf]
  %v33 = vld [vmem:[%s1 + $0x20] sm:$0xf]
  %v34 = vld [vmem:[%s1 + $0x24] sm:$0xf]
  %v35 = vld [vmem:[%s1 + $0x28] sm:$0xf]
  %v36 = vld [vmem:[%s1 + $0x2c] sm:$0xf]
  %v37 = vld [vmem:[%s1 + $0x30] sm:$0xf]
  %v38 = vld [vmem:[%s1 + $0x34] sm:$0xf]
  %v39 = vld [vmem:[%s1 + $0x38] sm:$0xf]
  %v40 = vld [vmem:[%s1 + $0x3c] sm:$0xf]
  %v43 = vunpack.c.l.b16 %v23
  %v44 = vunpack.c.l.b16 %v24
  %v45 = vpack.c.b16 %v44, %v43
  %v63 = vunpack.c.l.b16 %v25
  %v64 = vunpack.c.l.b16 %v26
  %v65 = vunpack.c.l.b16 %v27
  %v66 = vunpack.c.l.b16 %v28
  %v67 = vunpack.c.l.b16 %v29
  %v68 = vunpack.c.l.b16 %v30
  %v69 = vunpack.c.l.b16 %v31
  %v70 = vunpack.c.l.b16 %v32
  %v71 = vunpack.c.l.b16 %v33
  %v72 = vunpack.c.l.b16 %v34
  %v73 = vunpack.c.l.b16 %v35
  %v74 = vunpack.c.l.b16 %v36
  %v75 = vunpack.c.l.b16 %v37
  %v76 = vunpack.c.l.b16 %v38
  %v77 = vunpack.c.l.b16 %v39
  %v78 = vunpack.c.l.b16 %v40
  %v79 = vpack.c.b16 %v64, %v63
  %v80 = vpack.c.b16 %v66, %v65
  %v81 = vpack.c.b16 %v68, %v67
  %v82 = vpack.c.b16 %v70, %v69
  %v83 = vpack.c.b16 %v72, %v71
  %v84 = vpack.c.b16 %v74, %v73
  %v85 = vpack.c.b16 %v76, %v75
  %v86 = vpack.c.b16 %v78, %v77
  %95 = vmatprep.subr.bf16.mxu0 0
  %96 = vmatpush1.bf16.msra.mxu0 %v79
  %97 = vmatprep.subr.bf16.mxu0 0
  %98 = vmatpush1.bf16.msra.mxu0 %v80
  %99 = vmatprep.subr.bf16.mxu0 0
  %100 = vmatpush1.bf16.msra.mxu0 %v81
  %101 = vmatprep.subr.bf16.mxu0 0
  %102 = vmatpush1.bf16.msra.mxu0 %v82
  %103 = vmatprep.subr.bf16.mxu0 0
  %104 = vmatpush1.bf16.msra.mxu0 %v83
  %105 = vmatprep.subr.bf16.mxu0 0
  %106 = vmatpush1.bf16.msra.mxu0 %v84
  %107 = vmatprep.subr.bf16.mxu0 0
  %108 = vmatpush1.bf16.msra.mxu0 %v85
  %109 = vmatprep.subr.bf16.mxu0 0
  %110 = vmatpush1.bf16.msra.mxu0 %v86
  %111 = vmatprep.subr.bf16.mxu0 0
  %112 = vmatpush1.bf16.msra.mxu0 0
  %113 = vmatprep.subr.bf16.mxu0 0
  %114 = vmatpush1.bf16.msra.mxu0 0
  %115 = vmatprep.subr.bf16.mxu0 0
  %116 = vmatpush1.bf16.msra.mxu0 0
  %117 = vmatprep.subr.bf16.mxu0 0
  %118 = vmatpush1.bf16.msra.mxu0 0
  %119 = vmatprep.subr.bf16.mxu0 0
  %120 = vmatpush1.bf16.msra.mxu0 0
  %121 = vmatprep.subr.bf16.mxu0 0
  %122 = vmatpush1.bf16.msra.mxu0 0
  %123 = vmatprep.subr.bf16.mxu0 0
  %124 = vmatpush1.bf16.msra.mxu0 0
  %125 = vmatprep.subr.bf16.mxu0 0
  %126 = vmatpush1.bf16.msra.mxu0 0
  %127 = vmatprep.mubr.bf16.mxu0 0
  %128 = vmatmul.mubr.bf16.gmra.mrb[0].mxu0 %v45
  %v129 = vpop.f32.mrb[0].mxu0
  %v130 = vadd.f32 0.0, %v129
  %v131 = vpop.f32.mrb[0].mxu0
  %v132 = vpop.f32.mrb[0].mxu0
  %v133 = vadd.f32 0.0, %v132
  %v134 = vpop.f32.mrb[0].mxu0
  %135 = vdwg.mxu0
  %v136 = vadd.f32 %v21, %v130
  %v137 = vadd.f32 %v22, %v133
  %138 = vst [vmem:[#allocation2] sm:$0xff] %v136
  %139 = vst [vmem:[#allocation2 + $0x8] sm:$0xff] %v137
  // Predicated region
  $region18: #{forward_count.17} parent=0 // pred_check
    %p140 = pneg %p15
  $region19: #{forward_count.17} parent=0 // pred_check_branch
    %142 = sbr.rel (%p140) target = $region21
  $region20: #{forward_count.17} parent=0 // pred_region
    %v143 = vld [vmem:[#allocation2] sm:$0xff]
    %v144 = vld [vmem:[#allocation2 + $0x8] sm:$0xff]
    %v145 = vld [vmem:[%s2] sm:$0x1]
    %v147 = vlaneseq
    %v148 = vshrl.u32 %v147, 7
    %v149 = vsub.s32 0, %v148
    %v150 = vrot.slane %v145, %v149
    %v152 = vadd.f32 %v143, %v150
    %v153 = vadd.f32 %v144, %v150
    %v154 = vmax.f32 %v152, 0.0
    %v155 = vmax.f32 %v153, 0.0
    %v156 = vpack.c.bf16 %v155, %v154
    %v158 = vunpack.c.l.b16 %v156
    %v159 = vunpack.c.h.b16 %v156
    %v160 = vpack.c.b16 %v158, %v158
    %v161 = vpack.c.b16 %v159, %v159
    %164 = vst [vmem:[%s3] sm:$0xf] %v160
    %165 = vst [vmem:[%s3 + $0x4] sm:$0xf] %v161
  $region21: #{forward_count.17} parent=0 // pred_fallthru
    _
  // Predicated region
  $region22: #{forward_count.17} parent=0 // pred_check
    _
  $region23: #{forward_count.17} parent=0 // pred_check_branch
    %167 = sbr.rel (0) target = $region25
  $region24: #{forward_count.17} parent=0 // pred_region
    _
  $region25: #{forward_count.17} parent=0 // pred_fallthru
    _
  // Predicated region
  $region26: #{forward_count.17} parent=0 // pred_check
    _
  $region27: #{forward_count.17} parent=0 // pred_check_branch
    %169 = sbr.rel (0) target = $region29
  $region28: #{forward_count.17} parent=0 // pred_region
    _
  $region29: #{forward_count.17} parent=0 // pred_fallthru
    _

// kernel: forward_count.28
$region0: #{forward_count.28}
  #allocation0 [shape = 'u32[]', space=smem, size = 0x4, offset = 0x4, fixed_abs, tag = 'smem constant byte address 0x4 - core index']
  #allocation1 [shape = 'u32[144,128]{1,0:T(1,128)}', space=vmem, size = 0x12000, scoped, tag = 'internal scratch']
  %s0 = inlined_call_operand.vmem [shape: bf16[2,2,24,32], index: 0, kind: input, shape index: {}]
  %s1 = inlined_call_operand.vmem [shape: f32[2,1,24], index: 1, kind: input, shape index: {}]
  %s2 = inlined_call_operand.vmem [shape: bf16[2,32,32], index: 2, kind: input, shape index: {}]
  %s3 = inlined_call_operand.vmem [shape: f32[2,1,32], index: 3, kind: input, shape index: {}]
  %s4 = inlined_call_operand.vmem [shape: bf16[2,32,32], index: 4, kind: input, shape index: {}]
  %s5 = inlined_call_operand.vmem [shape: f32[2,1,32], index: 5, kind: input, shape index: {}]
  %s6 = inlined_call_operand.vmem [shape: bf16[2,32,32], index: 6, kind: input, shape index: {}]
  %s7 = inlined_call_operand.vmem [shape: f32[2,1,32], index: 7, kind: input, shape index: {}]
  %s8 = inlined_call_operand.vmem [shape: bf16[2,32,32], index: 8, kind: input, shape index: {}]
  %s9 = inlined_call_operand.vmem [shape: f32[2,1,32], index: 9, kind: input, shape index: {}]
  %s10 = inlined_call_operand.vmem [shape: bf16[2,2,24,32], index: 10, kind: output, shape index: {}]
  %s11 = sld [smem:[#allocation0]]
  $region73: #{forward_count.28} parent=0
    _
  %s13 = ssub.s32 1, %s11
  %s14 = scalar_select 0, %s13, %s11
  loop: start=0, step=1, limit=6
  $region2: #{forward_count.28} parent=0 // loop_pre_header
    _
  $region3: #{forward_count.28} parent=0 // loop_header
    %s16 = sphi 0, %s20
    %p17 = scmp.ge.s32.totalorder %s16, 6
    %s23 = sphi 0, %s35
    %s24 = sphi 0, %s31
    %s25 = sphi 0, %s23
    %s26 = sphi 0, %s24
    %s27 = sphi 0, %s25
    %s28 = sphi 0, %s26
    %s40 = sphi 0, %s42
    %s43 = sphi 0, %s40
    %s44 = sphi 0, %s43
    %s60 = sphi 0, %s44
    %s66 = sphi 0, %s68
    %s69 = sphi 0, %s66
    %s70 = sphi 0, %s69
    %s86 = sphi 0, %s70
    %s92 = sphi 0, %s94
    %s95 = sphi 0, %s92
    %s96 = sphi 0, %s95
    %s112 = sphi 0, %s96
    %s118 = sphi 0, %s120
    %s121 = sphi 0, %s118
    %s122 = sphi 0, %s121
    %s138 = sphi 0, %s122
    %s144 = sphi 0, %s146
    %s147 = sphi 0, %s144
    %s148 = sphi 0, %s147
    %s164 = sphi 0, %s148
    %s170 = sphi 0, %s172
    %s173 = sphi 0, %s170
    %s174 = sphi 0, %s173
    %s190 = sphi 0, %s174
    %s196 = sphi 0, %s198
    %s199 = sphi 0, %s196
    %s200 = sphi 0, %s199
    %s216 = sphi 0, %s200
    %s222 = sphi 0, %s224
    %s225 = sphi 0, %s222
    %s226 = sphi 0, %s225
    %s242 = sphi 0, %s226
    %s248 = sphi 0, %s250
    %s251 = sphi 0, %s248
    %s252 = sphi 0, %s251
    %s268 = sphi 0, %s252
    %s274 = sphi 0, %s276
    %s277 = sphi 0, %s274
    %s278 = sphi 0, %s277
    %s294 = sphi 0, %s278
    %s302 = sphi 0, %s304
    %s305 = sphi 0, %s302
    %s306 = sphi 0, %s305
    %s322 = sphi 0, %s306
  $region4: #{forward_count.28} parent=0 // loop_header_branch
    %19 = sbr.rel (%p17) target = $region8
  $region5: #{forward_count.28} parent=0 // loop_body
    %s21 = ssub.s32 %s16, 1
    %s22 = ssub.s32 %s16, 2
    %s29 = sadd.s32 1, %s24
    %p30 = scmp.ge.s32.totalorder %s29, 2
    %s31 = scalar_select %p30, 0, %s29
    %s32 = sadd.s32 1, %s23
    %s33 = scalar_select %p30, %s32, %s23
    %p34 = scmp.ge.s32.totalorder %s33, 2
    %s35 = scalar_select %p34, 0, %s33
    %s36 = ssub.s32 %s23, %s35
    %s37 = ssub.s32 %s24, %s31
    %s38 = sor.u32 %s36, %s37
    %p39 = scmp.eq.s32.totalorder %s38, 0
    %s41 = sadd.s32 %s40, 1
    %s42 = scalar_select %p39, %s40, %s41
    %p45 = pneg %p39
    %p46 = scmp.eq.s32.totalorder %s16, 3
    %p47 = por %p45, %p46
    %p48 = scmp.ne.s32.totalorder %s40, %s43
    %p49 = scmp.eq.s32.totalorder %s16, 0
    %p50 = por %p48, %p49
    %p51 = scmp.ne.s32.totalorder %s40, %s43
    %p52 = scmp.eq.s32.totalorder %s21, 3
    %p53 = por %p51, %p52
    %p54 = scmp.ne.s32.totalorder %s43, %s44
    %p55 = scmp.eq.s32.totalorder %s21, 0
    %p56 = por %p54, %p55
    %p57 = scmp.ne.s32.totalorder %s43, %s44
    %p58 = scmp.eq.s32.totalorder %s22, 3
    %p59 = por %p57, %p58
    %p61 = scmp.ne.s32.totalorder %s44, %s60
    %p62 = scmp.eq.s32.totalorder %s22, 0
    %p63 = por %p61, %p62
    %s64 = ssub.s32 %s24, %s31
    %p65 = scmp.eq.s32.totalorder %s64, 0
    %s67 = sadd.s32 %s66, 1
    %s68 = scalar_select %p65, %s66, %s67
    %p71 = pneg %p65
    %p72 = scmp.eq.s32.totalorder %s16, 3
    %p73 = por %p71, %p72
    %p74 = scmp.ne.s32.totalorder %s66, %s69
    %p75 = scmp.eq.s32.totalorder %s16, 0
    %p76 = por %p74, %p75
    %p77 = scmp.ne.s32.totalorder %s66, %s69
    %p78 = scmp.eq.s32.totalorder %s21, 3
    %p79 = por %p77, %p78
    %p80 = scmp.ne.s32.totalorder %s69, %s70
    %p81 = scmp.eq.s32.totalorder %s21, 0
    %p82 = por %p80, %p81
    %p83 = scmp.ne.s32.totalorder %s69, %s70
    %p84 = scmp.eq.s32.totalorder %s22, 3
    %p85 = por %p83, %p84
    %p87 = scmp.ne.s32.totalorder %s70, %s86
    %p88 = scmp.eq.s32.totalorder %s22, 0
    %p89 = por %p87, %p88
    %s90 = ssub.s32 %s23, %s35
    %p91 = scmp.eq.s32.totalorder %s90, 0
    %s93 = sadd.s32 %s92, 1
    %s94 = scalar_select %p91, %s92, %s93
    %p97 = pneg %p91
    %p98 = scmp.eq.s32.totalorder %s16, 3
    %p99 = por %p97, %p98
    %p100 = scmp.ne.s32.totalorder %s92, %s95
    %p101 = scmp.eq.s32.totalorder %s16, 0
    %p102 = por %p100, %p101
    %p103 = scmp.ne.s32.totalorder %s92, %s95
    %p104 = scmp.eq.s32.totalorder %s21, 3
    %p105 = por %p103, %p104
    %p106 = scmp.ne.s32.totalorder %s95, %s96
    %p107 = scmp.eq.s32.totalorder %s21, 0
    %p108 = por %p106, %p107
    %p109 = scmp.ne.s32.totalorder %s95, %s96
    %p110 = scmp.eq.s32.totalorder %s22, 3
    %p111 = por %p109, %p110
    %p113 = scmp.ne.s32.totalorder %s96, %s112
    %p114 = scmp.eq.s32.totalorder %s22, 0
    %p115 = por %p113, %p114
    %s116 = ssub.s32 %s23, %s35
    %p117 = scmp.eq.s32.totalorder %s116, 0
    %s119 = sadd.s32 %s118, 1
    %s120 = scalar_select %p117, %s118, %s119
    %p123 = pneg %p117
    %p124 = scmp.eq.s32.totalorder %s16, 3
    %p125 = por %p123, %p124
    %p126 = scmp.ne.s32.totalorder %s118, %s121
    %p127 = scmp.eq.s32.totalorder %s16, 0
    %p128 = por %p126, %p127
    %p129 = scmp.ne.s32.totalorder %s118, %s121
    %p130 = scmp.eq.s32.totalorder %s21, 3
    %p131 = por %p129, %p130
    %p132 = scmp.ne.s32.totalorder %s121, %s122
    %p133 = scmp.eq.s32.totalorder %s21, 0
    %p134 = por %p132, %p133
    %p135 = scmp.ne.s32.totalorder %s121, %s122
    %p136 = scmp.eq.s32.totalorder %s22, 3
    %p137 = por %p135, %p136
    %p139 = scmp.ne.s32.totalorder %s122, %s138
    %p140 = scmp.eq.s32.totalorder %s22, 0
    %p141 = por %p139, %p140
    %s142 = ssub.s32 %s23, %s35
    %p143 = scmp.eq.s32.totalorder %s142, 0
    %s145 = sadd.s32 %s144, 1
    %s146 = scalar_select %p143, %s144, %s145
    %p149 = pneg %p143
    %p150 = scmp.eq.s32.totalorder %s16, 3
    %p151 = por %p149, %p150
    %p152 = scmp.ne.s32.totalorder %s144, %s147
    %p153 = scmp.eq.s32.totalorder %s16, 0
    %p154 = por %p152, %p153
    %p155 = scmp.ne.s32.totalorder %s144, %s147
    %p156 = scmp.eq.s32.totalorder %s21, 3
    %p157 = por %p155, %p156
    %p158 = scmp.ne.s32.totalorder %s147, %s148
    %p159 = scmp.eq.s32.totalorder %s21, 0
    %p160 = por %p158, %p159
    %p161 = scmp.ne.s32.totalorder %s147, %s148
    %p162 = scmp.eq.s32.totalorder %s22, 3
    %p163 = por %p161, %p162
    %p165 = scmp.ne.s32.totalorder %s148, %s164
    %p166 = scmp.eq.s32.totalorder %s22, 0
    %p167 = por %p165, %p166
    %s168 = ssub.s32 %s23, %s35
    %p169 = scmp.eq.s32.totalorder %s168, 0
    %s171 = sadd.s32 %s170, 1
    %s172 = scalar_select %p169, %s170, %s171
    %p175 = pneg %p169
    %p176 = scmp.eq.s32.totalorder %s16, 3
    %p177 = por %p175, %p176
    %p178 = scmp.ne.s32.totalorder %s170, %s173
    %p179 = scmp.eq.s32.totalorder %s16, 0
    %p180 = por %p178, %p179
    %p181 = scmp.ne.s32.totalorder %s170, %s173
    %p182 = scmp.eq.s32.totalorder %s21, 3
    %p183 = por %p181, %p182
    %p184 = scmp.ne.s32.totalorder %s173, %s174
    %p185 = scmp.eq.s32.totalorder %s21, 0
    %p186 = por %p184, %p185
    %p187 = scmp.ne.s32.totalorder %s173, %s174
    %p188 = scmp.eq.s32.totalorder %s22, 3
    %p189 = por %p187, %p188
    %p191 = scmp.ne.s32.totalorder %s174, %s190
    %p192 = scmp.eq.s32.totalorder %s22, 0
    %p193 = por %p191, %p192
    %s194 = ssub.s32 %s23, %s35
    %p195 = scmp.eq.s32.totalorder %s194, 0
    %s197 = sadd.s32 %s196, 1
    %s198 = scalar_select %p195, %s196, %s197
    %p201 = pneg %p195
    %p202 = scmp.eq.s32.totalorder %s16, 3
    %p203 = por %p201, %p202
    %p204 = scmp.ne.s32.totalorder %s196, %s199
    %p205 = scmp.eq.s32.totalorder %s16, 0
    %p206 = por %p204, %p205
    %p207 = scmp.ne.s32.totalorder %s196, %s199
    %p208 = scmp.eq.s32.totalorder %s21, 3
    %p209 = por %p207, %p208
    %p210 = scmp.ne.s32.totalorder %s199, %s200
    %p211 = scmp.eq.s32.totalorder %s21, 0
    %p212 = por %p210, %p211
    %p213 = scmp.ne.s32.totalorder %s199, %s200
    %p214 = scmp.eq.s32.totalorder %s22, 3
    %p215 = por %p213, %p214
    %p217 = scmp.ne.s32.totalorder %s200, %s216
    %p218 = scmp.eq.s32.totalorder %s22, 0
    %p219 = por %p217, %p218
    %s220 = ssub.s32 %s23, %s35
    %p221 = scmp.eq.s32.totalorder %s220, 0
    %s223 = sadd.s32 %s222, 1
    %s224 = scalar_select %p221, %s222, %s223
    %p227 = pneg %p221
    %p228 = scmp.eq.s32.totalorder %s16, 3
    %p229 = por %p227, %p228
    %p230 = scmp.ne.s32.totalorder %s222, %s225
    %p231 = scmp.eq.s32.totalorder %s16, 0
    %p232 = por %p230, %p231
    %p233 = scmp.ne.s32.totalorder %s222, %s225
    %p234 = scmp.eq.s32.totalorder %s21, 3
    %p235 = por %p233, %p234
    %p236 = scmp.ne.s32.totalorder %s225, %s226
    %p237 = scmp.eq.s32.totalorder %s21, 0
    %p238 = por %p236, %p237
    %p239 = scmp.ne.s32.totalorder %s225, %s226
    %p240 = scmp.eq.s32.totalorder %s22, 3
    %p241 = por %p239, %p240
    %p243 = scmp.ne.s32.totalorder %s226, %s242
    %p244 = scmp.eq.s32.totalorder %s22, 0
    %p245 = por %p243, %p244
    %s246 = ssub.s32 %s23, %s35
    %p247 = scmp.eq.s32.totalorder %s246, 0
    %s249 = sadd.s32 %s248, 1
    %s250 = scalar_select %p247, %s248, %s249
    %p253 = pneg %p247
    %p254 = scmp.eq.s32.totalorder %s16, 3
    %p255 = por %p253, %p254
    %p256 = scmp.ne.s32.totalorder %s248, %s251
    %p257 = scmp.eq.s32.totalorder %s16, 0
    %p258 = por %p256, %p257
    %p259 = scmp.ne.s32.totalorder %s248, %s251
    %p260 = scmp.eq.s32.totalorder %s21, 3
    %p261 = por %p259, %p260
    %p262 = scmp.ne.s32.totalorder %s251, %s252
    %p263 = scmp.eq.s32.totalorder %s21, 0
    %p264 = por %p262, %p263
    %p265 = scmp.ne.s32.totalorder %s251, %s252
    %p266 = scmp.eq.s32.totalorder %s22, 3
    %p267 = por %p265, %p266
    %p269 = scmp.ne.s32.totalorder %s252, %s268
    %p270 = scmp.eq.s32.totalorder %s22, 0
    %p271 = por %p269, %p270
    %s272 = ssub.s32 %s23, %s35
    %p273 = scmp.eq.s32.totalorder %s272, 0
    %s275 = sadd.s32 %s274, 1
    %s276 = scalar_select %p273, %s274, %s275
    %p279 = pneg %p273
    %p280 = scmp.eq.s32.totalorder %s16, 3
    %p281 = por %p279, %p280
    %p282 = scmp.ne.s32.totalorder %s274, %s277
    %p283 = scmp.eq.s32.totalorder %s16, 0
    %p284 = por %p282, %p283
    %p285 = scmp.ne.s32.totalorder %s274, %s277
    %p286 = scmp.eq.s32.totalorder %s21, 3
    %p287 = por %p285, %p286
    %p288 = scmp.ne.s32.totalorder %s277, %s278
    %p289 = scmp.eq.s32.totalorder %s21, 0
    %p290 = por %p288, %p289
    %p291 = scmp.ne.s32.totalorder %s277, %s278
    %p292 = scmp.eq.s32.totalorder %s22, 3
    %p293 = por %p291, %p292
    %p295 = scmp.ne.s32.totalorder %s278, %s294
    %p296 = scmp.eq.s32.totalorder %s22, 0
    %p297 = por %p295, %p296
    %s298 = ssub.s32 %s23, %s35
    %s299 = ssub.s32 %s24, %s31
    %s300 = sor.u32 %s298, %s299
    %p301 = scmp.eq.s32.totalorder %s300, 0
    %s303 = sadd.s32 %s302, 1
    %s304 = scalar_select %p301, %s302, %s303
    %p307 = pneg %p301
    %p308 = scmp.eq.s32.totalorder %s16, 3
    %p309 = por %p307, %p308
    %p310 = scmp.ne.s32.totalorder %s302, %s305
    %p311 = scmp.eq.s32.totalorder %s16, 0
    %p312 = por %p310, %p311
    %p313 = scmp.ne.s32.totalorder %s302, %s305
    %p314 = scmp.eq.s32.totalorder %s21, 3
    %p315 = por %p313, %p314
    %p316 = scmp.ne.s32.totalorder %s305, %s306
    %p317 = scmp.eq.s32.totalorder %s21, 0
    %p318 = por %p316, %p317
    %p319 = scmp.ne.s32.totalorder %s305, %s306
    %p320 = scmp.eq.s32.totalorder %s22, 3
    %p321 = por %p319, %p320
    %p323 = scmp.ne.s32.totalorder %s306, %s322
    %p324 = scmp.eq.s32.totalorder %s22, 0
    %p325 = por %p323, %p324
    %p326 = scmp.le.s32.totalorder 1, %s16
    %p327 = scmp.lt.s32.totalorder %s16, 5
    %p328 = pnand %p326, %p327
    %p329 = pneg %p328
    // Predicated region
    $region9: #{forward_count.28} parent=5 // pred_check
      _
    $region10: #{forward_count.28} parent=5 // pred_check_branch
      %331 = sbr.rel (%p328) target = $region12
    $region11: #{forward_count.28} parent=5 // pred_region
      %s332 = ssub.s32 %s16, 1
    $region12: #{forward_count.28} parent=5 // pred_fallthru
      _
    %p333 = scmp.lt.s32.totalorder %s16, 4
    // Predicated region
    $region13: #{forward_count.28} parent=5 // pred_check
      %p334 = pneg %p333
    $region14: #{forward_count.28} parent=5 // pred_check_branch
      %336 = sbr.rel (%p334) target = $region16
    $region15: #{forward_count.28} parent=5 // pred_region
      // Predicated region
      $region17: #{forward_count.28} parent=15 // pred_check
        %p337 = pneg %p50
      $region18: #{forward_count.28} parent=15 // pred_check_branch
        %339 = sbr.rel (%p337) target = $region20
      $region19: #{forward_count.28} parent=15 // pred_region
        %p340 = scmp.lt.s32.totalorder %s23, 1
        %s341 = scalar_select %p340, %s23, 1
        %p342 = scmp.lt.s32.totalorder %s24, 1
        %s343 = scalar_select %p342, %s24, 1
        %s344 = smul.addr %s343, 3
        %s345 = smul.addr %s341, 6
        %s346 = sadd.s32 %s344, %s345
        %s347 = smul.addr %s346, 4
        %s348 = scalar_lea.vmem %s0, %s347
      $region20: #{forward_count.28} parent=15 // pred_fallthru
        _
      // Predicated region
      $region21: #{forward_count.28} parent=15 // pred_check
        %p349 = pneg %p76
      $region22: #{forward_count.28} parent=15 // pred_check_branch
        %351 = sbr.rel (%p349) target = $region24
      $region23: #{forward_count.28} parent=15 // pred_region
        %p352 = scmp.lt.s32.totalorder %s24, 1
        %s353 = scalar_select %p352, %s24, 1
        %s354 = scalar_lea.vmem %s1, %s353
      $region24: #{forward_count.28} parent=15 // pred_fallthru
        _
      // Predicated region
      $region25: #{forward_count.28} parent=15 // pred_check
        %p355 = pneg %p102
      $region26: #{forward_count.28} parent=15 // pred_check_branch
        %357 = sbr.rel (%p355) target = $region28
      $region27: #{forward_count.28} parent=15 // pred_region
        %p358 = scmp.lt.s32.totalorder %s23, 1
        %s359 = scalar_select %p358, %s23, 1
        %s360 = smul.addr %s359, 4
        %s361 = smul.addr %s360, 4
        %s362 = scalar_lea.vmem %s2, %s361
      $region28: #{forward_count.28} parent=15 // pred_fallthru
        _
      // Predicated region
      $region29: #{forward_count.28} parent=15 // pred_check
        %p363 = pneg %p128
      $region30: #{forward_count.28} parent=15 // pred_check_branch
        %365 = sbr.rel (%p363) target = $region32
      $region31: #{forward_count.28} parent=15 // pred_region
        %p366 = scmp.lt.s32.totalorder %s23, 1
        %s367 = scalar_select %p366, %s23, 1
        %s368 = scalar_lea.vmem %s3, %s367
      $region32: #{forward_count.28} parent=15 // pred_fallthru
        _
      // Predicated region
      $region33: #{forward_count.28} parent=15 // pred_check
        %p369 = pneg %p154
      $region34: #{forward_count.28} parent=15 // pred_check_branch
        %371 = sbr.rel (%p369) target = $region36
      $region35: #{forward_count.28} parent=15 // pred_region
        %p372 = scmp.lt.s32.totalorder %s23, 1
        %s373 = scalar_select %p372, %s23, 1
        %s374 = smul.addr %s373, 4
        %s375 = smul.addr %s374, 4
        %s376 = scalar_lea.vmem %s4, %s375
      $region36: #{forward_count.28} parent=15 // pred_fallthru
        _
      // Predicated region
      $region37: #{forward_count.28} parent=15 // pred_check
        %p377 = pneg %p180
      $region38: #{forward_count.28} parent=15 // pred_check_branch
        %379 = sbr.rel (%p377) target = $region40
      $region39: #{forward_count.28} parent=15 // pred_region
        %p380 = scmp.lt.s32.totalorder %s23, 1
        %s381 = scalar_select %p380, %s23, 1
        %s382 = scalar_lea.vmem %s5, %s381
      $region40: #{forward_count.28} parent=15 // pred_fallthru
        _
      // Predicated region
      $region41: #{forward_count.28} parent=15 // pred_check
        %p383 = pneg %p206
      $region42: #{forward_count.28} parent=15 // pred_check_branch
        %385 = sbr.rel (%p383) target = $region44
      $region43: #{forward_count.28} parent=15 // pred_region
        %p386 = scmp.lt.s32.totalorder %s23, 1
        %s387 = scalar_select %p386, %s23, 1
        %s388 = smul.addr %s387, 4
        %s389 = smul.addr %s388, 4
        %s390 = scalar_lea.vmem %s6, %s389
      $region44: #{forward_count.28} parent=15 // pred_fallthru
        _
      // Predicated region
      $region45: #{forward_count.28} parent=15 // pred_check
        %p391 = pneg %p232
      $region46: #{forward_count.28} parent=15 // pred_check_branch
        %393 = sbr.rel (%p391) target = $region48
      $region47: #{forward_count.28} parent=15 // pred_region
        %p394 = scmp.lt.s32.totalorder %s23, 1
        %s395 = scalar_select %p394, %s23, 1
        %s396 = scalar_lea.vmem %s7, %s395
      $region48: #{forward_count.28} parent=15 // pred_fallthru
        _
      // Predicated region
      $region49: #{forward_count.28} parent=15 // pred_check
        %p397 = pneg %p258
      $region50: #{forward_count.28} parent=15 // pred_check_branch
        %399 = sbr.rel (%p397) target = $region52
      $region51: #{forward_count.28} parent=15 // pred_region
        %p400 = scmp.lt.s32.totalorder %s23, 1
        %s401 = scalar_select %p400, %s23, 1
        %s402 = smul.addr %s401, 4
        %s403 = smul.addr %s402, 4
        %s404 = scalar_lea.vmem %s8, %s403
      $region52: #{forward_count.28} parent=15 // pred_fallthru
        _
      // Predicated region
      $region53: #{forward_count.28} parent=15 // pred_check
        %p405 = pneg %p284
      $region54: #{forward_count.28} parent=15 // pred_check_branch
        %407 = sbr.rel (%p405) target = $region56
      $region55: #{forward_count.28} parent=15 // pred_region
        %p408 = scmp.lt.s32.totalorder %s23, 1
        %s409 = scalar_select %p408, %s23, 1
        %s410 = scalar_lea.vmem %s9, %s409
      $region56: #{forward_count.28} parent=15 // pred_fallthru
        _
    $region16: #{forward_count.28} parent=5 // pred_fallthru
      _
    %p411 = scmp.le.s32.totalorder 1, %s16
    %p412 = scmp.lt.s32.totalorder %s16, 5
    %p413 = pnand %p411, %p412
    %p414 = pneg %p413
    // Predicated region
    $region57: #{forward_count.28} parent=5 // pred_check
      _
    $region58: #{forward_count.28} parent=5 // pred_check_branch
      %416 = sbr.rel (%p413) target = $region60
    $region59: #{forward_count.28} parent=5 // pred_region
      %s417 = ssub.s32 %s16, 1
      %p418 = scmp.lt.s32.totalorder %s25, 1
      %s419 = scalar_select %p418, %s25, 1
      %p420 = scmp.lt.s32.totalorder %s26, 1
      %s421 = scalar_select %p420, %s26, 1
      %s422 = smul.addr %s421, 3
      %s423 = smul.addr %s419, 6
      %s424 = sadd.s32 %s422, %s423
      %s425 = smul.addr %s424, 4
      %s426 = scalar_lea.vmem %s0, %s425
      %p427 = pneg %p56
      %p428 = pneg %p53
      %p429 = scmp.lt.s32.totalorder %s26, 1
      %s430 = scalar_select %p429, %s26, 1
      %s431 = scalar_lea.vmem %s1, %s430
      %p432 = pneg %p82
      %p433 = pneg %p79
      %p434 = scmp.lt.s32.totalorder %s25, 1
      %s435 = scalar_select %p434, %s25, 1
      %s436 = smul.addr %s435, 4
      %s437 = smul.addr %s436, 4
      %s438 = scalar_lea.vmem %s2, %s437
      %p439 = pneg %p108
      %p440 = pneg %p105
      %p441 = scmp.lt.s32.totalorder %s25, 1
      %s442 = scalar_select %p441, %s25, 1
      %s443 = scalar_lea.vmem %s3, %s442
      %p444 = pneg %p134
      %p445 = pneg %p131
      %p446 = scmp.lt.s32.totalorder %s25, 1
      %s447 = scalar_select %p446, %s25, 1
      %s448 = smul.addr %s447, 4
      %s449 = smul.addr %s448, 4
      %s450 = scalar_lea.vmem %s4, %s449
      %p451 = pneg %p160
      %p452 = pneg %p157
      %p453 = scmp.lt.s32.totalorder %s25, 1
      %s454 = scalar_select %p453, %s25, 1
      %s455 = scalar_lea.vmem %s5, %s454
      %p456 = pneg %p186
      %p457 = pneg %p183
      %p458 = scmp.lt.s32.totalorder %s25, 1
      %s459 = scalar_select %p458, %s25, 1
      %s460 = smul.addr %s459, 4
      %s461 = smul.addr %s460, 4
      %s462 = scalar_lea.vmem %s6, %s461
      %p463 = pneg %p212
      %p464 = pneg %p209
      %p465 = scmp.lt.s32.totalorder %s25, 1
      %s466 = scalar_select %p465, %s25, 1
      %s467 = scalar_lea.vmem %s7, %s466
      %p468 = pneg %p238
      %p469 = pneg %p235
      %p470 = scmp.lt.s32.totalorder %s25, 1
      %s471 = scalar_select %p470, %s25, 1
      %s472 = smul.addr %s471, 4
      %s473 = smul.addr %s472, 4
      %s474 = scalar_lea.vmem %s8, %s473
      %p475 = pneg %p264
      %p476 = pneg %p261
      %p477 = scmp.lt.s32.totalorder %s25, 1
      %s478 = scalar_select %p477, %s25, 1
      %s479 = scalar_lea.vmem %s9, %s478
      %p480 = pneg %p290
      %p481 = pneg %p287
      %p482 = pneg %p318
      %p483 = pneg %p315
      %p484 = scmp.lt.s32.totalorder %s25, 1
      %s485 = scalar_select %p484, %s25, 1
      %p486 = scmp.lt.s32.totalorder %s26, 1
      %s487 = scalar_select %p486, %s26, 1
      %s488 = smul.addr %s487, 3
      %s489 = smul.addr %s485, 6
      %s490 = sadd.s32 %s488, %s489
      %s491 = smul.addr %s490, 4
      %s492 = scalar_lea.vmem %s10, %s491
      %p493 = scmp.lt.s32.totalorder %s25, 1
      %s494 = scalar_select %p493, %s25, 1
      %p495 = scmp.lt.s32.totalorder %s26, 1
      %s496 = scalar_select %p495, %s26, 1
      %s497 = smul.addr %s496, 3
      %s498 = smul.addr %s494, 6
      %s499 = sadd.s32 %s497, %s498
      %s500 = smul.addr %s499, 4
      %s501 = scalar_lea.vmem %s0, %s500
      %p502 = scmp.lt.s32.totalorder %s26, 1
      %s503 = scalar_select %p502, %s26, 1
      %s504 = scalar_lea.vmem %s1, %s503
      %p505 = scmp.lt.s32.totalorder %s25, 1
      %s506 = scalar_select %p505, %s25, 1
      %s507 = smul.addr %s506, 4
      %s508 = smul.addr %s507, 4
      %s509 = scalar_lea.vmem %s2, %s508
      %p510 = scmp.lt.s32.totalorder %s25, 1
      %s511 = scalar_select %p510, %s25, 1
      %s512 = scalar_lea.vmem %s3, %s511
      %p513 = scmp.lt.s32.totalorder %s25, 1
      %s514 = scalar_select %p513, %s25, 1
      %s515 = smul.addr %s514, 4
      %s516 = smul.addr %s515, 4
      %s517 = scalar_lea.vmem %s4, %s516
      %p518 = scmp.lt.s32.totalorder %s25, 1
      %s519 = scalar_select %p518, %s25, 1
      %s520 = scalar_lea.vmem %s5, %s519
      %p521 = scmp.lt.s32.totalorder %s25, 1
      %s522 = scalar_select %p521, %s25, 1
      %s523 = smul.addr %s522, 4
      %s524 = smul.addr %s523, 4
      %s525 = scalar_lea.vmem %s6, %s524
      %p526 = scmp.lt.s32.totalorder %s25, 1
      %s527 = scalar_select %p526, %s25, 1
      %s528 = scalar_lea.vmem %s7, %s527
      %p529 = scmp.lt.s32.totalorder %s25, 1
      %s530 = scalar_select %p529, %s25, 1
      %s531 = smul.addr %s530, 4
      %s532 = smul.addr %s531, 4
      %s533 = scalar_lea.vmem %s8, %s532
      %p534 = scmp.lt.s32.totalorder %s25, 1
      %s535 = scalar_select %p534, %s25, 1
      %s536 = scalar_lea.vmem %s9, %s535
      %p537 = scmp.lt.s32.totalorder %s25, 1
      %s538 = scalar_select %p537, %s25, 1
      %p539 = scmp.lt.s32.totalorder %s26, 1
      %s540 = scalar_select %p539, %s26, 1
      %s541 = smul.addr %s540, 3
      %s542 = smul.addr %s538, 6
      %s543 = sadd.s32 %s541, %s542
      %s544 = smul.addr %s543, 4
      %s545 = scalar_lea.vmem %s10, %s544
      %v547 = vld [vmem:[%s501] sm:$0xf]
      %v548 = vld [vmem:[%s501 + $0x4] sm:$0xf]
      %v549 = vld [vmem:[%s501 + $0x8] sm:$0xf]
      %v550 = vld [vmem:[%s504] sm:$0x1]
      %v551 = vld [vmem:[%s509] sm:$0xf]
      %v552 = vld [vmem:[%s509 + $0x4] sm:$0xf]
      %v553 = vld [vmem:[%s509 + $0x8] sm:$0xf]
      %v554 = vld [vmem:[%s509 + $0xc] sm:$0xf]
      %v555 = vld [vmem:[%s512] sm:$0x1]
      %v557 = vlaneseq
      %v558 = vshrl.u32 %v557, 7
      %v559 = vsub.s32 0, %v558
      %v560 = vrot.slane %v555, %v559
      %v565 = vunpack.c.l.b16 %v547
      %v566 = vunpack.c.l.b16 %v548
      %v567 = vunpack.c.l.b16 %v549
      %v568 = vpack.c.b16 %v566, %v565
      %v569 = vpack.c.b16 %v567, %v567
      %v574 = vunpack.c.l.b16 %v551
      %v575 = vunpack.c.l.b16 %v552
      %v576 = vunpack.c.l.b16 %v553
      %v577 = vunpack.c.l.b16 %v554
      %v578 = vpack.c.b16 %v575, %v574
      %v579 = vpack.c.b16 %v577, %v576
      %vm582 = vcmask 261120
      %v584 = vsel %vm582, %v568, 0
      %v587 = vsel %vm582, %v569, 0
      %589 = vmatprep.subr.bf16.mxu0 0
      %590 = vmatpush1.bf16.msra.mxu0 %v578
      %591 = vmatprep.subr.bf16.mxu0 0
      %592 = vmatpush1.bf16.msra.mxu0 %v579
      %593 = vmatprep.subr.bf16.mxu0 0
      %594 = vmatpush1.bf16.msra.mxu0 0
      %595 = vmatprep.subr.bf16.mxu0 0
      %596 = vmatpush1.bf16.msra.mxu0 0
      %597 = vmatprep.subr.bf16.mxu0 0
      %598 = vmatpush1.bf16.msra.mxu0 0
      %599 = vmatprep.subr.bf16.mxu0 0
      %600 = vmatpush1.bf16.msra.mxu0 0
      %601 = vmatprep.subr.bf16.mxu0 0
      %602 = vmatpush1.bf16.msra.mxu0 0
      %603 = vmatprep.subr.bf16.mxu0 0
      %604 = vmatpush1.bf16.msra.mxu0 0
      %605 = vmatprep.subr.bf16.mxu0 0
      %606 = vmatpush1.bf16.msra.mxu0 0
      %607 = vmatprep.subr.bf16.mxu0 0
      %608 = vmatpush1.bf16.msra.mxu0 0
      %609 = vmatprep.subr.bf16.mxu0 0
      %610 = vmatpush1.bf16.msra.mxu0 0
      %611 = vmatprep.subr.bf16.mxu0 0
      %612 = vmatpush1.bf16.msra.mxu0 0
      %613 = vmatprep.subr.bf16.mxu0 0
      %614 = vmatpush1.bf16.msra.mxu0 0
      %615 = vmatprep.subr.bf16.mxu0 0
      %616 = vmatpush1.bf16.msra.mxu0 0
      %617 = vmatprep.subr.bf16.mxu0 0
      %618 = vmatpush1.bf16.msra.mxu0 0
      %619 = vmatprep.subr.bf16.mxu0 0
      %620 = vmatpush1.bf16.msra.mxu0 0
      %621 = vmatprep.mubr.bf16.mxu0 0
      %622 = vmatmul.mubr.bf16.gmra.mrb[0].mxu0 %v584
      %v623 = vpop.f32.mrb[0].mxu0
      %v624 = vadd.f32 %v560, %v623
      %v625 = vpop.f32.mrb[0].mxu0
      %v626 = vpop.f32.mrb[0].mxu0
      %v627 = vadd.f32 %v560, %v626
      %v628 = vpop.f32.mrb[0].mxu0
      %629 = vmatprep.mubr.bf16.mxu0 0
      %630 = vmatmul.mubr.bf16.gmra.mrb[0].mxu0 %v587
      %v631 = vpop.f32.mrb[0].mxu0
      %v632 = vadd.f32 %v560, %v631
      %v633 = vpop.f32.mrb[0].mxu0
      %v634 = vpop.f32.mrb[0].mxu0
      %v635 = vpop.f32.mrb[0].mxu0
      %636 = vdwg.mxu0
      %v637 = vmax.f32 %v624, 0.0
      %v638 = vmax.f32 %v627, 0.0
      %v639 = vmax.f32 %v632, 0.0
      %v640 = vpack.c.bf16 %v638, %v637
      %v641 = vpack.c.bf16 %v639, %v639
      %v642 = vld [vmem:[%s517] sm:$0xf]
      %v643 = vld [vmem:[%s517 + $0x4] sm:$0xf]
      %v644 = vld [vmem:[%s517 + $0x8] sm:$0xf]
      %v645 = vld [vmem:[%s517 + $0xc] sm:$0xf]
      %v646 = vld [vmem:[%s520] sm:$0x1]
      %v648 = vlaneseq
      %v649 = vshrl.u32 %v648, 7
      %v650 = vsub.s32 0, %v649
      %v651 = vrot.slane %v646, %v650
      %v657 = vunpack.c.l.b16 %v642
      %v658 = vunpack.c.l.b16 %v643
      %v659 = vunpack.c.l.b16 %v644
      %v660 = vunpack.c.l.b16 %v645
      %v661 = vpack.c.b16 %v658, %v657
      %v662 = vpack.c.b16 %v660, %v659
      %v666 = vsel %vm582, %v640, 0
      %v669 = vsel %vm582, %v641, 0
      %671 = vmatprep.subr.bf16.mxu0 0
      %672 = vmatpush1.bf16.msra.mxu0 %v661
      %673 = vmatprep.subr.bf16.mxu0 0
      %674 = vmatpush1.bf16.msra.mxu0 %v662
      %675 = vmatprep.subr.bf16.mxu0 0
      %676 = vmatpush1.bf16.msra.mxu0 0
      %677 = vmatprep.subr.bf16.mxu0 0
      %678 = vmatpush1.bf16.msra.mxu0 0
      %679 = vmatprep.subr.bf16.mxu0 0
      %680 = vmatpush1.bf16.msra.mxu0 0
      %681 = vmatprep.subr.bf16.mxu0 0
      %682 = vmatpush1.bf16.msra.mxu0 0
      %683 = vmatprep.subr.bf16.mxu0 0
      %684 = vmatpush1.bf16.msra.mxu0 0
      %685 = vmatprep.subr.bf16.mxu0 0
      %686 = vmatpush1.bf16.msra.mxu0 0
      %687 = vmatprep.subr.bf16.mxu0 0
      %688 = vmatpush1.bf16.msra.mxu0 0
      %689 = vmatprep.subr.bf16.mxu0 0
      %690 = vmatpush1.bf16.msra.mxu0 0
      %691 = vmatprep.subr.bf16.mxu0 0
      %692 = vmatpush1.bf16.msra.mxu0 0
      %693 = vmatprep.subr.bf16.mxu0 0
      %694 = vmatpush1.bf16.msra.mxu0 0
      %695 = vmatprep.subr.bf16.mxu0 0
      %696 = vmatpush1.bf16.msra.mxu0 0
      %697 = vmatprep.subr.bf16.mxu0 0
      %698 = vmatpush1.bf16.msra.mxu0 0
      %699 = vmatprep.subr.bf16.mxu0 0
      %700 = vmatpush1.bf16.msra.mxu0 0
      %701 = vmatprep.subr.bf16.mxu0 0
      %702 = vmatpush1.bf16.msra.mxu0 0
      %703 = vmatprep.mubr.bf16.mxu0 0
      %704 = vmatmul.mubr.bf16.gmra.mrb[0].mxu0 %v666
      %v705 = vpop.f32.mrb[0].mxu0
      %v706 = vadd.f32 %v651, %v705
      %v707 = vpop.f32.mrb[0].mxu0
      %v708 = vpop.f32.mrb[0].mxu0
      %v709 = vadd.f32 %v651, %v708
      %v710 = vpop.f32.mrb[0].mxu0
      %711 = vmatprep.mubr.bf16.mxu0 0
      %712 = vmatmul.mubr.bf16.gmra.mrb[0].mxu0 %v669
      %v713 = vpop.f32.mrb[0].mxu0
      %v714 = vadd.f32 %v651, %v713
      %v715 = vpop.f32.mrb[0].mxu0
      %v716 = vpop.f32.mrb[0].mxu0
      %v717 = vpop.f32.mrb[0].mxu0
      %718 = vdwg.mxu0
      %v719 = vmax.f32 %v706, 0.0
      %v720 = vmax.f32 %v709, 0.0
      %v721 = vmax.f32 %v714, 0.0
      %v722 = vpack.c.bf16 %v720, %v719
      %v723 = vpack.c.bf16 %v721, %v721
      %v725 = vlaneseq
      %v726 = vshrl.u32 %v725, 7
      %v727 = vsub.s32 0, %v726
      %v728 = vrot.slane %v550, %v727
      %v731 = vsel %vm582, %v722, 0
      %v734 = vsel %vm582, %v723, 0
      %736 = vmatprep.subr.bf16.mxu0 0
      %737 = vmatpush1.bf16.xpose.msra.mxu0 %v731
      %738 = vmatprep.subr.bf16.mxu0 0
      %739 = vmatpush1.bf16.xpose.msra.mxu0 %v734
      %740 = vmatprep.subr.bf16.mxu0 0
      %741 = vmatpush1.bf16.xpose.msra.mxu0 0
      %742 = vmatprep.subr.bf16.mxu0 0
      %743 = vmatpush1.bf16.xpose.msra.mxu0 0
      %744 = vmatprep.subr.bf16.mxu0 0
      %745 = vmatpush1.bf16.xpose.msra.mxu0 0
      %746 = vmatprep.subr.bf16.mxu0 0
      %747 = vmatpush1.bf16.xpose.msra.mxu0 0
      %748 = vmatprep.subr.bf16.mxu0 0
      %749 = vmatpush1.bf16.xpose.msra.mxu0 0
      %750 = vmatprep.subr.bf16.mxu0 0
      %751 = vmatpush1.bf16.xpose.msra.mxu0 0
      %752 = vmatprep.subr.bf16.mxu0 0
      %753 = vmatpush1.bf16.xpose.msra.mxu0 0
      %754 = vmatprep.subr.bf16.mxu0 0
      %755 = vmatpush1.bf16.xpose.msra.mxu0 0
      %756 = vmatprep.subr.bf16.mxu0 0
      %757 = vmatpush1.bf16.xpose.msra.mxu0 0
      %758 = vmatprep.subr.bf16.mxu0 0
      %759 = vmatpush1.bf16.xpose.msra.mxu0 0
      %760 = vmatprep.subr.bf16.mxu0 0
      %761 = vmatpush1.bf16.xpose.msra.mxu0 0
      %762 = vmatprep.subr.bf16.mxu0 0
      %763 = vmatpush1.bf16.xpose.msra.mxu0 0
      %764 = vmatprep.subr.bf16.mxu0 0
      %765 = vmatpush1.bf16.xpose.msra.mxu0 0
      %766 = vmatprep.subr.bf16.mxu0 0
      %767 = vmatpush1.bf16.xpose.msra.mxu0 0
      %768 = vmatprep.mubr.bf16.mxu0 0
      %769 = vmatmul.mubr.bf16.gmra.mrb[0].mxu0 %v731
      %v770 = vpop.f32.mrb[0].mxu0
      %v771 = vadd.f32 %v728, %v770
      %v772 = vpop.f32.mrb[0].mxu0
      %v773 = vpop.f32.mrb[0].mxu0
      %v774 = vadd.f32 %v728, %v773
      %v775 = vpop.f32.mrb[0].mxu0
      %776 = vmatprep.mubr.bf16.mxu0 0
      %777 = vmatmul.mubr.bf16.gmra.mrb[0].mxu0 %v734
      %v778 = vpop.f32.mrb[0].mxu0
      %v779 = vadd.f32 %v728, %v778
      %v780 = vpop.f32.mrb[0].mxu0
      %v781 = vpop.f32.mrb[0].mxu0
      %v782 = vpop.f32.mrb[0].mxu0
      %783 = vdwg.mxu0
      %vm784 = vcmask 195584
      %v785 = vsel %vm784, %v771, -inf
      %786 = vmax.xlane.f32.xlu0 %v785
      %v787 = vpop.xlane.xlu0 %786
      %v788 = vsel %vm784, %v774, -inf
      %789 = vmax.xlane.f32.xlu0 %v788
      %v790 = vpop.xlane.xlu0 %789
      %v791 = vsel %vm784, %v779, -inf
      %792 = vmax.xlane.f32.xlu0 %v791
      %v793 = vpop.xlane.xlu0 %792
      %v794 = vsub.f32 %v771, %v787
      %v795 = vsub.f32 %v774, %v790
      %v796 = vsub.f32 %v779, %v793
      %v797 = vmul.f32 %v794, 1.442695
      %v798 = vpow.pop %v797
      %v799 = vmul.f32 %v795, 1.442695
      %v800 = vpow.pop %v799
      %v801 = vmul.f32 %v796, 1.442695
      %v802 = vpow.pop %v801
      %v803 = vsel %vm784, %v798, 0.0
      %804 = vadd.xlane.f32.xlu0 %v803
      %v805 = vpop.xlane.xlu0 %804
      %v806 = vsel %vm784, %v800, 0.0
      %807 = vadd.xlane.f32.xlu0 %v806
      %v808 = vpop.xlane.xlu0 %807
      %v809 = vsel %vm784, %v802, 0.0
      %810 = vadd.xlane.f32.xlu0 %v809
      %v811 = vpop.xlane.xlu0 %810
      %v812 = vrcp.pop %v805
      %v813 = vrcp.pop %v808
      %v814 = vrcp.pop %v811
      %v815 = vmul.f32 %v798, %v812
      %v816 = vmul.f32 %v800, %v813
      %v817 = vmul.f32 %v802, %v814
      %v818 = vpack.c.bf16 %v816, %v815
      %v819 = vpack.c.bf16 %v817, %v817
      %v820 = vld [vmem:[%s525] sm:$0xf]
      %v821 = vld [vmem:[%s525 + $0x4] sm:$0xf]
      %v822 = vld [vmem:[%s525 + $0x8] sm:$0xf]
      %v823 = vld [vmem:[%s525 + $0xc] sm:$0xf]
      %v824 = vld [vmem:[%s528] sm:$0x1]
      %v826 = vlaneseq
      %v827 = vshrl.u32 %v826, 7
      %v828 = vsub.s32 0, %v827
      %v829 = vrot.slane %v824, %v828
      %v835 = vunpack.c.l.b16 %v820
      %v836 = vunpack.c.l.b16 %v821
      %v837 = vunpack.c.l.b16 %v822
      %v838 = vunpack.c.l.b16 %v823
      %v839 = vpack.c.b16 %v836, %v835
      %v840 = vpack.c.b16 %v838, %v837
      %843 = vmatprep.subr.bf16.mxu0 0
      %844 = vmatpush1.bf16.msra.mxu0 %v839
      %845 = vmatprep.subr.bf16.mxu0 0
      %846 = vmatpush1.bf16.msra.mxu0 %v840
      %847 = vmatprep.subr.bf16.mxu0 0
      %848 = vmatpush1.bf16.msra.mxu0 0
      %849 = vmatprep.subr.bf16.mxu0 0
      %850 = vmatpush1.bf16.msra.mxu0 0
      %851 = vmatprep.subr.bf16.mxu0 0
      %852 = vmatpush1.bf16.msra.mxu0 0
      %853 = vmatprep.subr.bf16.mxu0 0
      %854 = vmatpush1.bf16.msra.mxu0 0
      %855 = vmatprep.subr.bf16.mxu0 0
      %856 = vmatpush1.bf16.msra.mxu0 0
      %857 = vmatprep.subr.bf16.mxu0 0
      %858 = vmatpush1.bf16.msra.mxu0 0
      %859 = vmatprep.subr.bf16.mxu0 0
      %860 = vmatpush1.bf16.msra.mxu0 0
      %861 = vmatprep.subr.bf16.mxu0 0
      %862 = vmatpush1.bf16.msra.mxu0 0
      %863 = vmatprep.subr.bf16.mxu0 0
      %864 = vmatpush1.bf16.msra.mxu0 0
      %865 = vmatprep.subr.bf16.mxu0 0
      %866 = vmatpush1.bf16.msra.mxu0 0
      %867 = vmatprep.subr.bf16.mxu0 0
      %868 = vmatpush1.bf16.msra.mxu0 0
      %869 = vmatprep.subr.bf16.mxu0 0
      %870 = vmatpush1.bf16.msra.mxu0 0
      %871 = vmatprep.subr.bf16.mxu0 0
      %872 = vmatpush1.bf16.msra.mxu0 0
      %873 = vmatprep.subr.bf16.mxu0 0
      %874 = vmatpush1.bf16.msra.mxu0 0
      %875 = vmatprep.mubr.bf16.mxu0 0
      %876 = vmatmul.mubr.bf16.gmra.mrb[0].mxu0 %v584
      %v877 = vpop.f32.mrb[0].mxu0
      %v878 = vadd.f32 %v829, %v877
      %v879 = vpop.f32.mrb[0].mxu0
      %v880 = vpop.f32.mrb[0].mxu0
      %v881 = vadd.f32 %v829, %v880
      %v882 = vpop.f32.mrb[0].mxu0
      %883 = vmatprep.mubr.bf16.mxu0 0
      %884 = vmatmul.mubr.bf16.gmra.mrb[0].mxu0 %v587
      %v885 = vpop.f32.mrb[0].mxu0
      %v886 = vadd.f32 %v829, %v885
      %v887 = vpop.f32.mrb[0].mxu0
      %v888 = vpop.f32.mrb[0].mxu0
      %v889 = vpop.f32.mrb[0].mxu0
      %890 = vdwg.mxu0
      %v891 = vpack.c.bf16 %v881, %v878
      %v892 = vpack.c.bf16 %v886, %v886
      %v894 = vsel %vm784, %v818, 0
      %v897 = vsel %vm784, %v819, 0
      %vm899 = vcmask 1043456
      %v901 = vsel %vm899, %v892, 0
      %903 = vmatprep.subr.bf16.mxu0 0
      %904 = vmatpush1.bf16.msra.mxu0 %v891
      %905 = vmatprep.subr.bf16.mxu0 0
      %906 = vmatpush1.bf16.msra.mxu0 %v901
      %907 = vmatprep.subr.bf16.mxu0 0
      %908 = vmatpush1.bf16.msra.mxu0 0
      %909 = vmatprep.subr.bf16.mxu0 0
      %910 = vmatpush1.bf16.msra.mxu0 0
      %911 = vmatprep.subr.bf16.mxu0 0
      %912 = vmatpush1.bf16.msra.mxu0 0
      %913 = vmatprep.subr.bf16.mxu0 0
      %914 = vmatpush1.bf16.msra.mxu0 0
      %915 = vmatprep.subr.bf16.mxu0 0
      %916 = vmatpush1.bf16.msra.mxu0 0
      %917 = vmatprep.subr.bf16.mxu0 0
      %918 = vmatpush1.bf16.msra.mxu0 0
      %919 = vmatprep.subr.bf16.mxu0 0
      %920 = vmatpush1.bf16.msra.mxu0 0
      %921 = vmatprep.subr.bf16.mxu0 0
      %922 = vmatpush1.bf16.msra.mxu0 0
      %923 = vmatprep.subr.bf16.mxu0 0
      %924 = vmatpush1.bf16.msra.mxu0 0
      %925 = vmatprep.subr.bf16.mxu0 0
      %926 = vmatpush1.bf16.msra.mxu0 0
      %927 = vmatprep.subr.bf16.mxu0 0
      %928 = vmatpush1.bf16.msra.mxu0 0
      %929 = vmatprep.subr.bf16.mxu0 0
      %930 = vmatpush1.bf16.msra.mxu0 0
      %931 = vmatprep.subr.bf16.mxu0 0
      %932 = vmatpush1.bf16.msra.mxu0 0
      %933 = vmatprep.subr.bf16.mxu0 0
      %934 = vmatpush1.bf16.msra.mxu0 0
      %935 = vmatprep.mubr.bf16.mxu0 0
      %936 = vmatmul.mubr.bf16.gmra.mrb[0].mxu0 %v894
      %v937 = vpop.f32.mrb[0].mxu0
      %v938 = vadd.f32 0.0, %v937
      %v939 = vpop.f32.mrb[0].mxu0
      %v940 = vpop.f32.mrb[0].mxu0
      %v941 = vadd.f32 0.0, %v940
      %v942 = vpop.f32.mrb[0].mxu0
      %943 = vmatprep.mubr.bf16.mxu0 0
      %944 = vmatmul.mubr.bf16.gmra.mrb[0].mxu0 %v897
      %v945 = vpop.f32.mrb[0].mxu0
      %v946 = vadd.f32 0.0, %v945
      %v947 = vpop.f32.mrb[0].mxu0
      %v948 = vpop.f32.mrb[0].mxu0
      %v949 = vpop.f32.mrb[0].mxu0
      %950 = vdwg.mxu0
      %v951 = vmax.f32 %v938, 0.0
      %v952 = vmax.f32 %v941, 0.0
      %v953 = vmax.f32 %v946, 0.0
      %v954 = vpack.c.bf16 %v952, %v951
      %v955 = vpack.c.bf16 %v953, %v953
      %v956 = vld [vmem:[%s533] sm:$0xf]
      %v957 = vld [vmem:[%s533 + $0x4] sm:$0xf]
      %v958 = vld [vmem:[%s533 + $0x8] sm:$0xf]
      %v959 = vld [vmem:[%s533 + $0xc] sm:$0xf]
      %v960 = vld [vmem:[%s536] sm:$0x1]
      %v962 = vlaneseq
      %v963 = vshrl.u32 %v962, 7
      %v964 = vsub.s32 0, %v963
      %v965 = vrot.slane %v960, %v964
      %v971 = vunpack.c.l.b16 %v956
      %v972 = vunpack.c.l.b16 %v957
      %v973 = vunpack.c.l.b16 %v958
      %v974 = vunpack.c.l.b16 %v959
      %v975 = vpack.c.b16 %v972, %v971
      %v976 = vpack.c.b16 %v974, %v973
      %v980 = vsel %vm582, %v954, 0
      %v983 = vsel %vm582, %v955, 0
      %985 = vmatprep.subr.bf16.mxu0 0
      %986 = vmatpush1.bf16.msra.mxu0 %v975
      %987 = vmatprep.subr.bf16.mxu0 0
      %988 = vmatpush1.bf16.msra.mxu0 %v976
      %989 = vmatprep.subr.bf16.mxu0 0
      %990 = vmatpush1.bf16.msra.mxu0 0
      %991 = vmatprep.subr.bf16.mxu0 0
      %992 = vmatpush1.bf16.msra.mxu0 0
      %993 = vmatprep.subr.bf16.mxu0 0
      %994 = vmatpush1.bf16.msra.mxu0 0
      %995 = vmatprep.subr.bf16.mxu0 0
      %996 = vmatpush1.bf16.msra.mxu0 0
      %997 = vmatprep.subr.bf16.mxu0 0
      %998 = vmatpush1.bf16.msra.mxu0 0
      %999 = vmatprep.subr.bf16.mxu0 0
      %1000 = vmatpush1.bf16.msra.mxu0 0
      %1001 = vmatprep.subr.bf16.mxu0 0
      %1002 = vmatpush1.bf16.msra.mxu0 0
      %1003 = vmatprep.subr.bf16.mxu0 0
      %1004 = vmatpush1.bf16.msra.mxu0 0
      %1005 = vmatprep.subr.bf16.mxu0 0
      %1006 = vmatpush1.bf16.msra.mxu0 0
      %1007 = vmatprep.subr.bf16.mxu0 0
      %1008 = vmatpush1.bf16.msra.mxu0 0
      %1009 = vmatprep.subr.bf16.mxu0 0
      %1010 = vmatpush1.bf16.msra.mxu0 0
      %1011 = vmatprep.subr.bf16.mxu0 0
      %1012 = vmatpush1.bf16.msra.mxu0 0
      %1013 = vmatprep.subr.bf16.mxu0 0
      %1014 = vmatpush1.bf16.msra.mxu0 0
      %1015 = vmatprep.subr.bf16.mxu0 0
      %1016 = vmatpush1.bf16.msra.mxu0 0
      %1017 = vmatprep.mubr.bf16.mxu0 0
      %1018 = vmatmul.mubr.bf16.gmra.mrb[0].mxu0 %v980
      %v1019 = vpop.f32.mrb[0].mxu0
      %v1020 = vadd.f32 %v965, %v1019
      %v1021 = vpop.f32.mrb[0].mxu0
      %v1022 = vpop.f32.mrb[0].mxu0
      %v1023 = vadd.f32 %v965, %v1022
      %v1024 = vpop.f32.mrb[0].mxu0
      %1025 = vmatprep.mubr.bf16.mxu0 0
      %1026 = vmatmul.mubr.bf16.gmra.mrb[0].mxu0 %v983
      %v1027 = vpop.f32.mrb[0].mxu0
      %v1028 = vadd.f32 %v965, %v1027
      %v1029 = vpop.f32.mrb[0].mxu0
      %v1030 = vpop.f32.mrb[0].mxu0
      %v1031 = vpop.f32.mrb[0].mxu0
      %1032 = vdwg.mxu0
      %v1033 = vpack.c.bf16 %v1023, %v1020
      %v1034 = vpack.c.bf16 %v1028, %v1028
      %v1036 = vsel %vm899, %v1034, 0
      %1038 = vmatprep.subr.bf16.mxu0 0
      %1039 = vmatpush1.bf16.msra.mxu0 %v1033
      %1040 = vmatprep.subr.bf16.mxu0 0
      %1041 = vmatpush1.bf16.msra.mxu0 %v1036
      %1042 = vmatprep.subr.bf16.mxu0 0
      %1043 = vmatpush1.bf16.msra.mxu0 0
      %1044 = vmatprep.subr.bf16.mxu0 0
      %1045 = vmatpush1.bf16.msra.mxu0 0
      %1046 = vmatprep.subr.bf16.mxu0 0
      %1047 = vmatpush1.bf16.msra.mxu0 0
      %1048 = vmatprep.subr.bf16.mxu0 0
      %1049 = vmatpush1.bf16.msra.mxu0 0
      %1050 = vmatprep.subr.bf16.mxu0 0
      %1051 = vmatpush1.bf16.msra.mxu0 0
      %1052 = vmatprep.subr.bf16.mxu0 0
      %1053 = vmatpush1.bf16.msra.mxu0 0
      %1054 = vmatprep.subr.bf16.mxu0 0
      %1055 = vmatpush1.bf16.msra.mxu0 0
      %1056 = vmatprep.subr.bf16.mxu0 0
      %1057 = vmatpush1.bf16.msra.mxu0 0
      %1058 = vmatprep.subr.bf16.mxu0 0
      %1059 = vmatpush1.bf16.msra.mxu0 0
      %1060 = vmatprep.subr.bf16.mxu0 0
      %1061 = vmatpush1.bf16.msra.mxu0 0
      %1062 = vmatprep.subr.bf16.mxu0 0
      %1063 = vmatpush1.bf16.msra.mxu0 0
      %1064 = vmatprep.subr.bf16.mxu0 0
      %1065 = vmatpush1.bf16.msra.mxu0 0
      %1066 = vmatprep.subr.bf16.mxu0 0
      %1067 = vmatpush1.bf16.msra.mxu0 0
      %1068 = vmatprep.subr.bf16.mxu0 0
      %1069 = vmatpush1.bf16.msra.mxu0 0
      %1070 = vmatprep.mubr.bf16.mxu0 0
      %1071 = vmatmul.mubr.bf16.gmra.mrb[0].mxu0 %v894
      %v1072 = vpop.f32.mrb[0].mxu0
      %v1073 = vadd.f32 0.0, %v1072
      %v1074 = vpop.f32.mrb[0].mxu0
      %v1075 = vpop.f32.mrb[0].mxu0
      %v1076 = vadd.f32 0.0, %v1075
      %v1077 = vpop.f32.mrb[0].mxu0
      %1078 = vmatprep.mubr.bf16.mxu0 0
      %1079 = vmatmul.mubr.bf16.gmra.mrb[0].mxu0 %v897
      %v1080 = vpop.f32.mrb[0].mxu0
      %v1081 = vadd.f32 0.0, %v1080
      %v1082 = vpop.f32.mrb[0].mxu0
      %v1083 = vpop.f32.mrb[0].mxu0
      %v1084 = vpop.f32.mrb[0].mxu0
      %1085 = vdwg.mxu0
      %v1086 = vmax.f32 %v1073, 0.0
      %v1087 = vmax.f32 %v1076, 0.0
      %v1088 = vmax.f32 %v1081, 0.0
      %v1089 = vpack.c.bf16 %v1087, %v1086
      %v1090 = vpack.c.bf16 %v1088, %v1088
      %v1093 = vunpack.c.l.b16 %v1089
      %v1094 = vunpack.c.h.b16 %v1089
      %v1095 = vunpack.c.l.b16 %v1090
      %v1096 = vpack.c.b16 %v1093, %v1093
      %v1097 = vpack.c.b16 %v1094, %v1094
      %v1098 = vpack.c.b16 %v1095, %v1095
      %vm1102 = vcmask 257024
      %1103 = vst.msk [vmem:[%s545] sm:$0xf] %vm1102, %v1096
      %1104 = vst.msk [vmem:[%s545 + $0x4] sm:$0xf] %vm1102, %v1097
      %1105 = vst.msk [vmem:[%s545 + $0x8] sm:$0xf] %vm1102, %v1098
      %p1106 = scmp.lt.s32.totalorder %s25, 1
      %s1107 = scalar_select %p1106, %s25, 1
      %p1108 = scmp.lt.s32.totalorder %s26, 1
      %s1109 = scalar_select %p1108, %s26, 1
      %s1110 = smul.addr %s1109, 3
      %s1111 = smul.addr %s1107, 6
      %s1112 = sadd.s32 %s1110, %s1111
      %s1113 = smul.addr %s1112, 4
      %s1114 = scalar_lea.vmem %s10, %s1113
      // Predicated region
      $region61: #{forward_count.28} parent=59 // pred_check
        %p1115 = pneg %p315
      $region62: #{forward_count.28} parent=59 // pred_check_branch
        %1117 = sbr.rel (%p1115) target = $region64
      $region63: #{forward_count.28} parent=59 // pred_region
        _
      $region64: #{forward_count.28} parent=59 // pred_fallthru
        _
    $region60: #{forward_count.28} parent=5 // pred_fallthru
      _
    %p1118 = scmp.le.s32.totalorder 2, %s16
    // Predicated region
    $region65: #{forward_count.28} parent=5 // pred_check
      %p1119 = pneg %p1118
    $region66: #{forward_count.28} parent=5 // pred_check_branch
      %1121 = sbr.rel (%p1119) target = $region68
    $region67: #{forward_count.28} parent=5 // pred_region
      %s1122 = ssub.s32 %s16, 2
      // Predicated region
      $region69: #{forward_count.28} parent=67 // pred_check
        %p1123 = pneg %p321
      $region70: #{forward_count.28} parent=67 // pred_check_branch
        %1125 = sbr.rel (%p1123) target = $region72
      $region71: #{forward_count.28} parent=67 // pred_region
        %p1126 = scmp.lt.s32.totalorder %s27, 1
        %s1127 = scalar_select %p1126, %s27, 1
        %p1128 = scmp.lt.s32.totalorder %s28, 1
        %s1129 = scalar_select %p1128, %s28, 1
        %s1130 = smul.addr %s1129, 3
        %s1131 = smul.addr %s1127, 6
        %s1132 = sadd.s32 %s1130, %s1131
        %s1133 = smul.addr %s1132, 4
        %s1134 = scalar_lea.vmem %s10, %s1133
      $region72: #{forward_count.28} parent=67 // pred_fallthru
        _
    $region68: #{forward_count.28} parent=5 // pred_fallthru
      _
  $region6: #{forward_count.28} parent=0 // loop_footer
    %s20 = sadd.s32 1, %s16
  $region7: #{forward_count.28} parent=0 // loop_footer_branch
    %15 = sbr.rel target = $region3
  $region8: #{forward_count.28} parent=0 // loop_exit
    _

// kernel: forward_count.30
$region0: #{forward_count.30}
  #allocation0 [shape = 'u32[]', space=smem, size = 0x4, offset = 0x4, fixed_abs, tag = 'smem constant byte address 0x4 - core index']
  #allocation1 [shape = 'u32[144,128]{1,0:T(1,128)}', space=vmem, size = 0x12000, scoped, tag = 'internal scratch']
  #allocation2 [shape = 'f32[24,128]{1,0:T(8,128)}', space=vmem, size = 0x3000, scoped, tag = 'scratch operand']
  %s0 = inlined_call_operand.vmem [shape: bf16[24,128], index: 0, kind: input, shape index: {}]
  %s1 = inlined_call_operand.vmem [shape: bf16[128,128], index: 1, kind: input, shape index: {}]
  %s2 = inlined_call_operand.vmem [shape: f32[1,128], index: 2, kind: input, shape index: {}]
  %s3 = inlined_call_operand.vmem [shape: bf16[24,128], index: 3, kind: output, shape index: {}]
  %s4 = sld [smem:[#allocation0]]
  $region30: #{forward_count.30} parent=0
    _
  %s6 = ssub.s32 1, %s4
  %s7 = scalar_select 0, %s6, %s4
  // Predicated region
  $region2: #{forward_count.30} parent=0 // pred_check
    _
  $region3: #{forward_count.30} parent=0 // pred_check_branch
    %9 = sbr.rel (0) target = $region5
  $region4: #{forward_count.30} parent=0 // pred_region
    _
  $region5: #{forward_count.30} parent=0 // pred_fallthru
    _
  // Predicated region
  $region6: #{forward_count.30} parent=0 // pred_check
    _
  $region7: #{forward_count.30} parent=0 // pred_check_branch
    %11 = sbr.rel (0) target = $region9
  $region8: #{forward_count.30} parent=0 // pred_region
    _
  $region9: #{forward_count.30} parent=0 // pred_fallthru
    _
  // Predicated region
  $region10: #{forward_count.30} parent=0 // pred_check
    _
  $region11: #{forward_count.30} parent=0 // pred_check_branch
    %13 = sbr.rel (0) target = $region13
  $region12: #{forward_count.30} parent=0 // pred_region
    _
  $region13: #{forward_count.30} parent=0 // pred_fallthru
    _
  %p15 = scmp.eq.s32.totalorder 0, 0
  // Predicated region
  $region14: #{forward_count.30} parent=0 // pred_check
    %p16 = pneg %p15
  $region15: #{forward_count.30} parent=0 // pred_check_branch
    %18 = sbr.rel (%p16) target = $region17
  $region16: #{forward_count.30} parent=0 // pred_region
    %19 = vst [vmem:[#allocation2] sm:$0xff] 0.0
    %20 = vst [vmem:[#allocation2 + $0x8] sm:$0xff] 0.0
    %21 = vst [vmem:[#allocation2 + $0x10] sm:$0xff] 0.0
  $region17: #{forward_count.30} parent=0 // pred_fallthru
    _
  %v22 = vld [vmem:[#allocation2] sm:$0xff]
  %v23 = vld [vmem:[#allocation2 + $0x8] sm:$0xff]
  %v24 = vld [vmem:[#allocation2 + $0x10] sm:$0xff]
  %v25 = vld [vmem:[%s0] sm:$0xf]
  %v26 = vld [vmem:[%s0 + $0x4] sm:$0xf]
  %v27 = vld [vmem:[%s0 + $0x8] sm:$0xf]
  %v28 = vld [vmem:[%s1] sm:$0xf]
  %v29 = vld [vmem:[%s1 + $0x4] sm:$0xf]
  %v30 = vld [vmem:[%s1 + $0x8] sm:$0xf]
  %v31 = vld [vmem:[%s1 + $0xc] sm:$0xf]
  %v32 = vld [vmem:[%s1 + $0x10] sm:$0xf]
  %v33 = vld [vmem:[%s1 + $0x14] sm:$0xf]
  %v34 = vld [vmem:[%s1 + $0x18] sm:$0xf]
  %v35 = vld [vmem:[%s1 + $0x1c] sm:$0xf]
  %v36 = vld [vmem:[%s1 + $0x20] sm:$0xf]
  %v37 = vld [vmem:[%s1 + $0x24] sm:$0xf]
  %v38 = vld [vmem:[%s1 + $0x28] sm:$0xf]
  %v39 = vld [vmem:[%s1 + $0x2c] sm:$0xf]
  %v40 = vld [vmem:[%s1 + $0x30] sm:$0xf]
  %v41 = vld [vmem:[%s1 + $0x34] sm:$0xf]
  %v42 = vld [vmem:[%s1 + $0x38] sm:$0xf]
  %v43 = vld [vmem:[%s1 + $0x3c] sm:$0xf]
  %v47 = vunpack.c.l.b16 %v25
  %v48 = vunpack.c.l.b16 %v26
  %v49 = vunpack.c.l.b16 %v27
  %v50 = vpack.c.b16 %v48, %v47
  %v51 = vpack.c.b16 %v49, %v49
  %v70 = vunpack.c.l.b16 %v28
  %v71 = vunpack.c.l.b16 %v29
  %v72 = vunpack.c.l.b16 %v30
  %v73 = vunpack.c.l.b16 %v31
  %v74 = vunpack.c.l.b16 %v32
  %v75 = vunpack.c.l.b16 %v33
  %v76 = vunpack.c.l.b16 %v34
  %v77 = vunpack.c.l.b16 %v35
  %v78 = vunpack.c.l.b16 %v36
  %v79 = vunpack.c.l.b16 %v37
  %v80 = vunpack.c.l.b16 %v38
  %v81 = vunpack.c.l.b16 %v39
  %v82 = vunpack.c.l.b16 %v40
  %v83 = vunpack.c.l.b16 %v41
  %v84 = vunpack.c.l.b16 %v42
  %v85 = vunpack.c.l.b16 %v43
  %v86 = vpack.c.b16 %v71, %v70
  %v87 = vpack.c.b16 %v73, %v72
  %v88 = vpack.c.b16 %v75, %v74
  %v89 = vpack.c.b16 %v77, %v76
  %v90 = vpack.c.b16 %v79, %v78
  %v91 = vpack.c.b16 %v81, %v80
  %v92 = vpack.c.b16 %v83, %v82
  %v93 = vpack.c.b16 %v85, %v84
  %102 = vmatprep.subr.bf16.mxu0 0
  %103 = vmatpush1.bf16.msra.mxu0 %v86
  %104 = vmatprep.subr.bf16.mxu0 0
  %105 = vmatpush1.bf16.msra.mxu0 %v87
  %106 = vmatprep.subr.bf16.mxu0 0
  %107 = vmatpush1.bf16.msra.mxu0 %v88
  %108 = vmatprep.subr.bf16.mxu0 0
  %109 = vmatpush1.bf16.msra.mxu0 %v89
  %110 = vmatprep.subr.bf16.mxu0 0
  %111 = vmatpush1.bf16.msra.mxu0 %v90
  %112 = vmatprep.subr.bf16.mxu0 0
  %113 = vmatpush1.bf16.msra.mxu0 %v91
  %114 = vmatprep.subr.bf16.mxu0 0
  %115 = vmatpush1.bf16.msra.mxu0 %v92
  %116 = vmatprep.subr.bf16.mxu0 0
  %117 = vmatpush1.bf16.msra.mxu0 %v93
  %118 = vmatprep.subr.bf16.mxu0 0
  %119 = vmatpush1.bf16.msra.mxu0 0
  %120 = vmatprep.subr.bf16.mxu0 0
  %121 = vmatpush1.bf16.msra.mxu0 0
  %122 = vmatprep.subr.bf16.mxu0 0
  %123 = vmatpush1.bf16.msra.mxu0 0
  %124 = vmatprep.subr.bf16.mxu0 0
  %125 = vmatpush1.bf16.msra.mxu0 0
  %126 = vmatprep.subr.bf16.mxu0 0
  %127 = vmatpush1.bf16.msra.mxu0 0
  %128 = vmatprep.subr.bf16.mxu0 0
  %129 = vmatpush1.bf16.msra.mxu0 0
  %130 = vmatprep.subr.bf16.mxu0 0
  %131 = vmatpush1.bf16.msra.mxu0 0
  %132 = vmatprep.subr.bf16.mxu0 0
  %133 = vmatpush1.bf16.msra.mxu0 0
  %134 = vmatprep.mubr.bf16.mxu0 0
  %135 = vmatmul.mubr.bf16.gmra.mrb[0].mxu0 %v50
  %v136 = vpop.f32.mrb[0].mxu0
  %v137 = vadd.f32 0.0, %v136
  %v138 = vpop.f32.mrb[0].mxu0
  %v139 = vpop.f32.mrb[0].mxu0
  %v140 = vadd.f32 0.0, %v139
  %v141 = vpop.f32.mrb[0].mxu0
  %142 = vmatprep.mubr.bf16.mxu0 0
  %143 = vmatmul.mubr.bf16.gmra.mrb[0].mxu0 %v51
  %v144 = vpop.f32.mrb[0].mxu0
  %v145 = vadd.f32 0.0, %v144
  %v146 = vpop.f32.mrb[0].mxu0
  %v147 = vpop.f32.mrb[0].mxu0
  %v148 = vpop.f32.mrb[0].mxu0
  %149 = vdwg.mxu0
  %v150 = vadd.f32 %v22, %v137
  %v151 = vadd.f32 %v23, %v140
  %v152 = vadd.f32 %v24, %v145
  %153 = vst [vmem:[#allocation2] sm:$0xff] %v150
  %154 = vst [vmem:[#allocation2 + $0x8] sm:$0xff] %v151
  %155 = vst [vmem:[#allocation2 + $0x10] sm:$0xff] %v152
  // Predicated region
  $region18: #{forward_count.30} parent=0 // pred_check
    %p156 = pneg %p15
  $region19: #{forward_count.30} parent=0 // pred_check_branch
    %158 = sbr.rel (%p156) target = $region21
  $region20: #{forward_count.30} parent=0 // pred_region
    %v159 = vld [vmem:[#allocation2] sm:$0xff]
    %v160 = vld [vmem:[#allocation2 + $0x8] sm:$0xff]
    %v161 = vld [vmem:[#allocation2 + $0x10] sm:$0xff]
    %v162 = vld [vmem:[%s2] sm:$0x1]
    %v164 = vlaneseq
    %v165 = vshrl.u32 %v164, 7
    %v166 = vsub.s32 0, %v165
    %v167 = vrot.slane %v162, %v166
    %v169 = vadd.f32 %v159, %v167
    %v170 = vadd.f32 %v160, %v167
    %v171 = vadd.f32 %v161, %v167
    %v172 = vpack.c.bf16 %v170, %v169
    %v173 = vpack.c.bf16 %v171, %v171
    %v176 = vunpack.c.l.b16 %v172
    %v177 = vunpack.c.h.b16 %v172
    %v178 = vunpack.c.l.b16 %v173
    %v179 = vpack.c.b16 %v176, %v176
    %v180 = vpack.c.b16 %v177, %v177
    %v181 = vpack.c.b16 %v178, %v178
    %185 = vst [vmem:[%s3] sm:$0xf] %v179
    %186 = vst [vmem:[%s3 + $0x4] sm:$0xf] %v180
    %187 = vst [vmem:[%s3 + $0x8] sm:$0xf] %v181
  $region21: #{forward_count.30} parent=0 // pred_fallthru
    _
  // Predicated region
  $region22: #{forward_count.30} parent=0 // pred_check
    _
  $region23: #{forward_count.30} parent=0 // pred_check_branch
    %189 = sbr.rel (0) target = $region25
  $region24: #{forward_count.30} parent=0 // pred_region
    _
  $region25: #{forward_count.30} parent=0 // pred_fallthru
    _
  // Predicated region
  $region26: #{forward_count.30} parent=0 // pred_check
    _
  $region27: #{forward_count.30} parent=0 // pred_check_branch
    %191 = sbr.rel (0) target = $region29
  $region28: #{forward_count.30} parent=0 // pred_region
    _
  $region29: #{forward_count.30} parent=0 // pred_fallthru
    _

// kernel: forward_count.29
$region0: #{forward_count.29}
  #allocation0 [shape = 'u32[]', space=smem, size = 0x4, offset = 0x4, fixed_abs, tag = 'smem constant byte address 0x4 - core index']
  #allocation1 [shape = 'u32[144,128]{1,0:T(1,128)}', space=vmem, size = 0x12000, scoped, tag = 'internal scratch']
  %s0 = inlined_call_operand.vmem [shape: bf16[2,2,24,32], index: 0, kind: input, shape index: {}]
  %s1 = inlined_call_operand.vmem [shape: f32[2,6,32], index: 1, kind: input, shape index: {}]
  %s2 = inlined_call_operand.vmem [shape: f32[2,6,1], index: 2, kind: input, shape index: {}]
  %s3 = inlined_call_operand.vmem [shape: f32[2,1,24], index: 3, kind: input, shape index: {}]
  %s4 = inlined_call_operand.vmem [shape: bf16[2,4,32,32], index: 4, kind: input, shape index: {}]
  %s5 = inlined_call_operand.vmem [shape: bf16[2,4,32,32], index: 5, kind: input, shape index: {}]
  %s6 = inlined_call_operand.vmem [shape: f32[2,4,1,32], index: 6, kind: input, shape index: {}]
  %s7 = inlined_call_operand.vmem [shape: f32[2,2,6,32], index: 7, kind: output, shape index: {}]
  %s8 = sld [smem:[#allocation0]]
  $region61: #{forward_count.29} parent=0
    _
  %s10 = ssub.s32 1, %s8
  %s11 = scalar_select 0, %s10, %s8
  loop: start=0, step=1, limit=6
  $region2: #{forward_count.29} parent=0 // loop_pre_header
    _
  $region3: #{forward_count.29} parent=0 // loop_header
    %s13 = sphi 0, %s17
    %p14 = scmp.ge.s32.totalorder %s13, 6
    %s20 = sphi 0, %s32
    %s21 = sphi 0, %s28
    %s22 = sphi 0, %s20
    %s23 = sphi 0, %s21
    %s24 = sphi 0, %s22
    %s25 = sphi 0, %s23
    %s37 = sphi 0, %s39
    %s40 = sphi 0, %s37
    %s41 = sphi 0, %s40
    %s57 = sphi 0, %s41
    %s63 = sphi 0, %s65
    %s66 = sphi 0, %s63
    %s67 = sphi 0, %s66
    %s83 = sphi 0, %s67
    %s89 = sphi 0, %s91
    %s92 = sphi 0, %s89
    %s93 = sphi 0, %s92
    %s109 = sphi 0, %s93
    %s115 = sphi 0, %s117
    %s118 = sphi 0, %s115
    %s119 = sphi 0, %s118
    %s135 = sphi 0, %s119
    %s141 = sphi 0, %s143
    %s144 = sphi 0, %s141
    %s145 = sphi 0, %s144
    %s161 = sphi 0, %s145
    %s167 = sphi 0, %s169
    %s170 = sphi 0, %s167
    %s171 = sphi 0, %s170
    %s187 = sphi 0, %s171
    %s193 = sphi 0, %s195
    %s196 = sphi 0, %s193
    %s197 = sphi 0, %s196
    %s213 = sphi 0, %s197
    %s221 = sphi 0, %s223
    %s224 = sphi 0, %s221
    %s225 = sphi 0, %s224
    %s241 = sphi 0, %s225
  $region4: #{forward_count.29} parent=0 // loop_header_branch
    %16 = sbr.rel (%p14) target = $region8
  $region5: #{forward_count.29} parent=0 // loop_body
    %s18 = ssub.s32 %s13, 1
    %s19 = ssub.s32 %s13, 2
    %s26 = sadd.s32 1, %s21
    %p27 = scmp.ge.s32.totalorder %s26, 2
    %s28 = scalar_select %p27, 0, %s26
    %s29 = sadd.s32 1, %s20
    %s30 = scalar_select %p27, %s29, %s20
    %p31 = scmp.ge.s32.totalorder %s30, 2
    %s32 = scalar_select %p31, 0, %s30
    %s33 = ssub.s32 %s20, %s32
    %s34 = ssub.s32 %s21, %s28
    %s35 = sor.u32 %s33, %s34
    %p36 = scmp.eq.s32.totalorder %s35, 0
    %s38 = sadd.s32 %s37, 1
    %s39 = scalar_select %p36, %s37, %s38
    %p42 = pneg %p36
    %p43 = scmp.eq.s32.totalorder %s13, 3
    %p44 = por %p42, %p43
    %p45 = scmp.ne.s32.totalorder %s37, %s40
    %p46 = scmp.eq.s32.totalorder %s13, 0
    %p47 = por %p45, %p46
    %p48 = scmp.ne.s32.totalorder %s37, %s40
    %p49 = scmp.eq.s32.totalorder %s18, 3
    %p50 = por %p48, %p49
    %p51 = scmp.ne.s32.totalorder %s40, %s41
    %p52 = scmp.eq.s32.totalorder %s18, 0
    %p53 = por %p51, %p52
    %p54 = scmp.ne.s32.totalorder %s40, %s41
    %p55 = scmp.eq.s32.totalorder %s19, 3
    %p56 = por %p54, %p55
    %p58 = scmp.ne.s32.totalorder %s41, %s57
    %p59 = scmp.eq.s32.totalorder %s19, 0
    %p60 = por %p58, %p59
    %s61 = ssub.s32 %s21, %s28
    %p62 = scmp.eq.s32.totalorder %s61, 0
    %s64 = sadd.s32 %s63, 1
    %s65 = scalar_select %p62, %s63, %s64
    %p68 = pneg %p62
    %p69 = scmp.eq.s32.totalorder %s13, 3
    %p70 = por %p68, %p69
    %p71 = scmp.ne.s32.totalorder %s63, %s66
    %p72 = scmp.eq.s32.totalorder %s13, 0
    %p73 = por %p71, %p72
    %p74 = scmp.ne.s32.totalorder %s63, %s66
    %p75 = scmp.eq.s32.totalorder %s18, 3
    %p76 = por %p74, %p75
    %p77 = scmp.ne.s32.totalorder %s66, %s67
    %p78 = scmp.eq.s32.totalorder %s18, 0
    %p79 = por %p77, %p78
    %p80 = scmp.ne.s32.totalorder %s66, %s67
    %p81 = scmp.eq.s32.totalorder %s19, 3
    %p82 = por %p80, %p81
    %p84 = scmp.ne.s32.totalorder %s67, %s83
    %p85 = scmp.eq.s32.totalorder %s19, 0
    %p86 = por %p84, %p85
    %s87 = ssub.s32 %s21, %s28
    %p88 = scmp.eq.s32.totalorder %s87, 0
    %s90 = sadd.s32 %s89, 1
    %s91 = scalar_select %p88, %s89, %s90
    %p94 = pneg %p88
    %p95 = scmp.eq.s32.totalorder %s13, 3
    %p96 = por %p94, %p95
    %p97 = scmp.ne.s32.totalorder %s89, %s92
    %p98 = scmp.eq.s32.totalorder %s13, 0
    %p99 = por %p97, %p98
    %p100 = scmp.ne.s32.totalorder %s89, %s92
    %p101 = scmp.eq.s32.totalorder %s18, 3
    %p102 = por %p100, %p101
    %p103 = scmp.ne.s32.totalorder %s92, %s93
    %p104 = scmp.eq.s32.totalorder %s18, 0
    %p105 = por %p103, %p104
    %p106 = scmp.ne.s32.totalorder %s92, %s93
    %p107 = scmp.eq.s32.totalorder %s19, 3
    %p108 = por %p106, %p107
    %p110 = scmp.ne.s32.totalorder %s93, %s109
    %p111 = scmp.eq.s32.totalorder %s19, 0
    %p112 = por %p110, %p111
    %s113 = ssub.s32 %s21, %s28
    %p114 = scmp.eq.s32.totalorder %s113, 0
    %s116 = sadd.s32 %s115, 1
    %s117 = scalar_select %p114, %s115, %s116
    %p120 = pneg %p114
    %p121 = scmp.eq.s32.totalorder %s13, 3
    %p122 = por %p120, %p121
    %p123 = scmp.ne.s32.totalorder %s115, %s118
    %p124 = scmp.eq.s32.totalorder %s13, 0
    %p125 = por %p123, %p124
    %p126 = scmp.ne.s32.totalorder %s115, %s118
    %p127 = scmp.eq.s32.totalorder %s18, 3
    %p128 = por %p126, %p127
    %p129 = scmp.ne.s32.totalorder %s118, %s119
    %p130 = scmp.eq.s32.totalorder %s18, 0
    %p131 = por %p129, %p130
    %p132 = scmp.ne.s32.totalorder %s118, %s119
    %p133 = scmp.eq.s32.totalorder %s19, 3
    %p134 = por %p132, %p133
    %p136 = scmp.ne.s32.totalorder %s119, %s135
    %p137 = scmp.eq.s32.totalorder %s19, 0
    %p138 = por %p136, %p137
    %s139 = ssub.s32 %s20, %s32
    %p140 = scmp.eq.s32.totalorder %s139, 0
    %s142 = sadd.s32 %s141, 1
    %s143 = scalar_select %p140, %s141, %s142
    %p146 = pneg %p140
    %p147 = scmp.eq.s32.totalorder %s13, 3
    %p148 = por %p146, %p147
    %p149 = scmp.ne.s32.totalorder %s141, %s144
    %p150 = scmp.eq.s32.totalorder %s13, 0
    %p151 = por %p149, %p150
    %p152 = scmp.ne.s32.totalorder %s141, %s144
    %p153 = scmp.eq.s32.totalorder %s18, 3
    %p154 = por %p152, %p153
    %p155 = scmp.ne.s32.totalorder %s144, %s145
    %p156 = scmp.eq.s32.totalorder %s18, 0
    %p157 = por %p155, %p156
    %p158 = scmp.ne.s32.totalorder %s144, %s145
    %p159 = scmp.eq.s32.totalorder %s19, 3
    %p160 = por %p158, %p159
    %p162 = scmp.ne.s32.totalorder %s145, %s161
    %p163 = scmp.eq.s32.totalorder %s19, 0
    %p164 = por %p162, %p163
    %s165 = ssub.s32 %s20, %s32
    %p166 = scmp.eq.s32.totalorder %s165, 0
    %s168 = sadd.s32 %s167, 1
    %s169 = scalar_select %p166, %s167, %s168
    %p172 = pneg %p166
    %p173 = scmp.eq.s32.totalorder %s13, 3
    %p174 = por %p172, %p173
    %p175 = scmp.ne.s32.totalorder %s167, %s170
    %p176 = scmp.eq.s32.totalorder %s13, 0
    %p177 = por %p175, %p176
    %p178 = scmp.ne.s32.totalorder %s167, %s170
    %p179 = scmp.eq.s32.totalorder %s18, 3
    %p180 = por %p178, %p179
    %p181 = scmp.ne.s32.totalorder %s170, %s171
    %p182 = scmp.eq.s32.totalorder %s18, 0
    %p183 = por %p181, %p182
    %p184 = scmp.ne.s32.totalorder %s170, %s171
    %p185 = scmp.eq.s32.totalorder %s19, 3
    %p186 = por %p184, %p185
    %p188 = scmp.ne.s32.totalorder %s171, %s187
    %p189 = scmp.eq.s32.totalorder %s19, 0
    %p190 = por %p188, %p189
    %s191 = ssub.s32 %s20, %s32
    %p192 = scmp.eq.s32.totalorder %s191, 0
    %s194 = sadd.s32 %s193, 1
    %s195 = scalar_select %p192, %s193, %s194
    %p198 = pneg %p192
    %p199 = scmp.eq.s32.totalorder %s13, 3
    %p200 = por %p198, %p199
    %p201 = scmp.ne.s32.totalorder %s193, %s196
    %p202 = scmp.eq.s32.totalorder %s13, 0
    %p203 = por %p201, %p202
    %p204 = scmp.ne.s32.totalorder %s193, %s196
    %p205 = scmp.eq.s32.totalorder %s18, 3
    %p206 = por %p204, %p205
    %p207 = scmp.ne.s32.totalorder %s196, %s197
    %p208 = scmp.eq.s32.totalorder %s18, 0
    %p209 = por %p207, %p208
    %p210 = scmp.ne.s32.totalorder %s196, %s197
    %p211 = scmp.eq.s32.totalorder %s19, 3
    %p212 = por %p210, %p211
    %p214 = scmp.ne.s32.totalorder %s197, %s213
    %p215 = scmp.eq.s32.totalorder %s19, 0
    %p216 = por %p214, %p215
    %s217 = ssub.s32 %s20, %s32
    %s218 = ssub.s32 %s21, %s28
    %s219 = sor.u32 %s217, %s218
    %p220 = scmp.eq.s32.totalorder %s219, 0
    %s222 = sadd.s32 %s221, 1
    %s223 = scalar_select %p220, %s221, %s222
    %p226 = pneg %p220
    %p227 = scmp.eq.s32.totalorder %s13, 3
    %p228 = por %p226, %p227
    %p229 = scmp.ne.s32.totalorder %s221, %s224
    %p230 = scmp.eq.s32.totalorder %s13, 0
    %p231 = por %p229, %p230
    %p232 = scmp.ne.s32.totalorder %s221, %s224
    %p233 = scmp.eq.s32.totalorder %s18, 3
    %p234 = por %p232, %p233
    %p235 = scmp.ne.s32.totalorder %s224, %s225
    %p236 = scmp.eq.s32.totalorder %s18, 0
    %p237 = por %p235, %p236
    %p238 = scmp.ne.s32.totalorder %s224, %s225
    %p239 = scmp.eq.s32.totalorder %s19, 3
    %p240 = por %p238, %p239
    %p242 = scmp.ne.s32.totalorder %s225, %s241
    %p243 = scmp.eq.s32.totalorder %s19, 0
    %p244 = por %p242, %p243
    %p245 = scmp.le.s32.totalorder 1, %s13
    %p246 = scmp.lt.s32.totalorder %s13, 5
    %p247 = pnand %p245, %p246
    %p248 = pneg %p247
    // Predicated region
    $region9: #{forward_count.29} parent=5 // pred_check
      _
    $region10: #{forward_count.29} parent=5 // pred_check_branch
      %250 = sbr.rel (%p247) target = $region12
    $region11: #{forward_count.29} parent=5 // pred_region
      %s251 = ssub.s32 %s13, 1
    $region12: #{forward_count.29} parent=5 // pred_fallthru
      _
    %p252 = scmp.lt.s32.totalorder %s13, 4
    // Predicated region
    $region13: #{forward_count.29} parent=5 // pred_check
      %p253 = pneg %p252
    $region14: #{forward_count.29} parent=5 // pred_check_branch
      %255 = sbr.rel (%p253) target = $region16
    $region15: #{forward_count.29} parent=5 // pred_region
      // Predicated region
      $region17: #{forward_count.29} parent=15 // pred_check
        %p256 = pneg %p47
      $region18: #{forward_count.29} parent=15 // pred_check_branch
        %258 = sbr.rel (%p256) target = $region20
      $region19: #{forward_count.29} parent=15 // pred_region
        %p259 = scmp.lt.s32.totalorder %s20, 1
        %s260 = scalar_select %p259, %s20, 1
        %p261 = scmp.lt.s32.totalorder %s21, 1
        %s262 = scalar_select %p261, %s21, 1
        %s263 = smul.addr %s262, 3
        %s264 = smul.addr %s260, 6
        %s265 = sadd.s32 %s263, %s264
        %s266 = smul.addr %s265, 4
        %s267 = scalar_lea.vmem %s0, %s266
      $region20: #{forward_count.29} parent=15 // pred_fallthru
        _
      // Predicated region
      $region21: #{forward_count.29} parent=15 // pred_check
        %p268 = pneg %p73
      $region22: #{forward_count.29} parent=15 // pred_check_branch
        %270 = sbr.rel (%p268) target = $region24
      $region23: #{forward_count.29} parent=15 // pred_region
        %p271 = scmp.lt.s32.totalorder %s21, 1
        %s272 = scalar_select %p271, %s21, 1
        %s273 = smul.addr %s272, 8
        %s274 = scalar_lea.vmem %s1, %s273
      $region24: #{forward_count.29} parent=15 // pred_fallthru
        _
      // Predicated region
      $region25: #{forward_count.29} parent=15 // pred_check
        %p275 = pneg %p99
      $region26: #{forward_count.29} parent=15 // pred_check_branch
        %277 = sbr.rel (%p275) target = $region28
      $region27: #{forward_count.29} parent=15 // pred_region
        %p278 = scmp.lt.s32.totalorder %s21, 1
        %s279 = scalar_select %p278, %s21, 1
        %s280 = smul.addr %s279, 8
        %s281 = scalar_lea.vmem %s2, %s280
      $region28: #{forward_count.29} parent=15 // pred_fallthru
        _
      // Predicated region
      $region29: #{forward_count.29} parent=15 // pred_check
        %p282 = pneg %p125
      $region30: #{forward_count.29} parent=15 // pred_check_branch
        %284 = sbr.rel (%p282) target = $region32
      $region31: #{forward_count.29} parent=15 // pred_region
        %p285 = scmp.lt.s32.totalorder %s21, 1
        %s286 = scalar_select %p285, %s21, 1
        %s287 = scalar_lea.vmem %s3, %s286
      $region32: #{forward_count.29} parent=15 // pred_fallthru
        _
      // Predicated region
      $region33: #{forward_count.29} parent=15 // pred_check
        %p288 = pneg %p151
      $region34: #{forward_count.29} parent=15 // pred_check_branch
        %290 = sbr.rel (%p288) target = $region36
      $region35: #{forward_count.29} parent=15 // pred_region
        %p291 = scmp.lt.s32.totalorder %s20, 1
        %s292 = scalar_select %p291, %s20, 1
        %s293 = smul.addr %s292, 16
        %s294 = smul.addr %s293, 4
        %s295 = scalar_lea.vmem %s4, %s294
      $region36: #{forward_count.29} parent=15 // pred_fallthru
        _
      // Predicated region
      $region37: #{forward_count.29} parent=15 // pred_check
        %p296 = pneg %p177
      $region38: #{forward_count.29} parent=15 // pred_check_branch
        %298 = sbr.rel (%p296) target = $region40
      $region39: #{forward_count.29} parent=15 // pred_region
        %p299 = scmp.lt.s32.totalorder %s20, 1
        %s300 = scalar_select %p299, %s20, 1
        %s301 = smul.addr %s300, 16
        %s302 = smul.addr %s301, 4
        %s303 = scalar_lea.vmem %s5, %s302
      $region40: #{forward_count.29} parent=15 // pred_fallthru
        _
      // Predicated region
      $region41: #{forward_count.29} parent=15 // pred_check
        %p304 = pneg %p203
      $region42: #{forward_count.29} parent=15 // pred_check_branch
        %306 = sbr.rel (%p304) target = $region44
      $region43: #{forward_count.29} parent=15 // pred_region
        %p307 = scmp.lt.s32.totalorder %s20, 1
        %s308 = scalar_select %p307, %s20, 1
        %s309 = smul.addr %s308, 4
        %s310 = scalar_lea.vmem %s6, %s309
      $region44: #{forward_count.29} parent=15 // pred_fallthru
        _
    $region16: #{forward_count.29} parent=5 // pred_fallthru
      _
    %p311 = scmp.le.s32.totalorder 1, %s13
    %p312 = scmp.lt.s32.totalorder %s13, 5
    %p313 = pnand %p311, %p312
    %p314 = pneg %p313
    // Predicated region
    $region45: #{forward_count.29} parent=5 // pred_check
      _
    $region46: #{forward_count.29} parent=5 // pred_check_branch
      %316 = sbr.rel (%p313) target = $region48
    $region47: #{forward_count.29} parent=5 // pred_region
      %s317 = ssub.s32 %s13, 1
      %p318 = scmp.lt.s32.totalorder %s22, 1
      %s319 = scalar_select %p318, %s22, 1
      %p320 = scmp.lt.s32.totalorder %s23, 1
      %s321 = scalar_select %p320, %s23, 1
      %s322 = smul.addr %s321, 3
      %s323 = smul.addr %s319, 6
      %s324 = sadd.s32 %s322, %s323
      %s325 = smul.addr %s324, 4
      %s326 = scalar_lea.vmem %s0, %s325
      %p327 = pneg %p53
      %p328 = pneg %p50
      %p329 = scmp.lt.s32.totalorder %s23, 1
      %s330 = scalar_select %p329, %s23, 1
      %s331 = smul.addr %s330, 8
      %s332 = scalar_lea.vmem %s1, %s331
      %p333 = pneg %p79
      %p334 = pneg %p76
      %p335 = scmp.lt.s32.totalorder %s23, 1
      %s336 = scalar_select %p335, %s23, 1
      %s337 = smul.addr %s336, 8
      %s338 = scalar_lea.vmem %s2, %s337
      %p339 = pneg %p105
      %p340 = pneg %p102
      %p341 = scmp.lt.s32.totalorder %s23, 1
      %s342 = scalar_select %p341, %s23, 1
      %s343 = scalar_lea.vmem %s3, %s342
      %p344 = pneg %p131
      %p345 = pneg %p128
      %p346 = scmp.lt.s32.totalorder %s22, 1
      %s347 = scalar_select %p346, %s22, 1
      %s348 = smul.addr %s347, 16
      %s349 = smul.addr %s348, 4
      %s350 = scalar_lea.vmem %s4, %s349
      %p351 = pneg %p157
      %p352 = pneg %p154
      %p353 = scmp.lt.s32.totalorder %s22, 1
      %s354 = scalar_select %p353, %s22, 1
      %s355 = smul.addr %s354, 16
      %s356 = smul.addr %s355, 4
      %s357 = scalar_lea.vmem %s5, %s356
      %p358 = pneg %p183
      %p359 = pneg %p180
      %p360 = scmp.lt.s32.totalorder %s22, 1
      %s361 = scalar_select %p360, %s22, 1
      %s362 = smul.addr %s361, 4
      %s363 = scalar_lea.vmem %s6, %s362
      %p364 = pneg %p209
      %p365 = pneg %p206
      %p366 = pneg %p237
      %p367 = pneg %p234
      %p368 = scmp.lt.s32.totalorder %s22, 1
      %s369 = scalar_select %p368, %s22, 1
      %p370 = scmp.lt.s32.totalorder %s23, 1
      %s371 = scalar_select %p370, %s23, 1
      %s372 = smul.addr %s369, 2
      %s373 = sadd.s32 %s371, %s372
      %s374 = smul.addr %s373, 8
      %s375 = scalar_lea.vmem %s7, %s374
      %p376 = scmp.lt.s32.totalorder %s22, 1
      %s377 = scalar_select %p376, %s22, 1
      %p378 = scmp.lt.s32.totalorder %s23, 1
      %s379 = scalar_select %p378, %s23, 1
      %s380 = smul.addr %s379, 3
      %s381 = smul.addr %s377, 6
      %s382 = sadd.s32 %s380, %s381
      %s383 = smul.addr %s382, 4
      %s384 = scalar_lea.vmem %s0, %s383
      %p385 = scmp.lt.s32.totalorder %s23, 1
      %s386 = scalar_select %p385, %s23, 1
      %s387 = smul.addr %s386, 8
      %s388 = scalar_lea.vmem %s1, %s387
      %p389 = scmp.lt.s32.totalorder %s23, 1
      %s390 = scalar_select %p389, %s23, 1
      %s391 = smul.addr %s390, 8
      %s392 = scalar_lea.vmem %s2, %s391
      %p393 = scmp.lt.s32.totalorder %s23, 1
      %s394 = scalar_select %p393, %s23, 1
      %s395 = scalar_lea.vmem %s3, %s394
      %p396 = scmp.lt.s32.totalorder %s22, 1
      %s397 = scalar_select %p396, %s22, 1
      %s398 = smul.addr %s397, 16
      %s399 = smul.addr %s398, 4
      %s400 = scalar_lea.vmem %s4, %s399
      %p401 = scmp.lt.s32.totalorder %s22, 1
      %s402 = scalar_select %p401, %s22, 1
      %s403 = smul.addr %s402, 16
      %s404 = smul.addr %s403, 4
      %s405 = scalar_lea.vmem %s5, %s404
      %p406 = scmp.lt.s32.totalorder %s22, 1
      %s407 = scalar_select %p406, %s22, 1
      %s408 = smul.addr %s407, 4
      %s409 = scalar_lea.vmem %s6, %s408
      %p410 = scmp.lt.s32.totalorder %s22, 1
      %s411 = scalar_select %p410, %s22, 1
      %p412 = scmp.lt.s32.totalorder %s23, 1
      %s413 = scalar_select %p412, %s23, 1
      %s414 = smul.addr %s411, 2
      %s415 = sadd.s32 %s413, %s414
      %s416 = smul.addr %s415, 8
      %s417 = scalar_lea.vmem %s7, %s416
      %v419 = vld [vmem:[%s384] sm:$0xf]
      %v420 = vld [vmem:[%s384 + $0x4] sm:$0xf]
      %v421 = vld [vmem:[%s384 + $0x8] sm:$0xf]
      %v422 = vld [vmem:[%s388] sm:$0x3f]
      %v423 = vld [vmem:[%s392] sm:$0x3f]
      %v424 = vld [vmem:[%s395] sm:$0x1]
      %v425 = vld [vmem:[%s400] sm:$0xf]
      %v426 = vld [vmem:[%s400 + $0x4] sm:$0xf]
      %v427 = vld [vmem:[%s400 + $0x8] sm:$0xf]
      %v428 = vld [vmem:[%s400 + $0xc] sm:$0xf]
      %v432 = vunpack.c.l.b16 %v419
      %v433 = vunpack.c.l.b16 %v420
      %v434 = vunpack.c.l.b16 %v421
      %v435 = vpack.c.b16 %v433, %v432
      %v436 = vpack.c.b16 %v434, %v434
      %v441 = vunpack.c.l.b16 %v425
      %v442 = vunpack.c.l.b16 %v426
      %v443 = vunpack.c.l.b16 %v427
      %v444 = vunpack.c.l.b16 %v428
      %v445 = vpack.c.b16 %v442, %v441
      %v446 = vpack.c.b16 %v444, %v443
      %vm449 = vcmask 261120
      %v451 = vsel %vm449, %v435, 0
      %v454 = vsel %vm449, %v436, 0
      %456 = vmatprep.subr.bf16.mxu0 0
      %457 = vmatpush1.bf16.msra.mxu0 %v445
      %458 = vmatprep.subr.bf16.mxu0 0
      %459 = vmatpush1.bf16.msra.mxu0 %v446
      %460 = vmatprep.subr.bf16.mxu0 0
      %461 = vmatpush1.bf16.msra.mxu0 0
      %462 = vmatprep.subr.bf16.mxu0 0
      %463 = vmatpush1.bf16.msra.mxu0 0
      %464 = vmatprep.subr.bf16.mxu0 0
      %465 = vmatpush1.bf16.msra.mxu0 0
      %466 = vmatprep.subr.bf16.mxu0 0
      %467 = vmatpush1.bf16.msra.mxu0 0
      %468 = vmatprep.subr.bf16.mxu0 0
      %469 = vmatpush1.bf16.msra.mxu0 0
      %470 = vmatprep.subr.bf16.mxu0 0
      %471 = vmatpush1.bf16.msra.mxu0 0
      %472 = vmatprep.subr.bf16.mxu0 0
      %473 = vmatpush1.bf16.msra.mxu0 0
      %474 = vmatprep.subr.bf16.mxu0 0
      %475 = vmatpush1.bf16.msra.mxu0 0
      %476 = vmatprep.subr.bf16.mxu0 0
      %477 = vmatpush1.bf16.msra.mxu0 0
      %478 = vmatprep.subr.bf16.mxu0 0
      %479 = vmatpush1.bf16.msra.mxu0 0
      %480 = vmatprep.subr.bf16.mxu0 0
      %481 = vmatpush1.bf16.msra.mxu0 0
      %482 = vmatprep.subr.bf16.mxu0 0
      %483 = vmatpush1.bf16.msra.mxu0 0
      %484 = vmatprep.subr.bf16.mxu0 0
      %485 = vmatpush1.bf16.msra.mxu0 0
      %486 = vmatprep.subr.bf16.mxu0 0
      %487 = vmatpush1.bf16.msra.mxu0 0
      %488 = vmatprep.mubr.bf16.mxu0 0
      %489 = vmatmul.mubr.bf16.gmra.mrb[0].mxu0 %v451
      %v490 = vpop.f32.mrb[0].mxu0
      %v491 = vadd.f32 0.0, %v490
      %v492 = vpop.f32.mrb[0].mxu0
      %v493 = vpop.f32.mrb[0].mxu0
      %v494 = vadd.f32 0.0, %v493
      %v495 = vpop.f32.mrb[0].mxu0
      %496 = vmatprep.mubr.bf16.mxu0 0
      %497 = vmatmul.mubr.bf16.gmra.mrb[0].mxu0 %v454
      %v498 = vpop.f32.mrb[0].mxu0
      %v499 = vadd.f32 0.0, %v498
      %v500 = vpop.f32.mrb[0].mxu0
      %v501 = vpop.f32.mrb[0].mxu0
      %v502 = vpop.f32.mrb[0].mxu0
      %503 = vdwg.mxu0
      %v504 = vpack.c.bf16 %v422, %v422
      %v505 = vpack.c.bf16 %v494, %v491
      %v506 = vpack.c.bf16 %v499, %v499
      %508 = vset.pattern.permute.xlu0 0
      %509 = vperm.xlu0 %508, %v423
      %v510 = vpop.permute.xlu0 %509
      %v513 = vsel %vm449, %v504, 0
      %v516 = vsel %vm449, %v505, 0
      %v519 = vsel %vm449, %v506, 0
      %521 = vmatprep.subr.bf16.mxu0 0
      %522 = vmatpush1.bf16.xpose.msra.mxu0 %v516
      %523 = vmatprep.subr.bf16.mxu0 0
      %524 = vmatpush1.bf16.xpose.msra.mxu0 %v519
      %525 = vmatprep.subr.bf16.mxu0 0
      %526 = vmatpush1.bf16.xpose.msra.mxu0 0
      %527 = vmatprep.subr.bf16.mxu0 0
      %528 = vmatpush1.bf16.xpose.msra.mxu0 0
      %529 = vmatprep.subr.bf16.mxu0 0
      %530 = vmatpush1.bf16.xpose.msra.mxu0 0
      %531 = vmatprep.subr.bf16.mxu0 0
      %532 = vmatpush1.bf16.xpose.msra.mxu0 0
      %533 = vmatprep.subr.bf16.mxu0 0
      %534 = vmatpush1.bf16.xpose.msra.mxu0 0
      %535 = vmatprep.subr.bf16.mxu0 0
      %536 = vmatpush1.bf16.xpose.msra.mxu0 0
      %537 = vmatprep.subr.bf16.mxu0 0
      %538 = vmatpush1.bf16.xpose.msra.mxu0 0
      %539 = vmatprep.subr.bf16.mxu0 0
      %540 = vmatpush1.bf16.xpose.msra.mxu0 0
      %541 = vmatprep.subr.bf16.mxu0 0
      %542 = vmatpush1.bf16.xpose.msra.mxu0 0
      %543 = vmatprep.subr.bf16.mxu0 0
      %544 = vmatpush1.bf16.xpose.msra.mxu0 0
      %545 = vmatprep.subr.bf16.mxu0 0
      %546 = vmatpush1.bf16.xpose.msra.mxu0 0
      %547 = vmatprep.subr.bf16.mxu0 0
      %548 = vmatpush1.bf16.xpose.msra.mxu0 0
      %549 = vmatprep.subr.bf16.mxu0 0
      %550 = vmatpush1.bf16.xpose.msra.mxu0 0
      %551 = vmatprep.subr.bf16.mxu0 0
      %552 = vmatpush1.bf16.xpose.msra.mxu0 0
      %553 = vmatprep.mubr.bf16.mxu0 0
      %554 = vmatmul.mubr.bf16.gmra.mrb[0].mxu0 %v513
      %v555 = vpop.f32.mrb[0].mxu0
      %v556 = vadd.f32 %v510, %v555
      %v557 = vpop.f32.mrb[0].mxu0
      %v558 = vpop.f32.mrb[0].mxu0
      %v559 = vpop.f32.mrb[0].mxu0
      %560 = vdwg.mxu0
      %v562 = vlaneseq
      %v563 = vshrl.u32 %v562, 7
      %v564 = vsub.s32 0, %v563
      %v565 = vrot.slane %v424, %v564
      %v567 = vadd.f32 %v556, %v565
      %vm568 = vcmask 193536
      %v569 = vsel %vm568, %v567, -inf
      %570 = vmax.xlane.f32.xlu0 %v569
      %v571 = vpop.xlane.xlu0 %570
      %vm572 = vcmask 1045504
      %v573 = vsel %vm572, %v571, -inf
      %v574 = vrot.slane %v573, 4
      %v575 = vmax.f32 %v573, %v574
      %v576 = vrot.slane %v575, 2
      %v577 = vmax.f32 %v575, %v576
      %v578 = vrot.slane %v577, 1
      %v579 = vmax.f32 %v577, %v578
      %v580 = vsub.f32 %v567, %v579
      %v581 = vmul.f32 %v580, 1.442695
      %v582 = vpow.pop %v581
      %v583 = vsel %vm568, %v582, 0.0
      %584 = vadd.xlane.f32.xlu0 %v583
      %v585 = vpop.xlane.xlu0 %584
      %v586 = vsel %vm572, %v585, 0.0
      %v587 = vrot.slane %v586, 4
      %v588 = vadd.f32 %v586, %v587
      %v589 = vrot.slane %v588, 2
      %v590 = vadd.f32 %v588, %v589
      %v591 = vrot.slane %v590, 1
      %v592 = vadd.f32 %v590, %v591
      %v593 = vrcp.pop %v592
      %v594 = vmul.f32 %v582, %v593
      %v595 = vpack.c.bf16 %v594, %v594
      %vm597 = vcmask 195584
      %v599 = vsel %vm597, %v595, 0
      %vm601 = vcmask 1043456
      %v602 = vsel %vm601, %v436, 0
      %604 = vmatprep.subr.bf16.mxu0 0
      %605 = vmatpush1.bf16.msra.mxu0 %v435
      %606 = vmatprep.subr.bf16.mxu0 0
      %607 = vmatpush1.bf16.msra.mxu0 %v602
      %608 = vmatprep.subr.bf16.mxu0 0
      %609 = vmatpush1.bf16.msra.mxu0 0
      %610 = vmatprep.subr.bf16.mxu0 0
      %611 = vmatpush1.bf16.msra.mxu0 0
      %612 = vmatprep.subr.bf16.mxu0 0
      %613 = vmatpush1.bf16.msra.mxu0 0
      %614 = vmatprep.subr.bf16.mxu0 0
      %615 = vmatpush1.bf16.msra.mxu0 0
      %616 = vmatprep.subr.bf16.mxu0 0
      %617 = vmatpush1.bf16.msra.mxu0 0
      %618 = vmatprep.subr.bf16.mxu0 0
      %619 = vmatpush1.bf16.msra.mxu0 0
      %620 = vmatprep.subr.bf16.mxu0 0
      %621 = vmatpush1.bf16.msra.mxu0 0
      %622 = vmatprep.subr.bf16.mxu0 0
      %623 = vmatpush1.bf16.msra.mxu0 0
      %624 = vmatprep.subr.bf16.mxu0 0
      %625 = vmatpush1.bf16.msra.mxu0 0
      %626 = vmatprep.subr.bf16.mxu0 0
      %627 = vmatpush1.bf16.msra.mxu0 0
      %628 = vmatprep.subr.bf16.mxu0 0
      %629 = vmatpush1.bf16.msra.mxu0 0
      %630 = vmatprep.subr.bf16.mxu0 0
      %631 = vmatpush1.bf16.msra.mxu0 0
      %632 = vmatprep.subr.bf16.mxu0 0
      %633 = vmatpush1.bf16.msra.mxu0 0
      %634 = vmatprep.subr.bf16.mxu0 0
      %635 = vmatpush1.bf16.msra.mxu0 0
      %636 = vmatprep.mubr.bf16.mxu0 0
      %637 = vmatmul.mubr.bf16.gmra.mrb[0].mxu0 %v599
      %v638 = vpop.f32.mrb[0].mxu0
      %v639 = vadd.f32 0.0, %v638
      %v640 = vpop.f32.mrb[0].mxu0
      %v641 = vpop.f32.mrb[0].mxu0
      %v642 = vpop.f32.mrb[0].mxu0
      %643 = vdwg.mxu0
      %v644 = vmul.f32 %v639, %v422
      %vm645 = vcmask 259072
      %v646 = vsel %vm645, %v644, 0.0
      %v647 = vrot.slane %v646, 4
      %v648 = vadd.f32 %v646, %v647
      %v649 = vrot.slane %v648, 2
      %v650 = vadd.f32 %v648, %v649
      %v651 = vrot.slane %v650, 1
      %v652 = vadd.f32 %v650, %v651
      %v653 = vpack.c.bf16 %v652, %v652
      %v654 = vld [vmem:[%s405] sm:$0xf]
      %v655 = vld [vmem:[%s405 + $0x4] sm:$0xf]
      %v656 = vld [vmem:[%s405 + $0x8] sm:$0xf]
      %v657 = vld [vmem:[%s405 + $0xc] sm:$0xf]
      %v658 = vld [vmem:[%s409] sm:$0x1]
      %v663 = vunpack.c.l.b16 %v654
      %v664 = vunpack.c.l.b16 %v655
      %v665 = vunpack.c.l.b16 %v656
      %v666 = vunpack.c.l.b16 %v657
      %v667 = vpack.c.b16 %v664, %v663
      %v668 = vpack.c.b16 %v666, %v665
      %v672 = vsel %vm449, %v653, 0
      %674 = vmatprep.subr.bf16.mxu0 0
      %675 = vmatpush1.bf16.msra.mxu0 %v667
      %676 = vmatprep.subr.bf16.mxu0 0
      %677 = vmatpush1.bf16.msra.mxu0 %v668
      %678 = vmatprep.subr.bf16.mxu0 0
      %679 = vmatpush1.bf16.msra.mxu0 0
      %680 = vmatprep.subr.bf16.mxu0 0
      %681 = vmatpush1.bf16.msra.mxu0 0
      %682 = vmatprep.subr.bf16.mxu0 0
      %683 = vmatpush1.bf16.msra.mxu0 0
      %684 = vmatprep.subr.bf16.mxu0 0
      %685 = vmatpush1.bf16.msra.mxu0 0
      %686 = vmatprep.subr.bf16.mxu0 0
      %687 = vmatpush1.bf16.msra.mxu0 0
      %688 = vmatprep.subr.bf16.mxu0 0
      %689 = vmatpush1.bf16.msra.mxu0 0
      %690 = vmatprep.subr.bf16.mxu0 0
      %691 = vmatpush1.bf16.msra.mxu0 0
      %692 = vmatprep.subr.bf16.mxu0 0
      %693 = vmatpush1.bf16.msra.mxu0 0
      %694 = vmatprep.subr.bf16.mxu0 0
      %695 = vmatpush1.bf16.msra.mxu0 0
      %696 = vmatprep.subr.bf16.mxu0 0
      %697 = vmatpush1.bf16.msra.mxu0 0
      %698 = vmatprep.subr.bf16.mxu0 0
      %699 = vmatpush1.bf16.msra.mxu0 0
      %700 = vmatprep.subr.bf16.mxu0 0
      %701 = vmatpush1.bf16.msra.mxu0 0
      %702 = vmatprep.subr.bf16.mxu0 0
      %703 = vmatpush1.bf16.msra.mxu0 0
      %704 = vmatprep.subr.bf16.mxu0 0
      %705 = vmatpush1.bf16.msra.mxu0 0
      %706 = vmatprep.mubr.bf16.mxu0 0
      %707 = vmatmul.mubr.bf16.gmra.mrb[0].mxu0 %v672
      %v708 = vpop.f32.mrb[0].mxu0
      %v709 = vadd.f32 %v658, %v708
      %v710 = vpop.f32.mrb[0].mxu0
      %v711 = vpop.f32.mrb[0].mxu0
      %v712 = vpop.f32.mrb[0].mxu0
      %713 = vdwg.mxu0
      %v714 = vlaneseq
      %v715 = vshrl.u32 %v714, 7
      %v716 = vsub.s32 0, %v715
      %v717 = vrot.slane %v709, %v716
      %v718 = vadd.f32 %v422, %v717
      %s719 = scalar_lea.vmem %s400, 16
      %v720 = vld [vmem:[%s719] sm:$0xf]
      %v721 = vld [vmem:[%s719 + $0x4] sm:$0xf]
      %v722 = vld [vmem:[%s719 + $0x8] sm:$0xf]
      %v723 = vld [vmem:[%s719 + $0xc] sm:$0xf]
      %v728 = vunpack.c.l.b16 %v720
      %v729 = vunpack.c.l.b16 %v721
      %v730 = vunpack.c.l.b16 %v722
      %v731 = vunpack.c.l.b16 %v723
      %v732 = vpack.c.b16 %v729, %v728
      %v733 = vpack.c.b16 %v731, %v730
      %736 = vmatprep.subr.bf16.mxu0 0
      %737 = vmatpush1.bf16.msra.mxu0 %v732
      %738 = vmatprep.subr.bf16.mxu0 0
      %739 = vmatpush1.bf16.msra.mxu0 %v733
      %740 = vmatprep.subr.bf16.mxu0 0
      %741 = vmatpush1.bf16.msra.mxu0 0
      %742 = vmatprep.subr.bf16.mxu0 0
      %743 = vmatpush1.bf16.msra.mxu0 0
      %744 = vmatprep.subr.bf16.mxu0 0
      %745 = vmatpush1.bf16.msra.mxu0 0
      %746 = vmatprep.subr.bf16.mxu0 0
      %747 = vmatpush1.bf16.msra.mxu0 0
      %748 = vmatprep.subr.bf16.mxu0 0
      %749 = vmatpush1.bf16.msra.mxu0 0
      %750 = vmatprep.subr.bf16.mxu0 0
      %751 = vmatpush1.bf16.msra.mxu0 0
      %752 = vmatprep.subr.bf16.mxu0 0
      %753 = vmatpush1.bf16.msra.mxu0 0
      %754 = vmatprep.subr.bf16.mxu0 0
      %755 = vmatpush1.bf16.msra.mxu0 0
      %756 = vmatprep.subr.bf16.mxu0 0
      %757 = vmatpush1.bf16.msra.mxu0 0
      %758 = vmatprep.subr.bf16.mxu0 0
      %759 = vmatpush1.bf16.msra.mxu0 0
      %760 = vmatprep.subr.bf16.mxu0 0
      %761 = vmatpush1.bf16.msra.mxu0 0
      %762 = vmatprep.subr.bf16.mxu0 0
      %763 = vmatpush1.bf16.msra.mxu0 0
      %764 = vmatprep.subr.bf16.mxu0 0
      %765 = vmatpush1.bf16.msra.mxu0 0
      %766 = vmatprep.subr.bf16.mxu0 0
      %767 = vmatpush1.bf16.msra.mxu0 0
      %768 = vmatprep.mubr.bf16.mxu0 0
      %769 = vmatmul.mubr.bf16.gmra.mrb[0].mxu0 %v451
      %v770 = vpop.f32.mrb[0].mxu0
      %v771 = vadd.f32 0.0, %v770
      %v772 = vpop.f32.mrb[0].mxu0
      %v773 = vpop.f32.mrb[0].mxu0
      %v774 = vadd.f32 0.0, %v773
      %v775 = vpop.f32.mrb[0].mxu0
      %776 = vmatprep.mubr.bf16.mxu0 0
      %777 = vmatmul.mubr.bf16.gmra.mrb[0].mxu0 %v454
      %v778 = vpop.f32.mrb[0].mxu0
      %v779 = vadd.f32 0.0, %v778
      %v780 = vpop.f32.mrb[0].mxu0
      %v781 = vpop.f32.mrb[0].mxu0
      %v782 = vpop.f32.mrb[0].mxu0
      %783 = vdwg.mxu0
      %v784 = vpack.c.bf16 %v718, %v718
      %v785 = vpack.c.bf16 %v774, %v771
      %v786 = vpack.c.bf16 %v779, %v779
      %v788 = vsel %vm449, %v784, 0
      %v791 = vsel %vm449, %v785, 0
      %v794 = vsel %vm449, %v786, 0
      %796 = vmatprep.subr.bf16.mxu0 0
      %797 = vmatpush1.bf16.xpose.msra.mxu0 %v791
      %798 = vmatprep.subr.bf16.mxu0 0
      %799 = vmatpush1.bf16.xpose.msra.mxu0 %v794
      %800 = vmatprep.subr.bf16.mxu0 0
      %801 = vmatpush1.bf16.xpose.msra.mxu0 0
      %802 = vmatprep.subr.bf16.mxu0 0
      %803 = vmatpush1.bf16.xpose.msra.mxu0 0
      %804 = vmatprep.subr.bf16.mxu0 0
      %805 = vmatpush1.bf16.xpose.msra.mxu0 0
      %806 = vmatprep.subr.bf16.mxu0 0
      %807 = vmatpush1.bf16.xpose.msra.mxu0 0
      %808 = vmatprep.subr.bf16.mxu0 0
      %809 = vmatpush1.bf16.xpose.msra.mxu0 0
      %810 = vmatprep.subr.bf16.mxu0 0
      %811 = vmatpush1.bf16.xpose.msra.mxu0 0
      %812 = vmatprep.subr.bf16.mxu0 0
      %813 = vmatpush1.bf16.xpose.msra.mxu0 0
      %814 = vmatprep.subr.bf16.mxu0 0
      %815 = vmatpush1.bf16.xpose.msra.mxu0 0
      %816 = vmatprep.subr.bf16.mxu0 0
      %817 = vmatpush1.bf16.xpose.msra.mxu0 0
      %818 = vmatprep.subr.bf16.mxu0 0
      %819 = vmatpush1.bf16.xpose.msra.mxu0 0
      %820 = vmatprep.subr.bf16.mxu0 0
      %821 = vmatpush1.bf16.xpose.msra.mxu0 0
      %822 = vmatprep.subr.bf16.mxu0 0
      %823 = vmatpush1.bf16.xpose.msra.mxu0 0
      %824 = vmatprep.subr.bf16.mxu0 0
      %825 = vmatpush1.bf16.xpose.msra.mxu0 0
      %826 = vmatprep.subr.bf16.mxu0 0
      %827 = vmatpush1.bf16.xpose.msra.mxu0 0
      %828 = vmatprep.mubr.bf16.mxu0 0
      %829 = vmatmul.mubr.bf16.gmra.mrb[0].mxu0 %v788
      %v830 = vpop.f32.mrb[0].mxu0
      %v831 = vadd.f32 %v510, %v830
      %v832 = vpop.f32.mrb[0].mxu0
      %v833 = vpop.f32.mrb[0].mxu0
      %v834 = vpop.f32.mrb[0].mxu0
      %835 = vdwg.mxu0
      %v836 = vadd.f32 %v831, %v565
      %v837 = vsel %vm568, %v836, -inf
      %838 = vmax.xlane.f32.xlu0 %v837
      %v839 = vpop.xlane.xlu0 %838
      %v840 = vsel %vm572, %v839, -inf
      %v841 = vrot.slane %v840, 4
      %v842 = vmax.f32 %v840, %v841
      %v843 = vrot.slane %v842, 2
      %v844 = vmax.f32 %v842, %v843
      %v845 = vrot.slane %v844, 1
      %v846 = vmax.f32 %v844, %v845
      %v847 = vsub.f32 %v836, %v846
      %v848 = vmul.f32 %v847, 1.442695
      %v849 = vpow.pop %v848
      %v850 = vsel %vm568, %v849, 0.0
      %851 = vadd.xlane.f32.xlu0 %v850
      %v852 = vpop.xlane.xlu0 %851
      %v853 = vsel %vm572, %v852, 0.0
      %v854 = vrot.slane %v853, 4
      %v855 = vadd.f32 %v853, %v854
      %v856 = vrot.slane %v855, 2
      %v857 = vadd.f32 %v855, %v856
      %v858 = vrot.slane %v857, 1
      %v859 = vadd.f32 %v857, %v858
      %v860 = vrcp.pop %v859
      %v861 = vmul.f32 %v849, %v860
      %v862 = vpack.c.bf16 %v861, %v861
      %v864 = vsel %vm597, %v862, 0
      %866 = vmatprep.subr.bf16.mxu0 0
      %867 = vmatpush1.bf16.msra.mxu0 %v435
      %868 = vmatprep.subr.bf16.mxu0 0
      %869 = vmatpush1.bf16.msra.mxu0 %v602
      %870 = vmatprep.subr.bf16.mxu0 0
      %871 = vmatpush1.bf16.msra.mxu0 0
      %872 = vmatprep.subr.bf16.mxu0 0
      %873 = vmatpush1.bf16.msra.mxu0 0
      %874 = vmatprep.subr.bf16.mxu0 0
      %875 = vmatpush1.bf16.msra.mxu0 0
      %876 = vmatprep.subr.bf16.mxu0 0
      %877 = vmatpush1.bf16.msra.mxu0 0
      %878 = vmatprep.subr.bf16.mxu0 0
      %879 = vmatpush1.bf16.msra.mxu0 0
      %880 = vmatprep.subr.bf16.mxu0 0
      %881 = vmatpush1.bf16.msra.mxu0 0
      %882 = vmatprep.subr.bf16.mxu0 0
      %883 = vmatpush1.bf16.msra.mxu0 0
      %884 = vmatprep.subr.bf16.mxu0 0
      %885 = vmatpush1.bf16.msra.mxu0 0
      %886 = vmatprep.subr.bf16.mxu0 0
      %887 = vmatpush1.bf16.msra.mxu0 0
      %888 = vmatprep.subr.bf16.mxu0 0
      %889 = vmatpush1.bf16.msra.mxu0 0
      %890 = vmatprep.subr.bf16.mxu0 0
      %891 = vmatpush1.bf16.msra.mxu0 0
      %892 = vmatprep.subr.bf16.mxu0 0
      %893 = vmatpush1.bf16.msra.mxu0 0
      %894 = vmatprep.subr.bf16.mxu0 0
      %895 = vmatpush1.bf16.msra.mxu0 0
      %896 = vmatprep.subr.bf16.mxu0 0
      %897 = vmatpush1.bf16.msra.mxu0 0
      %898 = vmatprep.mubr.bf16.mxu0 0
      %899 = vmatmul.mubr.bf16.gmra.mrb[0].mxu0 %v864
      %v900 = vpop.f32.mrb[0].mxu0
      %v901 = vadd.f32 0.0, %v900
      %v902 = vpop.f32.mrb[0].mxu0
      %v903 = vpop.f32.mrb[0].mxu0
      %v904 = vpop.f32.mrb[0].mxu0
      %905 = vdwg.mxu0
      %v906 = vmul.f32 %v901, %v718
      %v907 = vsel %vm645, %v906, 0.0
      %v908 = vrot.slane %v907, 4
      %v909 = vadd.f32 %v907, %v908
      %v910 = vrot.slane %v909, 2
      %v911 = vadd.f32 %v909, %v910
      %v912 = vrot.slane %v911, 1
      %v913 = vadd.f32 %v911, %v912
      %v914 = vpack.c.bf16 %v913, %v913
      %s915 = scalar_lea.vmem %s405, 16
      %v916 = vld [vmem:[%s915] sm:$0xf]
      %v917 = vld [vmem:[%s915 + $0x4] sm:$0xf]
      %v918 = vld [vmem:[%s915 + $0x8] sm:$0xf]
      %v919 = vld [vmem:[%s915 + $0xc] sm:$0xf]
      %s920 = scalar_lea.vmem %s409, 1
      %v921 = vld [vmem:[%s920] sm:$0x1]
      %v926 = vunpack.c.l.b16 %v916
      %v927 = vunpack.c.l.b16 %v917
      %v928 = vunpack.c.l.b16 %v918
      %v929 = vunpack.c.l.b16 %v919
      %v930 = vpack.c.b16 %v927, %v926
      %v931 = vpack.c.b16 %v929, %v928
      %v935 = vsel %vm449, %v914, 0
      %937 = vmatprep.subr.bf16.mxu0 0
      %938 = vmatpush1.bf16.msra.mxu0 %v930
      %939 = vmatprep.subr.bf16.mxu0 0
      %940 = vmatpush1.bf16.msra.mxu0 %v931
      %941 = vmatprep.subr.bf16.mxu0 0
      %942 = vmatpush1.bf16.msra.mxu0 0
      %943 = vmatprep.subr.bf16.mxu0 0
      %944 = vmatpush1.bf16.msra.mxu0 0
      %945 = vmatprep.subr.bf16.mxu0 0
      %946 = vmatpush1.bf16.msra.mxu0 0
      %947 = vmatprep.subr.bf16.mxu0 0
      %948 = vmatpush1.bf16.msra.mxu0 0
      %949 = vmatprep.subr.bf16.mxu0 0
      %950 = vmatpush1.bf16.msra.mxu0 0
      %951 = vmatprep.subr.bf16.mxu0 0
      %952 = vmatpush1.bf16.msra.mxu0 0
      %953 = vmatprep.subr.bf16.mxu0 0
      %954 = vmatpush1.bf16.msra.mxu0 0
      %955 = vmatprep.subr.bf16.mxu0 0
      %956 = vmatpush1.bf16.msra.mxu0 0
      %957 = vmatprep.subr.bf16.mxu0 0
      %958 = vmatpush1.bf16.msra.mxu0 0
      %959 = vmatprep.subr.bf16.mxu0 0
      %960 = vmatpush1.bf16.msra.mxu0 0
      %961 = vmatprep.subr.bf16.mxu0 0
      %962 = vmatpush1.bf16.msra.mxu0 0
      %963 = vmatprep.subr.bf16.mxu0 0
      %964 = vmatpush1.bf16.msra.mxu0 0
      %965 = vmatprep.subr.bf16.mxu0 0
      %966 = vmatpush1.bf16.msra.mxu0 0
      %967 = vmatprep.subr.bf16.mxu0 0
      %968 = vmatpush1.bf16.msra.mxu0 0
      %969 = vmatprep.mubr.bf16.mxu0 0
      %970 = vmatmul.mubr.bf16.gmra.mrb[0].mxu0 %v935
      %v971 = vpop.f32.mrb[0].mxu0
      %v972 = vadd.f32 %v921, %v971
      %v973 = vpop.f32.mrb[0].mxu0
      %v974 = vpop.f32.mrb[0].mxu0
      %v975 = vpop.f32.mrb[0].mxu0
      %976 = vdwg.mxu0
      %v977 = vlaneseq
      %v978 = vshrl.u32 %v977, 7
      %v979 = vsub.s32 0, %v978
      %v980 = vrot.slane %v972, %v979
      %v981 = vadd.f32 %v718, %v980
      %s982 = scalar_lea.vmem %s400, 32
      %v983 = vld [vmem:[%s982] sm:$0xf]
      %v984 = vld [vmem:[%s982 + $0x4] sm:$0xf]
      %v985 = vld [vmem:[%s982 + $0x8] sm:$0xf]
      %v986 = vld [vmem:[%s982 + $0xc] sm:$0xf]
      %v991 = vunpack.c.l.b16 %v983
      %v992 = vunpack.c.l.b16 %v984
      %v993 = vunpack.c.l.b16 %v985
      %v994 = vunpack.c.l.b16 %v986
      %v995 = vpack.c.b16 %v992, %v991
      %v996 = vpack.c.b16 %v994, %v993
      %999 = vmatprep.subr.bf16.mxu0 0
      %1000 = vmatpush1.bf16.msra.mxu0 %v995
      %1001 = vmatprep.subr.bf16.mxu0 0
      %1002 = vmatpush1.bf16.msra.mxu0 %v996
      %1003 = vmatprep.subr.bf16.mxu0 0
      %1004 = vmatpush1.bf16.msra.mxu0 0
      %1005 = vmatprep.subr.bf16.mxu0 0
      %1006 = vmatpush1.bf16.msra.mxu0 0
      %1007 = vmatprep.subr.bf16.mxu0 0
      %1008 = vmatpush1.bf16.msra.mxu0 0
      %1009 = vmatprep.subr.bf16.mxu0 0
      %1010 = vmatpush1.bf16.msra.mxu0 0
      %1011 = vmatprep.subr.bf16.mxu0 0
      %1012 = vmatpush1.bf16.msra.mxu0 0
      %1013 = vmatprep.subr.bf16.mxu0 0
      %1014 = vmatpush1.bf16.msra.mxu0 0
      %1015 = vmatprep.subr.bf16.mxu0 0
      %1016 = vmatpush1.bf16.msra.mxu0 0
      %1017 = vmatprep.subr.bf16.mxu0 0
      %1018 = vmatpush1.bf16.msra.mxu0 0
      %1019 = vmatprep.subr.bf16.mxu0 0
      %1020 = vmatpush1.bf16.msra.mxu0 0
      %1021 = vmatprep.subr.bf16.mxu0 0
      %1022 = vmatpush1.bf16.msra.mxu0 0
      %1023 = vmatprep.subr.bf16.mxu0 0
      %1024 = vmatpush1.bf16.msra.mxu0 0
      %1025 = vmatprep.subr.bf16.mxu0 0
      %1026 = vmatpush1.bf16.msra.mxu0 0
      %1027 = vmatprep.subr.bf16.mxu0 0
      %1028 = vmatpush1.bf16.msra.mxu0 0
      %1029 = vmatprep.subr.bf16.mxu0 0
      %1030 = vmatpush1.bf16.msra.mxu0 0
      %1031 = vmatprep.mubr.bf16.mxu0 0
      %1032 = vmatmul.mubr.bf16.gmra.mrb[0].mxu0 %v451
      %v1033 = vpop.f32.mrb[0].mxu0
      %v1034 = vadd.f32 0.0, %v1033
      %v1035 = vpop.f32.mrb[0].mxu0
      %v1036 = vpop.f32.mrb[0].mxu0
      %v1037 = vadd.f32 0.0, %v1036
      %v1038 = vpop.f32.mrb[0].mxu0
      %1039 = vmatprep.mubr.bf16.mxu0 0
      %1040 = vmatmul.mubr.bf16.gmra.mrb[0].mxu0 %v454
      %v1041 = vpop.f32.mrb[0].mxu0
      %v1042 = vadd.f32 0.0, %v1041
      %v1043 = vpop.f32.mrb[0].mxu0
      %v1044 = vpop.f32.mrb[0].mxu0
      %v1045 = vpop.f32.mrb[0].mxu0
      %1046 = vdwg.mxu0
      %v1047 = vpack.c.bf16 %v981, %v981
      %v1048 = vpack.c.bf16 %v1037, %v1034
      %v1049 = vpack.c.bf16 %v1042, %v1042
      %v1051 = vsel %vm449, %v1047, 0
      %v1054 = vsel %vm449, %v1048, 0
      %v1057 = vsel %vm449, %v1049, 0
      %1059 = vmatprep.subr.bf16.mxu0 0
      %1060 = vmatpush1.bf16.xpose.msra.mxu0 %v1054
      %1061 = vmatprep.subr.bf16.mxu0 0
      %1062 = vmatpush1.bf16.xpose.msra.mxu0 %v1057
      %1063 = vmatprep.subr.bf16.mxu0 0
      %1064 = vmatpush1.bf16.xpose.msra.mxu0 0
      %1065 = vmatprep.subr.bf16.mxu0 0
      %1066 = vmatpush1.bf16.xpose.msra.mxu0 0
      %1067 = vmatprep.subr.bf16.mxu0 0
      %1068 = vmatpush1.bf16.xpose.msra.mxu0 0
      %1069 = vmatprep.subr.bf16.mxu0 0
      %1070 = vmatpush1.bf16.xpose.msra.mxu0 0
      %1071 = vmatprep.subr.bf16.mxu0 0
      %1072 = vmatpush1.bf16.xpose.msra.mxu0 0
      %1073 = vmatprep.subr.bf16.mxu0 0
      %1074 = vmatpush1.bf16.xpose.msra.mxu0 0
      %1075 = vmatprep.subr.bf16.mxu0 0
      %1076 = vmatpush1.bf16.xpose.msra.mxu0 0
      %1077 = vmatprep.subr.bf16.mxu0 0
      %1078 = vmatpush1.bf16.xpose.msra.mxu0 0
      %1079 = vmatprep.subr.bf16.mxu0 0
      %1080 = vmatpush1.bf16.xpose.msra.mxu0 0
      %1081 = vmatprep.subr.bf16.mxu0 0
      %1082 = vmatpush1.bf16.xpose.msra.mxu0 0
      %1083 = vmatprep.subr.bf16.mxu0 0
      %1084 = vmatpush1.bf16.xpose.msra.mxu0 0
      %1085 = vmatprep.subr.bf16.mxu0 0
      %1086 = vmatpush1.bf16.xpose.msra.mxu0 0
      %1087 = vmatprep.subr.bf16.mxu0 0
      %1088 = vmatpush1.bf16.xpose.msra.mxu0 0
      %1089 = vmatprep.subr.bf16.mxu0 0
      %1090 = vmatpush1.bf16.xpose.msra.mxu0 0
      %1091 = vmatprep.mubr.bf16.mxu0 0
      %1092 = vmatmul.mubr.bf16.gmra.mrb[0].mxu0 %v1051
      %v1093 = vpop.f32.mrb[0].mxu0
      %v1094 = vadd.f32 %v510, %v1093
      %v1095 = vpop.f32.mrb[0].mxu0
      %v1096 = vpop.f32.mrb[0].mxu0
      %v1097 = vpop.f32.mrb[0].mxu0
      %1098 = vdwg.mxu0
      %v1099 = vadd.f32 %v1094, %v565
      %v1100 = vsel %vm568, %v1099, -inf
      %1101 = vmax.xlane.f32.xlu0 %v1100
      %v1102 = vpop.xlane.xlu0 %1101
      %v1103 = vsel %vm572, %v1102, -inf
      %v1104 = vrot.slane %v1103, 4
      %v1105 = vmax.f32 %v1103, %v1104
      %v1106 = vrot.slane %v1105, 2
      %v1107 = vmax.f32 %v1105, %v1106
      %v1108 = vrot.slane %v1107, 1
      %v1109 = vmax.f32 %v1107, %v1108
      %v1110 = vsub.f32 %v1099, %v1109
      %v1111 = vmul.f32 %v1110, 1.442695
      %v1112 = vpow.pop %v1111
      %v1113 = vsel %vm568, %v1112, 0.0
      %1114 = vadd.xlane.f32.xlu0 %v1113
      %v1115 = vpop.xlane.xlu0 %1114
      %v1116 = vsel %vm572, %v1115, 0.0
      %v1117 = vrot.slane %v1116, 4
      %v1118 = vadd.f32 %v1116, %v1117
      %v1119 = vrot.slane %v1118, 2
      %v1120 = vadd.f32 %v1118, %v1119
      %v1121 = vrot.slane %v1120, 1
      %v1122 = vadd.f32 %v1120, %v1121
      %v1123 = vrcp.pop %v1122
      %v1124 = vmul.f32 %v1112, %v1123
      %v1125 = vpack.c.bf16 %v1124, %v1124
      %v1127 = vsel %vm597, %v1125, 0
      %1129 = vmatprep.subr.bf16.mxu0 0
      %1130 = vmatpush1.bf16.msra.mxu0 %v435
      %1131 = vmatprep.subr.bf16.mxu0 0
      %1132 = vmatpush1.bf16.msra.mxu0 %v602
      %1133 = vmatprep.subr.bf16.mxu0 0
      %1134 = vmatpush1.bf16.msra.mxu0 0
      %1135 = vmatprep.subr.bf16.mxu0 0
      %1136 = vmatpush1.bf16.msra.mxu0 0
      %1137 = vmatprep.subr.bf16.mxu0 0
      %1138 = vmatpush1.bf16.msra.mxu0 0
      %1139 = vmatprep.subr.bf16.mxu0 0
      %1140 = vmatpush1.bf16.msra.mxu0 0
      %1141 = vmatprep.subr.bf16.mxu0 0
      %1142 = vmatpush1.bf16.msra.mxu0 0
      %1143 = vmatprep.subr.bf16.mxu0 0
      %1144 = vmatpush1.bf16.msra.mxu0 0
      %1145 = vmatprep.subr.bf16.mxu0 0
      %1146 = vmatpush1.bf16.msra.mxu0 0
      %1147 = vmatprep.subr.bf16.mxu0 0
      %1148 = vmatpush1.bf16.msra.mxu0 0
      %1149 = vmatprep.subr.bf16.mxu0 0
      %1150 = vmatpush1.bf16.msra.mxu0 0
      %1151 = vmatprep.subr.bf16.mxu0 0
      %1152 = vmatpush1.bf16.msra.mxu0 0
      %1153 = vmatprep.subr.bf16.mxu0 0
      %1154 = vmatpush1.bf16.msra.mxu0 0
      %1155 = vmatprep.subr.bf16.mxu0 0
      %1156 = vmatpush1.bf16.msra.mxu0 0
      %1157 = vmatprep.subr.bf16.mxu0 0
      %1158 = vmatpush1.bf16.msra.mxu0 0
      %1159 = vmatprep.subr.bf16.mxu0 0
      %1160 = vmatpush1.bf16.msra.mxu0 0
      %1161 = vmatprep.mubr.bf16.mxu0 0
      %1162 = vmatmul.mubr.bf16.gmra.mrb[0].mxu0 %v1127
      %v1163 = vpop.f32.mrb[0].mxu0
      %v1164 = vadd.f32 0.0, %v1163
      %v1165 = vpop.f32.mrb[0].mxu0
      %v1166 = vpop.f32.mrb[0].mxu0
      %v1167 = vpop.f32.mrb[0].mxu0
      %1168 = vdwg.mxu0
      %v1169 = vmul.f32 %v1164, %v981
      %v1170 = vsel %vm645, %v1169, 0.0
      %v1171 = vrot.slane %v1170, 4
      %v1172 = vadd.f32 %v1170, %v1171
      %v1173 = vrot.slane %v1172, 2
      %v1174 = vadd.f32 %v1172, %v1173
      %v1175 = vrot.slane %v1174, 1
      %v1176 = vadd.f32 %v1174, %v1175
      %v1177 = vpack.c.bf16 %v1176, %v1176
      %s1178 = scalar_lea.vmem %s405, 32
      %v1179 = vld [vmem:[%s1178] sm:$0xf]
      %v1180 = vld [vmem:[%s1178 + $0x4] sm:$0xf]
      %v1181 = vld [vmem:[%s1178 + $0x8] sm:$0xf]
      %v1182 = vld [vmem:[%s1178 + $0xc] sm:$0xf]
      %s1183 = scalar_lea.vmem %s409, 2
      %v1184 = vld [vmem:[%s1183] sm:$0x1]
      %v1189 = vunpack.c.l.b16 %v1179
      %v1190 = vunpack.c.l.b16 %v1180
      %v1191 = vunpack.c.l.b16 %v1181
      %v1192 = vunpack.c.l.b16 %v1182
      %v1193 = vpack.c.b16 %v1190, %v1189
      %v1194 = vpack.c.b16 %v1192, %v1191
      %v1198 = vsel %vm449, %v1177, 0
      %1200 = vmatprep.subr.bf16.mxu0 0
      %1201 = vmatpush1.bf16.msra.mxu0 %v1193
      %1202 = vmatprep.subr.bf16.mxu0 0
      %1203 = vmatpush1.bf16.msra.mxu0 %v1194
      %1204 = vmatprep.subr.bf16.mxu0 0
      %1205 = vmatpush1.bf16.msra.mxu0 0
      %1206 = vmatprep.subr.bf16.mxu0 0
      %1207 = vmatpush1.bf16.msra.mxu0 0
      %1208 = vmatprep.subr.bf16.mxu0 0
      %1209 = vmatpush1.bf16.msra.mxu0 0
      %1210 = vmatprep.subr.bf16.mxu0 0
      %1211 = vmatpush1.bf16.msra.mxu0 0
      %1212 = vmatprep.subr.bf16.mxu0 0
      %1213 = vmatpush1.bf16.msra.mxu0 0
      %1214 = vmatprep.subr.bf16.mxu0 0
      %1215 = vmatpush1.bf16.msra.mxu0 0
      %1216 = vmatprep.subr.bf16.mxu0 0
      %1217 = vmatpush1.bf16.msra.mxu0 0
      %1218 = vmatprep.subr.bf16.mxu0 0
      %1219 = vmatpush1.bf16.msra.mxu0 0
      %1220 = vmatprep.subr.bf16.mxu0 0
      %1221 = vmatpush1.bf16.msra.mxu0 0
      %1222 = vmatprep.subr.bf16.mxu0 0
      %1223 = vmatpush1.bf16.msra.mxu0 0
      %1224 = vmatprep.subr.bf16.mxu0 0
      %1225 = vmatpush1.bf16.msra.mxu0 0
      %1226 = vmatprep.subr.bf16.mxu0 0
      %1227 = vmatpush1.bf16.msra.mxu0 0
      %1228 = vmatprep.subr.bf16.mxu0 0
      %1229 = vmatpush1.bf16.msra.mxu0 0
      %1230 = vmatprep.subr.bf16.mxu0 0
      %1231 = vmatpush1.bf16.msra.mxu0 0
      %1232 = vmatprep.mubr.bf16.mxu0 0
      %1233 = vmatmul.mubr.bf16.gmra.mrb[0].mxu0 %v1198
      %v1234 = vpop.f32.mrb[0].mxu0
      %v1235 = vadd.f32 %v1184, %v1234
      %v1236 = vpop.f32.mrb[0].mxu0
      %v1237 = vpop.f32.mrb[0].mxu0
      %v1238 = vpop.f32.mrb[0].mxu0
      %1239 = vdwg.mxu0
      %v1240 = vlaneseq
      %v1241 = vshrl.u32 %v1240, 7
      %v1242 = vsub.s32 0, %v1241
      %v1243 = vrot.slane %v1235, %v1242
      %v1244 = vadd.f32 %v981, %v1243
      %s1245 = scalar_lea.vmem %s400, 48
      %v1246 = vld [vmem:[%s1245] sm:$0xf]
      %v1247 = vld [vmem:[%s1245 + $0x4] sm:$0xf]
      %v1248 = vld [vmem:[%s1245 + $0x8] sm:$0xf]
      %v1249 = vld [vmem:[%s1245 + $0xc] sm:$0xf]
      %v1254 = vunpack.c.l.b16 %v1246
      %v1255 = vunpack.c.l.b16 %v1247
      %v1256 = vunpack.c.l.b16 %v1248
      %v1257 = vunpack.c.l.b16 %v1249
      %v1258 = vpack.c.b16 %v1255, %v1254
      %v1259 = vpack.c.b16 %v1257, %v1256
      %1262 = vmatprep.subr.bf16.mxu0 0
      %1263 = vmatpush1.bf16.msra.mxu0 %v1258
      %1264 = vmatprep.subr.bf16.mxu0 0
      %1265 = vmatpush1.bf16.msra.mxu0 %v1259
      %1266 = vmatprep.subr.bf16.mxu0 0
      %1267 = vmatpush1.bf16.msra.mxu0 0
      %1268 = vmatprep.subr.bf16.mxu0 0
      %1269 = vmatpush1.bf16.msra.mxu0 0
      %1270 = vmatprep.subr.bf16.mxu0 0
      %1271 = vmatpush1.bf16.msra.mxu0 0
      %1272 = vmatprep.subr.bf16.mxu0 0
      %1273 = vmatpush1.bf16.msra.mxu0 0
      %1274 = vmatprep.subr.bf16.mxu0 0
      %1275 = vmatpush1.bf16.msra.mxu0 0
      %1276 = vmatprep.subr.bf16.mxu0 0
      %1277 = vmatpush1.bf16.msra.mxu0 0
      %1278 = vmatprep.subr.bf16.mxu0 0
      %1279 = vmatpush1.bf16.msra.mxu0 0
      %1280 = vmatprep.subr.bf16.mxu0 0
      %1281 = vmatpush1.bf16.msra.mxu0 0
      %1282 = vmatprep.subr.bf16.mxu0 0
      %1283 = vmatpush1.bf16.msra.mxu0 0
      %1284 = vmatprep.subr.bf16.mxu0 0
      %1285 = vmatpush1.bf16.msra.mxu0 0
      %1286 = vmatprep.subr.bf16.mxu0 0
      %1287 = vmatpush1.bf16.msra.mxu0 0
      %1288 = vmatprep.subr.bf16.mxu0 0
      %1289 = vmatpush1.bf16.msra.mxu0 0
      %1290 = vmatprep.subr.bf16.mxu0 0
      %1291 = vmatpush1.bf16.msra.mxu0 0
      %1292 = vmatprep.subr.bf16.mxu0 0
      %1293 = vmatpush1.bf16.msra.mxu0 0
      %1294 = vmatprep.mubr.bf16.mxu0 0
      %1295 = vmatmul.mubr.bf16.gmra.mrb[0].mxu0 %v451
      %v1296 = vpop.f32.mrb[0].mxu0
      %v1297 = vadd.f32 0.0, %v1296
      %v1298 = vpop.f32.mrb[0].mxu0
      %v1299 = vpop.f32.mrb[0].mxu0
      %v1300 = vadd.f32 0.0, %v1299
      %v1301 = vpop.f32.mrb[0].mxu0
      %1302 = vmatprep.mubr.bf16.mxu0 0
      %1303 = vmatmul.mubr.bf16.gmra.mrb[0].mxu0 %v454
      %v1304 = vpop.f32.mrb[0].mxu0
      %v1305 = vadd.f32 0.0, %v1304
      %v1306 = vpop.f32.mrb[0].mxu0
      %v1307 = vpop.f32.mrb[0].mxu0
      %v1308 = vpop.f32.mrb[0].mxu0
      %1309 = vdwg.mxu0
      %v1310 = vpack.c.bf16 %v1244, %v1244
      %v1311 = vpack.c.bf16 %v1300, %v1297
      %v1312 = vpack.c.bf16 %v1305, %v1305
      %v1314 = vsel %vm449, %v1310, 0
      %v1317 = vsel %vm449, %v1311, 0
      %v1320 = vsel %vm449, %v1312, 0
      %1322 = vmatprep.subr.bf16.mxu0 0
      %1323 = vmatpush1.bf16.xpose.msra.mxu0 %v1317
      %1324 = vmatprep.subr.bf16.mxu0 0
      %1325 = vmatpush1.bf16.xpose.msra.mxu0 %v1320
      %1326 = vmatprep.subr.bf16.mxu0 0
      %1327 = vmatpush1.bf16.xpose.msra.mxu0 0
      %1328 = vmatprep.subr.bf16.mxu0 0
      %1329 = vmatpush1.bf16.xpose.msra.mxu0 0
      %1330 = vmatprep.subr.bf16.mxu0 0
      %1331 = vmatpush1.bf16.xpose.msra.mxu0 0
      %1332 = vmatprep.subr.bf16.mxu0 0
      %1333 = vmatpush1.bf16.xpose.msra.mxu0 0
      %1334 = vmatprep.subr.bf16.mxu0 0
      %1335 = vmatpush1.bf16.xpose.msra.mxu0 0
      %1336 = vmatprep.subr.bf16.mxu0 0
      %1337 = vmatpush1.bf16.xpose.msra.mxu0 0
      %1338 = vmatprep.subr.bf16.mxu0 0
      %1339 = vmatpush1.bf16.xpose.msra.mxu0 0
      %1340 = vmatprep.subr.bf16.mxu0 0
      %1341 = vmatpush1.bf16.xpose.msra.mxu0 0
      %1342 = vmatprep.subr.bf16.mxu0 0
      %1343 = vmatpush1.bf16.xpose.msra.mxu0 0
      %1344 = vmatprep.subr.bf16.mxu0 0
      %1345 = vmatpush1.bf16.xpose.msra.mxu0 0
      %1346 = vmatprep.subr.bf16.mxu0 0
      %1347 = vmatpush1.bf16.xpose.msra.mxu0 0
      %1348 = vmatprep.subr.bf16.mxu0 0
      %1349 = vmatpush1.bf16.xpose.msra.mxu0 0
      %1350 = vmatprep.subr.bf16.mxu0 0
      %1351 = vmatpush1.bf16.xpose.msra.mxu0 0
      %1352 = vmatprep.subr.bf16.mxu0 0
      %1353 = vmatpush1.bf16.xpose.msra.mxu0 0
      %1354 = vmatprep.mubr.bf16.mxu0 0
      %1355 = vmatmul.mubr.bf16.gmra.mrb[0].mxu0 %v1314
      %v1356 = vpop.f32.mrb[0].mxu0
      %v1357 = vadd.f32 %v510, %v1356
      %v1358 = vpop.f32.mrb[0].mxu0
      %v1359 = vpop.f32.mrb[0].mxu0
      %v1360 = vpop.f32.mrb[0].mxu0
      %1361 = vdwg.mxu0
      %v1362 = vadd.f32 %v1357, %v565
      %v1363 = vsel %vm568, %v1362, -inf
      %1364 = vmax.xlane.f32.xlu0 %v1363
      %v1365 = vpop.xlane.xlu0 %1364
      %v1366 = vsel %vm572, %v1365, -inf
      %v1367 = vrot.slane %v1366, 4
      %v1368 = vmax.f32 %v1366, %v1367
      %v1369 = vrot.slane %v1368, 2
      %v1370 = vmax.f32 %v1368, %v1369
      %v1371 = vrot.slane %v1370, 1
      %v1372 = vmax.f32 %v1370, %v1371
      %v1373 = vsub.f32 %v1362, %v1372
      %v1374 = vmul.f32 %v1373, 1.442695
      %v1375 = vpow.pop %v1374
      %v1376 = vsel %vm568, %v1375, 0.0
      %1377 = vadd.xlane.f32.xlu0 %v1376
      %v1378 = vpop.xlane.xlu0 %1377
      %v1379 = vsel %vm572, %v1378, 0.0
      %v1380 = vrot.slane %v1379, 4
      %v1381 = vadd.f32 %v1379, %v1380
      %v1382 = vrot.slane %v1381, 2
      %v1383 = vadd.f32 %v1381, %v1382
      %v1384 = vrot.slane %v1383, 1
      %v1385 = vadd.f32 %v1383, %v1384
      %v1386 = vrcp.pop %v1385
      %v1387 = vmul.f32 %v1375, %v1386
      %v1388 = vpack.c.bf16 %v1387, %v1387
      %v1390 = vsel %vm597, %v1388, 0
      %1392 = vmatprep.subr.bf16.mxu0 0
      %1393 = vmatpush1.bf16.msra.mxu0 %v435
      %1394 = vmatprep.subr.bf16.mxu0 0
      %1395 = vmatpush1.bf16.msra.mxu0 %v602
      %1396 = vmatprep.subr.bf16.mxu0 0
      %1397 = vmatpush1.bf16.msra.mxu0 0
      %1398 = vmatprep.subr.bf16.mxu0 0
      %1399 = vmatpush1.bf16.msra.mxu0 0
      %1400 = vmatprep.subr.bf16.mxu0 0
      %1401 = vmatpush1.bf16.msra.mxu0 0
      %1402 = vmatprep.subr.bf16.mxu0 0
      %1403 = vmatpush1.bf16.msra.mxu0 0
      %1404 = vmatprep.subr.bf16.mxu0 0
      %1405 = vmatpush1.bf16.msra.mxu0 0
      %1406 = vmatprep.subr.bf16.mxu0 0
      %1407 = vmatpush1.bf16.msra.mxu0 0
      %1408 = vmatprep.subr.bf16.mxu0 0
      %1409 = vmatpush1.bf16.msra.mxu0 0
      %1410 = vmatprep.subr.bf16.mxu0 0
      %1411 = vmatpush1.bf16.msra.mxu0 0
      %1412 = vmatprep.subr.bf16.mxu0 0
      %1413 = vmatpush1.bf16.msra.mxu0 0
      %1414 = vmatprep.subr.bf16.mxu0 0
      %1415 = vmatpush1.bf16.msra.mxu0 0
      %1416 = vmatprep.subr.bf16.mxu0 0
      %1417 = vmatpush1.bf16.msra.mxu0 0
      %1418 = vmatprep.subr.bf16.mxu0 0
      %1419 = vmatpush1.bf16.msra.mxu0 0
      %1420 = vmatprep.subr.bf16.mxu0 0
      %1421 = vmatpush1.bf16.msra.mxu0 0
      %1422 = vmatprep.subr.bf16.mxu0 0
      %1423 = vmatpush1.bf16.msra.mxu0 0
      %1424 = vmatprep.mubr.bf16.mxu0 0
      %1425 = vmatmul.mubr.bf16.gmra.mrb[0].mxu0 %v1390
      %v1426 = vpop.f32.mrb[0].mxu0
      %v1427 = vadd.f32 0.0, %v1426
      %v1428 = vpop.f32.mrb[0].mxu0
      %v1429 = vpop.f32.mrb[0].mxu0
      %v1430 = vpop.f32.mrb[0].mxu0
      %1431 = vdwg.mxu0
      %v1432 = vmul.f32 %v1427, %v1244
      %v1433 = vsel %vm645, %v1432, 0.0
      %v1434 = vrot.slane %v1433, 4
      %v1435 = vadd.f32 %v1433, %v1434
      %v1436 = vrot.slane %v1435, 2
      %v1437 = vadd.f32 %v1435, %v1436
      %v1438 = vrot.slane %v1437, 1
      %v1439 = vadd.f32 %v1437, %v1438
      %v1440 = vpack.c.bf16 %v1439, %v1439
      %s1441 = scalar_lea.vmem %s405, 48
      %v1442 = vld [vmem:[%s1441] sm:$0xf]
      %v1443 = vld [vmem:[%s1441 + $0x4] sm:$0xf]
      %v1444 = vld [vmem:[%s1441 + $0x8] sm:$0xf]
      %v1445 = vld [vmem:[%s1441 + $0xc] sm:$0xf]
      %s1446 = scalar_lea.vmem %s409, 3
      %v1447 = vld [vmem:[%s1446] sm:$0x1]
      %v1452 = vunpack.c.l.b16 %v1442
      %v1453 = vunpack.c.l.b16 %v1443
      %v1454 = vunpack.c.l.b16 %v1444
      %v1455 = vunpack.c.l.b16 %v1445
      %v1456 = vpack.c.b16 %v1453, %v1452
      %v1457 = vpack.c.b16 %v1455, %v1454
      %v1461 = vsel %vm449, %v1440, 0
      %1463 = vmatprep.subr.bf16.mxu0 0
      %1464 = vmatpush1.bf16.msra.mxu0 %v1456
      %1465 = vmatprep.subr.bf16.mxu0 0
      %1466 = vmatpush1.bf16.msra.mxu0 %v1457
      %1467 = vmatprep.subr.bf16.mxu0 0
      %1468 = vmatpush1.bf16.msra.mxu0 0
      %1469 = vmatprep.subr.bf16.mxu0 0
      %1470 = vmatpush1.bf16.msra.mxu0 0
      %1471 = vmatprep.subr.bf16.mxu0 0
      %1472 = vmatpush1.bf16.msra.mxu0 0
      %1473 = vmatprep.subr.bf16.mxu0 0
      %1474 = vmatpush1.bf16.msra.mxu0 0
      %1475 = vmatprep.subr.bf16.mxu0 0
      %1476 = vmatpush1.bf16.msra.mxu0 0
      %1477 = vmatprep.subr.bf16.mxu0 0
      %1478 = vmatpush1.bf16.msra.mxu0 0
      %1479 = vmatprep.subr.bf16.mxu0 0
      %1480 = vmatpush1.bf16.msra.mxu0 0
      %1481 = vmatprep.subr.bf16.mxu0 0
      %1482 = vmatpush1.bf16.msra.mxu0 0
      %1483 = vmatprep.subr.bf16.mxu0 0
      %1484 = vmatpush1.bf16.msra.mxu0 0
      %1485 = vmatprep.subr.bf16.mxu0 0
      %1486 = vmatpush1.bf16.msra.mxu0 0
      %1487 = vmatprep.subr.bf16.mxu0 0
      %1488 = vmatpush1.bf16.msra.mxu0 0
      %1489 = vmatprep.subr.bf16.mxu0 0
      %1490 = vmatpush1.bf16.msra.mxu0 0
      %1491 = vmatprep.subr.bf16.mxu0 0
      %1492 = vmatpush1.bf16.msra.mxu0 0
      %1493 = vmatprep.subr.bf16.mxu0 0
      %1494 = vmatpush1.bf16.msra.mxu0 0
      %1495 = vmatprep.mubr.bf16.mxu0 0
      %1496 = vmatmul.mubr.bf16.gmra.mrb[0].mxu0 %v1461
      %v1497 = vpop.f32.mrb[0].mxu0
      %v1498 = vadd.f32 %v1447, %v1497
      %v1499 = vpop.f32.mrb[0].mxu0
      %v1500 = vpop.f32.mrb[0].mxu0
      %v1501 = vpop.f32.mrb[0].mxu0
      %1502 = vdwg.mxu0
      %v1503 = vlaneseq
      %v1504 = vshrl.u32 %v1503, 7
      %v1505 = vsub.s32 0, %v1504
      %v1506 = vrot.slane %v1498, %v1505
      %v1507 = vadd.f32 %v1244, %v1506
      %1508 = vst.msk [vmem:[%s417] sm:$0x3f] %vm645, %v1507
      %p1509 = scmp.lt.s32.totalorder %s22, 1
      %s1510 = scalar_select %p1509, %s22, 1
      %p1511 = scmp.lt.s32.totalorder %s23, 1
      %s1512 = scalar_select %p1511, %s23, 1
      %s1513 = smul.addr %s1510, 2
      %s1514 = sadd.s32 %s1512, %s1513
      %s1515 = smul.addr %s1514, 8
      %s1516 = scalar_lea.vmem %s7, %s1515
      // Predicated region
      $region49: #{forward_count.29} parent=47 // pred_check
        %p1517 = pneg %p234
      $region50: #{forward_count.29} parent=47 // pred_check_branch
        %1519 = sbr.rel (%p1517) target = $region52
      $region51: #{forward_count.29} parent=47 // pred_region
        _
      $region52: #{forward_count.29} parent=47 // pred_fallthru
        _
    $region48: #{forward_count.29} parent=5 // pred_fallthru
      _
    %p1520 = scmp.le.s32.totalorder 2, %s13
    // Predicated region
    $region53: #{forward_count.29} parent=5 // pred_check
      %p1521 = pneg %p1520
    $region54: #{forward_count.29} parent=5 // pred_check_branch
      %1523 = sbr.rel (%p1521) target = $region56
    $region55: #{forward_count.29} parent=5 // pred_region
      %s1524 = ssub.s32 %s13, 2
      // Predicated region
      $region57: #{forward_count.29} parent=55 // pred_check
        %p1525 = pneg %p240
      $region58: #{forward_count.29} parent=55 // pred_check_branch
        %1527 = sbr.rel (%p1525) target = $region60
      $region59: #{forward_count.29} parent=55 // pred_region
        %p1528 = scmp.lt.s32.totalorder %s24, 1
        %s1529 = scalar_select %p1528, %s24, 1
        %p1530 = scmp.lt.s32.totalorder %s25, 1
        %s1531 = scalar_select %p1530, %s25, 1
        %s1532 = smul.addr %s1529, 2
        %s1533 = sadd.s32 %s1531, %s1532
        %s1534 = smul.addr %s1533, 8
        %s1535 = scalar_lea.vmem %s7, %s1534
      $region60: #{forward_count.29} parent=55 // pred_fallthru
        _
    $region56: #{forward_count.29} parent=5 // pred_fallthru
      _
  $region6: #{forward_count.29} parent=0 // loop_footer
    %s17 = sadd.s32 1, %s13
  $region7: #{forward_count.29} parent=0 // loop_footer_branch
    %12 = sbr.rel target = $region3
  $region8: #{forward_count.29} parent=0 // loop_exit
    _

// kernel: forward_count.32
$region0: #{forward_count.32}
  #allocation0 [shape = 'u32[]', space=smem, size = 0x4, offset = 0x4, fixed_abs, tag = 'smem constant byte address 0x4 - core index']
  #allocation1 [shape = 'u32[144,128]{1,0:T(1,128)}', space=vmem, size = 0x12000, scoped, tag = 'internal scratch']
  #allocation2 [shape = 'f32[24,128]{1,0:T(8,128)}', space=vmem, size = 0x3000, scoped, tag = 'scratch operand']
  %s0 = inlined_call_operand.vmem [shape: bf16[24,128], index: 0, kind: input, shape index: {}]
  %s1 = inlined_call_operand.vmem [shape: bf16[128,128], index: 1, kind: input, shape index: {}]
  %s2 = inlined_call_operand.vmem [shape: f32[1,128], index: 2, kind: input, shape index: {}]
  %s3 = inlined_call_operand.vmem [shape: f32[24,128], index: 3, kind: output, shape index: {}]
  %s4 = sld [smem:[#allocation0]]
  $region30: #{forward_count.32} parent=0
    _
  %s6 = ssub.s32 1, %s4
  %s7 = scalar_select 0, %s6, %s4
  // Predicated region
  $region2: #{forward_count.32} parent=0 // pred_check
    _
  $region3: #{forward_count.32} parent=0 // pred_check_branch
    %9 = sbr.rel (0) target = $region5
  $region4: #{forward_count.32} parent=0 // pred_region
    _
  $region5: #{forward_count.32} parent=0 // pred_fallthru
    _
  // Predicated region
  $region6: #{forward_count.32} parent=0 // pred_check
    _
  $region7: #{forward_count.32} parent=0 // pred_check_branch
    %11 = sbr.rel (0) target = $region9
  $region8: #{forward_count.32} parent=0 // pred_region
    _
  $region9: #{forward_count.32} parent=0 // pred_fallthru
    _
  // Predicated region
  $region10: #{forward_count.32} parent=0 // pred_check
    _
  $region11: #{forward_count.32} parent=0 // pred_check_branch
    %13 = sbr.rel (0) target = $region13
  $region12: #{forward_count.32} parent=0 // pred_region
    _
  $region13: #{forward_count.32} parent=0 // pred_fallthru
    _
  %p15 = scmp.eq.s32.totalorder 0, 0
  // Predicated region
  $region14: #{forward_count.32} parent=0 // pred_check
    %p16 = pneg %p15
  $region15: #{forward_count.32} parent=0 // pred_check_branch
    %18 = sbr.rel (%p16) target = $region17
  $region16: #{forward_count.32} parent=0 // pred_region
    %19 = vst [vmem:[#allocation2] sm:$0xff] 0.0
    %20 = vst [vmem:[#allocation2 + $0x8] sm:$0xff] 0.0
    %21 = vst [vmem:[#allocation2 + $0x10] sm:$0xff] 0.0
  $region17: #{forward_count.32} parent=0 // pred_fallthru
    _
  %v22 = vld [vmem:[#allocation2] sm:$0xff]
  %v23 = vld [vmem:[#allocation2 + $0x8] sm:$0xff]
  %v24 = vld [vmem:[#allocation2 + $0x10] sm:$0xff]
  %v25 = vld [vmem:[%s0] sm:$0xf]
  %v26 = vld [vmem:[%s0 + $0x4] sm:$0xf]
  %v27 = vld [vmem:[%s0 + $0x8] sm:$0xf]
  %v28 = vld [vmem:[%s1] sm:$0xf]
  %v29 = vld [vmem:[%s1 + $0x4] sm:$0xf]
  %v30 = vld [vmem:[%s1 + $0x8] sm:$0xf]
  %v31 = vld [vmem:[%s1 + $0xc] sm:$0xf]
  %v32 = vld [vmem:[%s1 + $0x10] sm:$0xf]
  %v33 = vld [vmem:[%s1 + $0x14] sm:$0xf]
  %v34 = vld [vmem:[%s1 + $0x18] sm:$0xf]
  %v35 = vld [vmem:[%s1 + $0x1c] sm:$0xf]
  %v36 = vld [vmem:[%s1 + $0x20] sm:$0xf]
  %v37 = vld [vmem:[%s1 + $0x24] sm:$0xf]
  %v38 = vld [vmem:[%s1 + $0x28] sm:$0xf]
  %v39 = vld [vmem:[%s1 + $0x2c] sm:$0xf]
  %v40 = vld [vmem:[%s1 + $0x30] sm:$0xf]
  %v41 = vld [vmem:[%s1 + $0x34] sm:$0xf]
  %v42 = vld [vmem:[%s1 + $0x38] sm:$0xf]
  %v43 = vld [vmem:[%s1 + $0x3c] sm:$0xf]
  %v47 = vunpack.c.l.b16 %v25
  %v48 = vunpack.c.l.b16 %v26
  %v49 = vunpack.c.l.b16 %v27
  %v50 = vpack.c.b16 %v48, %v47
  %v51 = vpack.c.b16 %v49, %v49
  %v70 = vunpack.c.l.b16 %v28
  %v71 = vunpack.c.l.b16 %v29
  %v72 = vunpack.c.l.b16 %v30
  %v73 = vunpack.c.l.b16 %v31
  %v74 = vunpack.c.l.b16 %v32
  %v75 = vunpack.c.l.b16 %v33
  %v76 = vunpack.c.l.b16 %v34
  %v77 = vunpack.c.l.b16 %v35
  %v78 = vunpack.c.l.b16 %v36
  %v79 = vunpack.c.l.b16 %v37
  %v80 = vunpack.c.l.b16 %v38
  %v81 = vunpack.c.l.b16 %v39
  %v82 = vunpack.c.l.b16 %v40
  %v83 = vunpack.c.l.b16 %v41
  %v84 = vunpack.c.l.b16 %v42
  %v85 = vunpack.c.l.b16 %v43
  %v86 = vpack.c.b16 %v71, %v70
  %v87 = vpack.c.b16 %v73, %v72
  %v88 = vpack.c.b16 %v75, %v74
  %v89 = vpack.c.b16 %v77, %v76
  %v90 = vpack.c.b16 %v79, %v78
  %v91 = vpack.c.b16 %v81, %v80
  %v92 = vpack.c.b16 %v83, %v82
  %v93 = vpack.c.b16 %v85, %v84
  %102 = vmatprep.subr.bf16.mxu0 0
  %103 = vmatpush1.bf16.msra.mxu0 %v86
  %104 = vmatprep.subr.bf16.mxu0 0
  %105 = vmatpush1.bf16.msra.mxu0 %v87
  %106 = vmatprep.subr.bf16.mxu0 0
  %107 = vmatpush1.bf16.msra.mxu0 %v88
  %108 = vmatprep.subr.bf16.mxu0 0
  %109 = vmatpush1.bf16.msra.mxu0 %v89
  %110 = vmatprep.subr.bf16.mxu0 0
  %111 = vmatpush1.bf16.msra.mxu0 %v90
  %112 = vmatprep.subr.bf16.mxu0 0
  %113 = vmatpush1.bf16.msra.mxu0 %v91
  %114 = vmatprep.subr.bf16.mxu0 0
  %115 = vmatpush1.bf16.msra.mxu0 %v92
  %116 = vmatprep.subr.bf16.mxu0 0
  %117 = vmatpush1.bf16.msra.mxu0 %v93
  %118 = vmatprep.subr.bf16.mxu0 0
  %119 = vmatpush1.bf16.msra.mxu0 0
  %120 = vmatprep.subr.bf16.mxu0 0
  %121 = vmatpush1.bf16.msra.mxu0 0
  %122 = vmatprep.subr.bf16.mxu0 0
  %123 = vmatpush1.bf16.msra.mxu0 0
  %124 = vmatprep.subr.bf16.mxu0 0
  %125 = vmatpush1.bf16.msra.mxu0 0
  %126 = vmatprep.subr.bf16.mxu0 0
  %127 = vmatpush1.bf16.msra.mxu0 0
  %128 = vmatprep.subr.bf16.mxu0 0
  %129 = vmatpush1.bf16.msra.mxu0 0
  %130 = vmatprep.subr.bf16.mxu0 0
  %131 = vmatpush1.bf16.msra.mxu0 0
  %132 = vmatprep.subr.bf16.mxu0 0
  %133 = vmatpush1.bf16.msra.mxu0 0
  %134 = vmatprep.mubr.bf16.mxu0 0
  %135 = vmatmul.mubr.bf16.gmra.mrb[0].mxu0 %v50
  %v136 = vpop.f32.mrb[0].mxu0
  %v137 = vadd.f32 0.0, %v136
  %v138 = vpop.f32.mrb[0].mxu0
  %v139 = vpop.f32.mrb[0].mxu0
  %v140 = vadd.f32 0.0, %v139
  %v141 = vpop.f32.mrb[0].mxu0
  %142 = vmatprep.mubr.bf16.mxu0 0
  %143 = vmatmul.mubr.bf16.gmra.mrb[0].mxu0 %v51
  %v144 = vpop.f32.mrb[0].mxu0
  %v145 = vadd.f32 0.0, %v144
  %v146 = vpop.f32.mrb[0].mxu0
  %v147 = vpop.f32.mrb[0].mxu0
  %v148 = vpop.f32.mrb[0].mxu0
  %149 = vdwg.mxu0
  %v150 = vadd.f32 %v22, %v137
  %v151 = vadd.f32 %v23, %v140
  %v152 = vadd.f32 %v24, %v145
  %153 = vst [vmem:[#allocation2] sm:$0xff] %v150
  %154 = vst [vmem:[#allocation2 + $0x8] sm:$0xff] %v151
  %155 = vst [vmem:[#allocation2 + $0x10] sm:$0xff] %v152
  // Predicated region
  $region18: #{forward_count.32} parent=0 // pred_check
    %p156 = pneg %p15
  $region19: #{forward_count.32} parent=0 // pred_check_branch
    %158 = sbr.rel (%p156) target = $region21
  $region20: #{forward_count.32} parent=0 // pred_region
    %v159 = vld [vmem:[#allocation2] sm:$0xff]
    %v160 = vld [vmem:[#allocation2 + $0x8] sm:$0xff]
    %v161 = vld [vmem:[#allocation2 + $0x10] sm:$0xff]
    %v162 = vld [vmem:[%s2] sm:$0x1]
    %v164 = vlaneseq
    %v165 = vshrl.u32 %v164, 7
    %v166 = vsub.s32 0, %v165
    %v167 = vrot.slane %v162, %v166
    %v169 = vadd.f32 %v159, %v167
    %v170 = vadd.f32 %v160, %v167
    %v171 = vadd.f32 %v161, %v167
    %v172 = vmax.f32 %v169, 0.0
    %v173 = vmax.f32 %v170, 0.0
    %v174 = vmax.f32 %v171, 0.0
    %175 = vst [vmem:[%s3] sm:$0xff] %v172
    %176 = vst [vmem:[%s3 + $0x8] sm:$0xff] %v173
    %177 = vst [vmem:[%s3 + $0x10] sm:$0xff] %v174
  $region21: #{forward_count.32} parent=0 // pred_fallthru
    _
  // Predicated region
  $region22: #{forward_count.32} parent=0 // pred_check
    _
  $region23: #{forward_count.32} parent=0 // pred_check_branch
    %179 = sbr.rel (0) target = $region25
  $region24: #{forward_count.32} parent=0 // pred_region
    _
  $region25: #{forward_count.32} parent=0 // pred_fallthru
    _
  // Predicated region
  $region26: #{forward_count.32} parent=0 // pred_check
    _
  $region27: #{forward_count.32} parent=0 // pred_check_branch
    %181 = sbr.rel (0) target = $region29
  $region28: #{forward_count.32} parent=0 // pred_region
    _
  $region29: #{forward_count.32} parent=0 // pred_fallthru
    _

// kernel: forward_count.31
$region0: #{forward_count.31}
  #allocation0 [shape = 'u32[]', space=smem, size = 0x4, offset = 0x4, fixed_abs, tag = 'smem constant byte address 0x4 - core index']
  #allocation1 [shape = 'u32[144,128]{1,0:T(1,128)}', space=vmem, size = 0x12000, scoped, tag = 'internal scratch']
  %s0 = inlined_call_operand.vmem [shape: bf16[2,12,32], index: 0, kind: input, shape index: {}]
  %s1 = inlined_call_operand.vmem [shape: f32[2,1,32], index: 1, kind: input, shape index: {}]
  %s2 = inlined_call_operand.vmem [shape: f32[2,1,12], index: 2, kind: input, shape index: {}]
  %s3 = inlined_call_operand.vmem [shape: bf16[32,32], index: 3, kind: input, shape index: {}]
  %s4 = inlined_call_operand.vmem [shape: bf16[32,32], index: 4, kind: input, shape index: {}]
  %s5 = inlined_call_operand.vmem [shape: bf16[32,32], index: 5, kind: input, shape index: {}]
  %s6 = inlined_call_operand.vmem [shape: bf16[32,32], index: 6, kind: input, shape index: {}]
  %s7 = inlined_call_operand.vmem [shape: f32[1,32], index: 7, kind: input, shape index: {}]
  %s8 = inlined_call_operand.vmem [shape: f32[2,12,32], index: 8, kind: output, shape index: {}]
  %s9 = sld [smem:[#allocation0]]
  $region65: #{forward_count.31} parent=0
    _
  %s11 = ssub.s32 1, %s9
  %s12 = scalar_select 0, %s11, %s9
  loop: start=0, step=1, limit=4
  $region2: #{forward_count.31} parent=0 // loop_pre_header
    _
  $region3: #{forward_count.31} parent=0 // loop_header
    %s14 = sphi 0, %s18
    %p15 = scmp.ge.s32.totalorder %s14, 4
    %s24 = sphi 0, %s26
    %s27 = sphi 0, %s24
    %s28 = sphi 0, %s27
    %s44 = sphi 0, %s28
    %s50 = sphi 0, %s52
    %s53 = sphi 0, %s50
    %s54 = sphi 0, %s53
    %s70 = sphi 0, %s54
    %s76 = sphi 0, %s78
    %s79 = sphi 0, %s76
    %s80 = sphi 0, %s79
    %s96 = sphi 0, %s80
    %s100 = sphi 0, %s100
    %s102 = sphi 0, %s100
    %s103 = sphi 0, %s102
    %s117 = sphi 0, %s103
    %s121 = sphi 0, %s121
    %s123 = sphi 0, %s121
    %s124 = sphi 0, %s123
    %s138 = sphi 0, %s124
    %s142 = sphi 0, %s142
    %s144 = sphi 0, %s142
    %s145 = sphi 0, %s144
    %s159 = sphi 0, %s145
    %s163 = sphi 0, %s163
    %s165 = sphi 0, %s163
    %s166 = sphi 0, %s165
    %s180 = sphi 0, %s166
    %s184 = sphi 0, %s184
    %s186 = sphi 0, %s184
    %s187 = sphi 0, %s186
    %s201 = sphi 0, %s187
    %s207 = sphi 0, %s209
    %s210 = sphi 0, %s207
    %s211 = sphi 0, %s210
    %s227 = sphi 0, %s211
  $region4: #{forward_count.31} parent=0 // loop_header_branch
    %17 = sbr.rel (%p15) target = $region8
  $region5: #{forward_count.31} parent=0 // loop_body
    %s19 = ssub.s32 %s14, 1
    %s20 = ssub.s32 %s14, 2
    %s21 = sadd.s32 %s14, 1
    %s22 = ssub.s32 %s14, %s21
    %p23 = scmp.eq.s32.totalorder %s22, 0
    %s25 = sadd.s32 %s24, 1
    %s26 = scalar_select %p23, %s24, %s25
    %p29 = pneg %p23
    %p30 = scmp.eq.s32.totalorder %s14, 1
    %p31 = por %p29, %p30
    %p32 = scmp.ne.s32.totalorder %s24, %s27
    %p33 = scmp.eq.s32.totalorder %s14, 0
    %p34 = por %p32, %p33
    %p35 = scmp.ne.s32.totalorder %s24, %s27
    %p36 = scmp.eq.s32.totalorder %s19, 1
    %p37 = por %p35, %p36
    %p38 = scmp.ne.s32.totalorder %s27, %s28
    %p39 = scmp.eq.s32.totalorder %s19, 0
    %p40 = por %p38, %p39
    %p41 = scmp.ne.s32.totalorder %s27, %s28
    %p42 = scmp.eq.s32.totalorder %s20, 1
    %p43 = por %p41, %p42
    %p45 = scmp.ne.s32.totalorder %s28, %s44
    %p46 = scmp.eq.s32.totalorder %s20, 0
    %p47 = por %p45, %p46
    %s48 = ssub.s32 %s14, %s21
    %p49 = scmp.eq.s32.totalorder %s48, 0
    %s51 = sadd.s32 %s50, 1
    %s52 = scalar_select %p49, %s50, %s51
    %p55 = pneg %p49
    %p56 = scmp.eq.s32.totalorder %s14, 1
    %p57 = por %p55, %p56
    %p58 = scmp.ne.s32.totalorder %s50, %s53
    %p59 = scmp.eq.s32.totalorder %s14, 0
    %p60 = por %p58, %p59
    %p61 = scmp.ne.s32.totalorder %s50, %s53
    %p62 = scmp.eq.s32.totalorder %s19, 1
    %p63 = por %p61, %p62
    %p64 = scmp.ne.s32.totalorder %s53, %s54
    %p65 = scmp.eq.s32.totalorder %s19, 0
    %p66 = por %p64, %p65
    %p67 = scmp.ne.s32.totalorder %s53, %s54
    %p68 = scmp.eq.s32.totalorder %s20, 1
    %p69 = por %p67, %p68
    %p71 = scmp.ne.s32.totalorder %s54, %s70
    %p72 = scmp.eq.s32.totalorder %s20, 0
    %p73 = por %p71, %p72
    %s74 = ssub.s32 %s14, %s21
    %p75 = scmp.eq.s32.totalorder %s74, 0
    %s77 = sadd.s32 %s76, 1
    %s78 = scalar_select %p75, %s76, %s77
    %p81 = pneg %p75
    %p82 = scmp.eq.s32.totalorder %s14, 1
    %p83 = por %p81, %p82
    %p84 = scmp.ne.s32.totalorder %s76, %s79
    %p85 = scmp.eq.s32.totalorder %s14, 0
    %p86 = por %p84, %p85
    %p87 = scmp.ne.s32.totalorder %s76, %s79
    %p88 = scmp.eq.s32.totalorder %s19, 1
    %p89 = por %p87, %p88
    %p90 = scmp.ne.s32.totalorder %s79, %s80
    %p91 = scmp.eq.s32.totalorder %s19, 0
    %p92 = por %p90, %p91
    %p93 = scmp.ne.s32.totalorder %s79, %s80
    %p94 = scmp.eq.s32.totalorder %s20, 1
    %p95 = por %p93, %p94
    %p97 = scmp.ne.s32.totalorder %s80, %s96
    %p98 = scmp.eq.s32.totalorder %s20, 0
    %p99 = por %p97, %p98
    %s101 = sadd.s32 %s100, 1
    %p104 = scmp.eq.s32.totalorder %s14, 1
    %p105 = scmp.ne.s32.totalorder %s100, %s102
    %p106 = scmp.eq.s32.totalorder %s14, 0
    %p107 = por %p105, %p106
    %p108 = scmp.ne.s32.totalorder %s100, %s102
    %p109 = scmp.eq.s32.totalorder %s19, 1
    %p110 = por %p108, %p109
    %p111 = scmp.ne.s32.totalorder %s102, %s103
    %p112 = scmp.eq.s32.totalorder %s19, 0
    %p113 = por %p111, %p112
    %p114 = scmp.ne.s32.totalorder %s102, %s103
    %p115 = scmp.eq.s32.totalorder %s20, 1
    %p116 = por %p114, %p115
    %p118 = scmp.ne.s32.totalorder %s103, %s117
    %p119 = scmp.eq.s32.totalorder %s20, 0
    %p120 = por %p118, %p119
    %s122 = sadd.s32 %s121, 1
    %p125 = scmp.eq.s32.totalorder %s14, 1
    %p126 = scmp.ne.s32.totalorder %s121, %s123
    %p127 = scmp.eq.s32.totalorder %s14, 0
    %p128 = por %p126, %p127
    %p129 = scmp.ne.s32.totalorder %s121, %s123
    %p130 = scmp.eq.s32.totalorder %s19, 1
    %p131 = por %p129, %p130
    %p132 = scmp.ne.s32.totalorder %s123, %s124
    %p133 = scmp.eq.s32.totalorder %s19, 0
    %p134 = por %p132, %p133
    %p135 = scmp.ne.s32.totalorder %s123, %s124
    %p136 = scmp.eq.s32.totalorder %s20, 1
    %p137 = por %p135, %p136
    %p139 = scmp.ne.s32.totalorder %s124, %s138
    %p140 = scmp.eq.s32.totalorder %s20, 0
    %p141 = por %p139, %p140
    %s143 = sadd.s32 %s142, 1
    %p146 = scmp.eq.s32.totalorder %s14, 1
    %p147 = scmp.ne.s32.totalorder %s142, %s144
    %p148 = scmp.eq.s32.totalorder %s14, 0
    %p149 = por %p147, %p148
    %p150 = scmp.ne.s32.totalorder %s142, %s144
    %p151 = scmp.eq.s32.totalorder %s19, 1
    %p152 = por %p150, %p151
    %p153 = scmp.ne.s32.totalorder %s144, %s145
    %p154 = scmp.eq.s32.totalorder %s19, 0
    %p155 = por %p153, %p154
    %p156 = scmp.ne.s32.totalorder %s144, %s145
    %p157 = scmp.eq.s32.totalorder %s20, 1
    %p158 = por %p156, %p157
    %p160 = scmp.ne.s32.totalorder %s145, %s159
    %p161 = scmp.eq.s32.totalorder %s20, 0
    %p162 = por %p160, %p161
    %s164 = sadd.s32 %s163, 1
    %p167 = scmp.eq.s32.totalorder %s14, 1
    %p168 = scmp.ne.s32.totalorder %s163, %s165
    %p169 = scmp.eq.s32.totalorder %s14, 0
    %p170 = por %p168, %p169
    %p171 = scmp.ne.s32.totalorder %s163, %s165
    %p172 = scmp.eq.s32.totalorder %s19, 1
    %p173 = por %p171, %p172
    %p174 = scmp.ne.s32.totalorder %s165, %s166
    %p175 = scmp.eq.s32.totalorder %s19, 0
    %p176 = por %p174, %p175
    %p177 = scmp.ne.s32.totalorder %s165, %s166
    %p178 = scmp.eq.s32.totalorder %s20, 1
    %p179 = por %p177, %p178
    %p181 = scmp.ne.s32.totalorder %s166, %s180
    %p182 = scmp.eq.s32.totalorder %s20, 0
    %p183 = por %p181, %p182
    %s185 = sadd.s32 %s184, 1
    %p188 = scmp.eq.s32.totalorder %s14, 1
    %p189 = scmp.ne.s32.totalorder %s184, %s186
    %p190 = scmp.eq.s32.totalorder %s14, 0
    %p191 = por %p189, %p190
    %p192 = scmp.ne.s32.totalorder %s184, %s186
    %p193 = scmp.eq.s32.totalorder %s19, 1
    %p194 = por %p192, %p193
    %p195 = scmp.ne.s32.totalorder %s186, %s187
    %p196 = scmp.eq.s32.totalorder %s19, 0
    %p197 = por %p195, %p196
    %p198 = scmp.ne.s32.totalorder %s186, %s187
    %p199 = scmp.eq.s32.totalorder %s20, 1
    %p200 = por %p198, %p199
    %p202 = scmp.ne.s32.totalorder %s187, %s201
    %p203 = scmp.eq.s32.totalorder %s20, 0
    %p204 = por %p202, %p203
    %s205 = ssub.s32 %s14, %s21
    %p206 = scmp.eq.s32.totalorder %s205, 0
    %s208 = sadd.s32 %s207, 1
    %s209 = scalar_select %p206, %s207, %s208
    %p212 = pneg %p206
    %p213 = scmp.eq.s32.totalorder %s14, 1
    %p214 = por %p212, %p213
    %p215 = scmp.ne.s32.totalorder %s207, %s210
    %p216 = scmp.eq.s32.totalorder %s14, 0
    %p217 = por %p215, %p216
    %p218 = scmp.ne.s32.totalorder %s207, %s210
    %p219 = scmp.eq.s32.totalorder %s19, 1
    %p220 = por %p218, %p219
    %p221 = scmp.ne.s32.totalorder %s210, %s211
    %p222 = scmp.eq.s32.totalorder %s19, 0
    %p223 = por %p221, %p222
    %p224 = scmp.ne.s32.totalorder %s210, %s211
    %p225 = scmp.eq.s32.totalorder %s20, 1
    %p226 = por %p224, %p225
    %p228 = scmp.ne.s32.totalorder %s211, %s227
    %p229 = scmp.eq.s32.totalorder %s20, 0
    %p230 = por %p228, %p229
    %p231 = scmp.le.s32.totalorder 1, %s14
    %p232 = scmp.lt.s32.totalorder %s14, 3
    %p233 = pnand %p231, %p232
    %p234 = pneg %p233
    // Predicated region
    $region9: #{forward_count.31} parent=5 // pred_check
      _
    $region10: #{forward_count.31} parent=5 // pred_check_branch
      %236 = sbr.rel (%p233) target = $region12
    $region11: #{forward_count.31} parent=5 // pred_region
      %s237 = ssub.s32 %s14, 1
      // Predicated region
      $region13: #{forward_count.31} parent=11 // pred_check
        %p238 = pneg %p113
      $region14: #{forward_count.31} parent=11 // pred_check_branch
        %240 = sbr.rel (%p238) target = $region16
      $region15: #{forward_count.31} parent=11 // pred_region
        _
      $region16: #{forward_count.31} parent=11 // pred_fallthru
        _
      // Predicated region
      $region17: #{forward_count.31} parent=11 // pred_check
        %p241 = pneg %p134
      $region18: #{forward_count.31} parent=11 // pred_check_branch
        %243 = sbr.rel (%p241) target = $region20
      $region19: #{forward_count.31} parent=11 // pred_region
        _
      $region20: #{forward_count.31} parent=11 // pred_fallthru
        _
      // Predicated region
      $region21: #{forward_count.31} parent=11 // pred_check
        %p244 = pneg %p155
      $region22: #{forward_count.31} parent=11 // pred_check_branch
        %246 = sbr.rel (%p244) target = $region24
      $region23: #{forward_count.31} parent=11 // pred_region
        _
      $region24: #{forward_count.31} parent=11 // pred_fallthru
        _
      // Predicated region
      $region25: #{forward_count.31} parent=11 // pred_check
        %p247 = pneg %p176
      $region26: #{forward_count.31} parent=11 // pred_check_branch
        %249 = sbr.rel (%p247) target = $region28
      $region27: #{forward_count.31} parent=11 // pred_region
        _
      $region28: #{forward_count.31} parent=11 // pred_fallthru
        _
      // Predicated region
      $region29: #{forward_count.31} parent=11 // pred_check
        %p250 = pneg %p197
      $region30: #{forward_count.31} parent=11 // pred_check_branch
        %252 = sbr.rel (%p250) target = $region32
      $region31: #{forward_count.31} parent=11 // pred_region
        _
      $region32: #{forward_count.31} parent=11 // pred_fallthru
        _
    $region12: #{forward_count.31} parent=5 // pred_fallthru
      _
    %p253 = scmp.lt.s32.totalorder %s14, 2
    // Predicated region
    $region33: #{forward_count.31} parent=5 // pred_check
      %p254 = pneg %p253
    $region34: #{forward_count.31} parent=5 // pred_check_branch
      %256 = sbr.rel (%p254) target = $region36
    $region35: #{forward_count.31} parent=5 // pred_region
      // Predicated region
      $region37: #{forward_count.31} parent=35 // pred_check
        %p257 = pneg %p34
      $region38: #{forward_count.31} parent=35 // pred_check_branch
        %259 = sbr.rel (%p257) target = $region40
      $region39: #{forward_count.31} parent=35 // pred_region
        %p260 = scmp.lt.s32.totalorder %s14, 1
        %s261 = scalar_select %p260, %s14, 1
        %s262 = smul.addr %s261, 2
        %s263 = smul.addr %s262, 4
        %s264 = scalar_lea.vmem %s0, %s263
      $region40: #{forward_count.31} parent=35 // pred_fallthru
        _
      // Predicated region
      $region41: #{forward_count.31} parent=35 // pred_check
        %p265 = pneg %p60
      $region42: #{forward_count.31} parent=35 // pred_check_branch
        %267 = sbr.rel (%p265) target = $region44
      $region43: #{forward_count.31} parent=35 // pred_region
        %p268 = scmp.lt.s32.totalorder %s14, 1
        %s269 = scalar_select %p268, %s14, 1
        %s270 = scalar_lea.vmem %s1, %s269
      $region44: #{forward_count.31} parent=35 // pred_fallthru
        _
      // Predicated region
      $region45: #{forward_count.31} parent=35 // pred_check
        %p271 = pneg %p86
      $region46: #{forward_count.31} parent=35 // pred_check_branch
        %273 = sbr.rel (%p271) target = $region48
      $region47: #{forward_count.31} parent=35 // pred_region
        %p274 = scmp.lt.s32.totalorder %s14, 1
        %s275 = scalar_select %p274, %s14, 1
        %s276 = scalar_lea.vmem %s2, %s275
      $region48: #{forward_count.31} parent=35 // pred_fallthru
        _
    $region36: #{forward_count.31} parent=5 // pred_fallthru
      _
    %p277 = scmp.le.s32.totalorder 1, %s14
    %p278 = scmp.lt.s32.totalorder %s14, 3
    %p279 = pnand %p277, %p278
    %p280 = pneg %p279
    // Predicated region
    $region49: #{forward_count.31} parent=5 // pred_check
      _
    $region50: #{forward_count.31} parent=5 // pred_check_branch
      %282 = sbr.rel (%p279) target = $region52
    $region51: #{forward_count.31} parent=5 // pred_region
      %s283 = ssub.s32 %s14, 1
      %p284 = scmp.lt.s32.totalorder %s19, 1
      %s285 = scalar_select %p284, %s19, 1
      %s286 = smul.addr %s285, 2
      %s287 = smul.addr %s286, 4
      %s288 = scalar_lea.vmem %s0, %s287
      %p289 = pneg %p40
      %p290 = pneg %p37
      %p291 = scmp.lt.s32.totalorder %s19, 1
      %s292 = scalar_select %p291, %s19, 1
      %s293 = scalar_lea.vmem %s1, %s292
      %p294 = pneg %p66
      %p295 = pneg %p63
      %p296 = scmp.lt.s32.totalorder %s19, 1
      %s297 = scalar_select %p296, %s19, 1
      %s298 = scalar_lea.vmem %s2, %s297
      %p299 = pneg %p92
      %p300 = pneg %p89
      %p301 = pneg %p113
      %p302 = pneg %p110
      %p303 = pneg %p134
      %p304 = pneg %p131
      %p305 = pneg %p155
      %p306 = pneg %p152
      %p307 = pneg %p176
      %p308 = pneg %p173
      %p309 = pneg %p197
      %p310 = pneg %p194
      %p311 = pneg %p223
      %p312 = pneg %p220
      %p313 = scmp.lt.s32.totalorder %s19, 1
      %s314 = scalar_select %p313, %s19, 1
      %s315 = smul.addr %s314, 2
      %s316 = smul.addr %s315, 8
      %s317 = scalar_lea.vmem %s8, %s316
      %p318 = scmp.lt.s32.totalorder %s19, 1
      %s319 = scalar_select %p318, %s19, 1
      %s320 = smul.addr %s319, 2
      %s321 = smul.addr %s320, 4
      %s322 = scalar_lea.vmem %s0, %s321
      %p323 = scmp.lt.s32.totalorder %s19, 1
      %s324 = scalar_select %p323, %s19, 1
      %s325 = scalar_lea.vmem %s1, %s324
      %p326 = scmp.lt.s32.totalorder %s19, 1
      %s327 = scalar_select %p326, %s19, 1
      %s328 = scalar_lea.vmem %s2, %s327
      %p329 = scmp.lt.s32.totalorder %s19, 1
      %s330 = scalar_select %p329, %s19, 1
      %s331 = smul.addr %s330, 2
      %s332 = smul.addr %s331, 8
      %s333 = scalar_lea.vmem %s8, %s332
      %v335 = vld [vmem:[%s322] sm:$0xf]
      %v336 = vld [vmem:[%s322 + $0x4] sm:$0x3]
      %v337 = vunpack.c.l.bf16 %v335
      %v338 = vunpack.c.l.bf16 %v336
      %v339 = vld [vmem:[%s325] sm:$0x1]
      %v341 = vlaneseq
      %v342 = vshrl.u32 %v341, 7
      %v343 = vsub.s32 0, %v342
      %v344 = vrot.slane %v339, %v343
      %v346 = vadd.f32 %v337, %v344
      %v347 = vadd.f32 %v338, %v344
      %v348 = vmax.f32 %v346, 0.0
      %v349 = vmax.f32 %v347, 0.0
      %v350 = vpack.c.bf16 %v349, %v348
      %v351 = vld [vmem:[%s3] sm:$0xf]
      %v352 = vld [vmem:[%s3 + $0x4] sm:$0xf]
      %v353 = vld [vmem:[%s3 + $0x8] sm:$0xf]
      %v354 = vld [vmem:[%s3 + $0xc] sm:$0xf]
      %v359 = vunpack.c.l.b16 %v351
      %v360 = vunpack.c.l.b16 %v352
      %v361 = vunpack.c.l.b16 %v353
      %v362 = vunpack.c.l.b16 %v354
      %v363 = vpack.c.b16 %v360, %v359
      %v364 = vpack.c.b16 %v362, %v361
      %vm367 = vcmask 261120
      %v369 = vsel %vm367, %v350, 0
      %371 = vmatprep.subr.bf16.mxu0 0
      %372 = vmatpush1.bf16.msra.mxu0 %v363
      %373 = vmatprep.subr.bf16.mxu0 0
      %374 = vmatpush1.bf16.msra.mxu0 %v364
      %375 = vmatprep.subr.bf16.mxu0 0
      %376 = vmatpush1.bf16.msra.mxu0 0
      %377 = vmatprep.subr.bf16.mxu0 0
      %378 = vmatpush1.bf16.msra.mxu0 0
      %379 = vmatprep.subr.bf16.mxu0 0
      %380 = vmatpush1.bf16.msra.mxu0 0
      %381 = vmatprep.subr.bf16.mxu0 0
      %382 = vmatpush1.bf16.msra.mxu0 0
      %383 = vmatprep.subr.bf16.mxu0 0
      %384 = vmatpush1.bf16.msra.mxu0 0
      %385 = vmatprep.subr.bf16.mxu0 0
      %386 = vmatpush1.bf16.msra.mxu0 0
      %387 = vmatprep.subr.bf16.mxu0 0
      %388 = vmatpush1.bf16.msra.mxu0 0
      %389 = vmatprep.subr.bf16.mxu0 0
      %390 = vmatpush1.bf16.msra.mxu0 0
      %391 = vmatprep.subr.bf16.mxu0 0
      %392 = vmatpush1.bf16.msra.mxu0 0
      %393 = vmatprep.subr.bf16.mxu0 0
      %394 = vmatpush1.bf16.msra.mxu0 0
      %395 = vmatprep.subr.bf16.mxu0 0
      %396 = vmatpush1.bf16.msra.mxu0 0
      %397 = vmatprep.subr.bf16.mxu0 0
      %398 = vmatpush1.bf16.msra.mxu0 0
      %399 = vmatprep.subr.bf16.mxu0 0
      %400 = vmatpush1.bf16.msra.mxu0 0
      %401 = vmatprep.subr.bf16.mxu0 0
      %402 = vmatpush1.bf16.msra.mxu0 0
      %403 = vmatprep.mubr.bf16.mxu0 0
      %404 = vmatmul.mubr.bf16.gmra.mrb[0].mxu0 %v369
      %v405 = vpop.f32.mrb[0].mxu0
      %v406 = vadd.f32 0.0, %v405
      %v407 = vpop.f32.mrb[0].mxu0
      %v408 = vpop.f32.mrb[0].mxu0
      %v409 = vadd.f32 0.0, %v408
      %v410 = vpop.f32.mrb[0].mxu0
      %411 = vdwg.mxu0
      %v412 = vld [vmem:[%s4] sm:$0xf]
      %v413 = vld [vmem:[%s4 + $0x4] sm:$0xf]
      %v414 = vld [vmem:[%s4 + $0x8] sm:$0xf]
      %v415 = vld [vmem:[%s4 + $0xc] sm:$0xf]
      %v420 = vunpack.c.l.b16 %v412
      %v421 = vunpack.c.l.b16 %v413
      %v422 = vunpack.c.l.b16 %v414
      %v423 = vunpack.c.l.b16 %v415
      %v424 = vpack.c.b16 %v421, %v420
      %v425 = vpack.c.b16 %v423, %v422
      %428 = vmatprep.subr.bf16.mxu0 0
      %429 = vmatpush1.bf16.msra.mxu0 %v424
      %430 = vmatprep.subr.bf16.mxu0 0
      %431 = vmatpush1.bf16.msra.mxu0 %v425
      %432 = vmatprep.subr.bf16.mxu0 0
      %433 = vmatpush1.bf16.msra.mxu0 0
      %434 = vmatprep.subr.bf16.mxu0 0
      %435 = vmatpush1.bf16.msra.mxu0 0
      %436 = vmatprep.subr.bf16.mxu0 0
      %437 = vmatpush1.bf16.msra.mxu0 0
      %438 = vmatprep.subr.bf16.mxu0 0
      %439 = vmatpush1.bf16.msra.mxu0 0
      %440 = vmatprep.subr.bf16.mxu0 0
      %441 = vmatpush1.bf16.msra.mxu0 0
      %442 = vmatprep.subr.bf16.mxu0 0
      %443 = vmatpush1.bf16.msra.mxu0 0
      %444 = vmatprep.subr.bf16.mxu0 0
      %445 = vmatpush1.bf16.msra.mxu0 0
      %446 = vmatprep.subr.bf16.mxu0 0
      %447 = vmatpush1.bf16.msra.mxu0 0
      %448 = vmatprep.subr.bf16.mxu0 0
      %449 = vmatpush1.bf16.msra.mxu0 0
      %450 = vmatprep.subr.bf16.mxu0 0
      %451 = vmatpush1.bf16.msra.mxu0 0
      %452 = vmatprep.subr.bf16.mxu0 0
      %453 = vmatpush1.bf16.msra.mxu0 0
      %454 = vmatprep.subr.bf16.mxu0 0
      %455 = vmatpush1.bf16.msra.mxu0 0
      %456 = vmatprep.subr.bf16.mxu0 0
      %457 = vmatpush1.bf16.msra.mxu0 0
      %458 = vmatprep.subr.bf16.mxu0 0
      %459 = vmatpush1.bf16.msra.mxu0 0
      %460 = vmatprep.mubr.bf16.mxu0 0
      %461 = vmatmul.mubr.bf16.gmra.mrb[0].mxu0 %v369
      %v462 = vpop.f32.mrb[0].mxu0
      %v463 = vadd.f32 0.0, %v462
      %v464 = vpop.f32.mrb[0].mxu0
      %v465 = vpop.f32.mrb[0].mxu0
      %v466 = vadd.f32 0.0, %v465
      %v467 = vpop.f32.mrb[0].mxu0
      %468 = vdwg.mxu0
      %v469 = vld [vmem:[%s5] sm:$0xf]
      %v470 = vld [vmem:[%s5 + $0x4] sm:$0xf]
      %v471 = vld [vmem:[%s5 + $0x8] sm:$0xf]
      %v472 = vld [vmem:[%s5 + $0xc] sm:$0xf]
      %v477 = vunpack.c.l.b16 %v469
      %v478 = vunpack.c.l.b16 %v470
      %v479 = vunpack.c.l.b16 %v471
      %v480 = vunpack.c.l.b16 %v472
      %v481 = vpack.c.b16 %v478, %v477
      %v482 = vpack.c.b16 %v480, %v479
      %485 = vmatprep.subr.bf16.mxu0 0
      %486 = vmatpush1.bf16.msra.mxu0 %v481
      %487 = vmatprep.subr.bf16.mxu0 0
      %488 = vmatpush1.bf16.msra.mxu0 %v482
      %489 = vmatprep.subr.bf16.mxu0 0
      %490 = vmatpush1.bf16.msra.mxu0 0
      %491 = vmatprep.subr.bf16.mxu0 0
      %492 = vmatpush1.bf16.msra.mxu0 0
      %493 = vmatprep.subr.bf16.mxu0 0
      %494 = vmatpush1.bf16.msra.mxu0 0
      %495 = vmatprep.subr.bf16.mxu0 0
      %496 = vmatpush1.bf16.msra.mxu0 0
      %497 = vmatprep.subr.bf16.mxu0 0
      %498 = vmatpush1.bf16.msra.mxu0 0
      %499 = vmatprep.subr.bf16.mxu0 0
      %500 = vmatpush1.bf16.msra.mxu0 0
      %501 = vmatprep.subr.bf16.mxu0 0
      %502 = vmatpush1.bf16.msra.mxu0 0
      %503 = vmatprep.subr.bf16.mxu0 0
      %504 = vmatpush1.bf16.msra.mxu0 0
      %505 = vmatprep.subr.bf16.mxu0 0
      %506 = vmatpush1.bf16.msra.mxu0 0
      %507 = vmatprep.subr.bf16.mxu0 0
      %508 = vmatpush1.bf16.msra.mxu0 0
      %509 = vmatprep.subr.bf16.mxu0 0
      %510 = vmatpush1.bf16.msra.mxu0 0
      %511 = vmatprep.subr.bf16.mxu0 0
      %512 = vmatpush1.bf16.msra.mxu0 0
      %513 = vmatprep.subr.bf16.mxu0 0
      %514 = vmatpush1.bf16.msra.mxu0 0
      %515 = vmatprep.subr.bf16.mxu0 0
      %516 = vmatpush1.bf16.msra.mxu0 0
      %517 = vmatprep.mubr.bf16.mxu0 0
      %518 = vmatmul.mubr.bf16.gmra.mrb[0].mxu0 %v369
      %v519 = vpop.f32.mrb[0].mxu0
      %v520 = vadd.f32 0.0, %v519
      %v521 = vpop.f32.mrb[0].mxu0
      %v522 = vpop.f32.mrb[0].mxu0
      %v523 = vadd.f32 0.0, %v522
      %v524 = vpop.f32.mrb[0].mxu0
      %525 = vdwg.mxu0
      %v526 = vpack.c.bf16 %v409, %v406
      %v527 = vpack.c.bf16 %v466, %v463
      %v529 = vsel %vm367, %v526, 0
      %v532 = vsel %vm367, %v527, 0
      %534 = vmatprep.subr.bf16.mxu0 0
      %535 = vmatpush1.bf16.xpose.msra.mxu0 %v532
      %536 = vmatprep.subr.bf16.mxu0 0
      %537 = vmatpush1.bf16.xpose.msra.mxu0 0
      %538 = vmatprep.subr.bf16.mxu0 0
      %539 = vmatpush1.bf16.xpose.msra.mxu0 0
      %540 = vmatprep.subr.bf16.mxu0 0
      %541 = vmatpush1.bf16.xpose.msra.mxu0 0
      %542 = vmatprep.subr.bf16.mxu0 0
      %543 = vmatpush1.bf16.xpose.msra.mxu0 0
      %544 = vmatprep.subr.bf16.mxu0 0
      %545 = vmatpush1.bf16.xpose.msra.mxu0 0
      %546 = vmatprep.subr.bf16.mxu0 0
      %547 = vmatpush1.bf16.xpose.msra.mxu0 0
      %548 = vmatprep.subr.bf16.mxu0 0
      %549 = vmatpush1.bf16.xpose.msra.mxu0 0
      %550 = vmatprep.subr.bf16.mxu0 0
      %551 = vmatpush1.bf16.xpose.msra.mxu0 0
      %552 = vmatprep.subr.bf16.mxu0 0
      %553 = vmatpush1.bf16.xpose.msra.mxu0 0
      %554 = vmatprep.subr.bf16.mxu0 0
      %555 = vmatpush1.bf16.xpose.msra.mxu0 0
      %556 = vmatprep.subr.bf16.mxu0 0
      %557 = vmatpush1.bf16.xpose.msra.mxu0 0
      %558 = vmatprep.subr.bf16.mxu0 0
      %559 = vmatpush1.bf16.xpose.msra.mxu0 0
      %560 = vmatprep.subr.bf16.mxu0 0
      %561 = vmatpush1.bf16.xpose.msra.mxu0 0
      %562 = vmatprep.subr.bf16.mxu0 0
      %563 = vmatpush1.bf16.xpose.msra.mxu0 0
      %564 = vmatprep.subr.bf16.mxu0 0
      %565 = vmatpush1.bf16.xpose.msra.mxu0 0
      %566 = vmatprep.mubr.bf16.mxu0 0
      %567 = vmatmul.mubr.bf16.gmra.mrb[0].mxu0 %v529
      %v568 = vpop.f32.mrb[0].mxu0
      %v569 = vadd.f32 0.0, %v568
      %v570 = vpop.f32.mrb[0].mxu0
      %v571 = vpop.f32.mrb[0].mxu0
      %v572 = vadd.f32 0.0, %v571
      %v573 = vpop.f32.mrb[0].mxu0
      %574 = vdwg.mxu0
      %v575 = vmul.f32 %v569, 0.17677669
      %v576 = vmul.f32 %v572, 0.17677669
      %v577 = vld [vmem:[%s328] sm:$0x1]
      %v579 = vlaneseq
      %v580 = vshrl.u32 %v579, 7
      %v581 = vsub.s32 0, %v580
      %v582 = vrot.slane %v577, %v581
      %v584 = vadd.f32 %v575, %v582
      %v585 = vadd.f32 %v576, %v582
      %vm586 = vcmask 97280
      %v587 = vsel %vm586, %v584, -inf
      %588 = vmax.xlane.f32.xlu0 %v587
      %v589 = vpop.xlane.xlu0 %588
      %vm590 = vcmask 93184
      %v591 = vsel %vm590, %v585, -inf
      %592 = vmax.xlane.f32.xlu0 %v591
      %v593 = vpop.xlane.xlu0 %592
      %v594 = vsub.f32 %v584, %v589
      %v595 = vsub.f32 %v585, %v593
      %v596 = vmul.f32 %v594, 1.442695
      %v597 = vpow.pop %v596
      %v598 = vmul.f32 %v595, 1.442695
      %v599 = vpow.pop %v598
      %v600 = vsel %vm586, %v597, 0.0
      %601 = vadd.xlane.f32.xlu0 %v600
      %v602 = vpop.xlane.xlu0 %601
      %v603 = vsel %vm590, %v599, 0.0
      %604 = vadd.xlane.f32.xlu0 %v603
      %v605 = vpop.xlane.xlu0 %604
      %v606 = vrcp.pop %v602
      %v607 = vrcp.pop %v605
      %v608 = vmul.f32 %v597, %v606
      %v609 = vmul.f32 %v599, %v607
      %v610 = vpack.c.bf16 %v609, %v608
      %v611 = vpack.c.bf16 %v523, %v520
      %v613 = vsel %vm586, %v610, 0
      %vm615 = vcmask 1045504
      %v617 = vsel %vm615, %v611, 0
      %619 = vmatprep.subr.bf16.mxu0 0
      %620 = vmatpush1.bf16.msra.mxu0 %v617
      %621 = vmatprep.subr.bf16.mxu0 0
      %622 = vmatpush1.bf16.msra.mxu0 0
      %623 = vmatprep.subr.bf16.mxu0 0
      %624 = vmatpush1.bf16.msra.mxu0 0
      %625 = vmatprep.subr.bf16.mxu0 0
      %626 = vmatpush1.bf16.msra.mxu0 0
      %627 = vmatprep.subr.bf16.mxu0 0
      %628 = vmatpush1.bf16.msra.mxu0 0
      %629 = vmatprep.subr.bf16.mxu0 0
      %630 = vmatpush1.bf16.msra.mxu0 0
      %631 = vmatprep.subr.bf16.mxu0 0
      %632 = vmatpush1.bf16.msra.mxu0 0
      %633 = vmatprep.subr.bf16.mxu0 0
      %634 = vmatpush1.bf16.msra.mxu0 0
      %635 = vmatprep.subr.bf16.mxu0 0
      %636 = vmatpush1.bf16.msra.mxu0 0
      %637 = vmatprep.subr.bf16.mxu0 0
      %638 = vmatpush1.bf16.msra.mxu0 0
      %639 = vmatprep.subr.bf16.mxu0 0
      %640 = vmatpush1.bf16.msra.mxu0 0
      %641 = vmatprep.subr.bf16.mxu0 0
      %642 = vmatpush1.bf16.msra.mxu0 0
      %643 = vmatprep.subr.bf16.mxu0 0
      %644 = vmatpush1.bf16.msra.mxu0 0
      %645 = vmatprep.subr.bf16.mxu0 0
      %646 = vmatpush1.bf16.msra.mxu0 0
      %647 = vmatprep.subr.bf16.mxu0 0
      %648 = vmatpush1.bf16.msra.mxu0 0
      %649 = vmatprep.subr.bf16.mxu0 0
      %650 = vmatpush1.bf16.msra.mxu0 0
      %651 = vmatprep.mubr.bf16.mxu0 0
      %652 = vmatmul.mubr.bf16.gmra.mrb[0].mxu0 %v613
      %v653 = vpop.f32.mrb[0].mxu0
      %v654 = vadd.f32 0.0, %v653
      %v655 = vpop.f32.mrb[0].mxu0
      %v656 = vpop.f32.mrb[0].mxu0
      %v657 = vadd.f32 0.0, %v656
      %v658 = vpop.f32.mrb[0].mxu0
      %659 = vdwg.mxu0
      %v660 = vpack.c.bf16 %v657, %v654
      %v661 = vld [vmem:[%s6] sm:$0xf]
      %v662 = vld [vmem:[%s6 + $0x4] sm:$0xf]
      %v663 = vld [vmem:[%s6 + $0x8] sm:$0xf]
      %v664 = vld [vmem:[%s6 + $0xc] sm:$0xf]
      %v665 = vld [vmem:[%s7] sm:$0x1]
      %v667 = vlaneseq
      %v668 = vshrl.u32 %v667, 7
      %v669 = vsub.s32 0, %v668
      %v670 = vrot.slane %v665, %v669
      %v676 = vunpack.c.l.b16 %v661
      %v677 = vunpack.c.l.b16 %v662
      %v678 = vunpack.c.l.b16 %v663
      %v679 = vunpack.c.l.b16 %v664
      %v680 = vpack.c.b16 %v677, %v676
      %v681 = vpack.c.b16 %v679, %v678
      %v685 = vsel %vm367, %v660, 0
      %687 = vmatprep.subr.bf16.mxu0 0
      %688 = vmatpush1.bf16.msra.mxu0 %v680
      %689 = vmatprep.subr.bf16.mxu0 0
      %690 = vmatpush1.bf16.msra.mxu0 %v681
      %691 = vmatprep.subr.bf16.mxu0 0
      %692 = vmatpush1.bf16.msra.mxu0 0
      %693 = vmatprep.subr.bf16.mxu0 0
      %694 = vmatpush1.bf16.msra.mxu0 0
      %695 = vmatprep.subr.bf16.mxu0 0
      %696 = vmatpush1.bf16.msra.mxu0 0
      %697 = vmatprep.subr.bf16.mxu0 0
      %698 = vmatpush1.bf16.msra.mxu0 0
      %699 = vmatprep.subr.bf16.mxu0 0
      %700 = vmatpush1.bf16.msra.mxu0 0
      %701 = vmatprep.subr.bf16.mxu0 0
      %702 = vmatpush1.bf16.msra.mxu0 0
      %703 = vmatprep.subr.bf16.mxu0 0
      %704 = vmatpush1.bf16.msra.mxu0 0
      %705 = vmatprep.subr.bf16.mxu0 0
      %706 = vmatpush1.bf16.msra.mxu0 0
      %707 = vmatprep.subr.bf16.mxu0 0
      %708 = vmatpush1.bf16.msra.mxu0 0
      %709 = vmatprep.subr.bf16.mxu0 0
      %710 = vmatpush1.bf16.msra.mxu0 0
      %711 = vmatprep.subr.bf16.mxu0 0
      %712 = vmatpush1.bf16.msra.mxu0 0
      %713 = vmatprep.subr.bf16.mxu0 0
      %714 = vmatpush1.bf16.msra.mxu0 0
      %715 = vmatprep.subr.bf16.mxu0 0
      %716 = vmatpush1.bf16.msra.mxu0 0
      %717 = vmatprep.subr.bf16.mxu0 0
      %718 = vmatpush1.bf16.msra.mxu0 0
      %719 = vmatprep.mubr.bf16.mxu0 0
      %720 = vmatmul.mubr.bf16.gmra.mrb[0].mxu0 %v685
      %v721 = vpop.f32.mrb[0].mxu0
      %v722 = vadd.f32 %v670, %v721
      %v723 = vpop.f32.mrb[0].mxu0
      %v724 = vpop.f32.mrb[0].mxu0
      %v725 = vadd.f32 %v670, %v724
      %v726 = vpop.f32.mrb[0].mxu0
      %727 = vdwg.mxu0
      %v728 = vadd.f32 %v722, %v348
      %v729 = vadd.f32 %v725, %v349
      %v730 = vmax.f32 %v728, 0.0
      %v731 = vmax.f32 %v729, 0.0
      %732 = vst.msk [vmem:[%s333] sm:$0xff] %vm367, %v730
      %vm733 = vcmask 257024
      %734 = vst.msk [vmem:[%s333 + $0x8] sm:$0xf] %vm733, %v731
      %p735 = scmp.lt.s32.totalorder %s19, 1
      %s736 = scalar_select %p735, %s19, 1
      %s737 = smul.addr %s736, 2
      %s738 = smul.addr %s737, 8
      %s739 = scalar_lea.vmem %s8, %s738
      // Predicated region
      $region53: #{forward_count.31} parent=51 // pred_check
        %p740 = pneg %p220
      $region54: #{forward_count.31} parent=51 // pred_check_branch
        %742 = sbr.rel (%p740) target = $region56
      $region55: #{forward_count.31} parent=51 // pred_region
        _
      $region56: #{forward_count.31} parent=51 // pred_fallthru
        _
    $region52: #{forward_count.31} parent=5 // pred_fallthru
      _
    %p743 = scmp.le.s32.totalorder 2, %s14
    // Predicated region
    $region57: #{forward_count.31} parent=5 // pred_check
      %p744 = pneg %p743
    $region58: #{forward_count.31} parent=5 // pred_check_branch
      %746 = sbr.rel (%p744) target = $region60
    $region59: #{forward_count.31} parent=5 // pred_region
      %s747 = ssub.s32 %s14, 2
      // Predicated region
      $region61: #{forward_count.31} parent=59 // pred_check
        %p748 = pneg %p226
      $region62: #{forward_count.31} parent=59 // pred_check_branch
        %750 = sbr.rel (%p748) target = $region64
      $region63: #{forward_count.31} parent=59 // pred_region
        %p751 = scmp.lt.s32.totalorder %s20, 1
        %s752 = scalar_select %p751, %s20, 1
        %s753 = smul.addr %s752, 2
        %s754 = smul.addr %s753, 8
        %s755 = scalar_lea.vmem %s8, %s754
      $region64: #{forward_count.31} parent=59 // pred_fallthru
        _
    $region60: #{forward_count.31} parent=5 // pred_fallthru
      _
  $region6: #{forward_count.31} parent=0 // loop_footer
    %s18 = sadd.s32 1, %s14
  $region7: #{forward_count.31} parent=0 // loop_footer_branch
    %13 = sbr.rel target = $region3
  $region8: #{forward_count.31} parent=0 // loop_exit
    _

// kernel: forward_count.33
$region0: #{forward_count.33}
  #allocation0 [shape = 'u32[]', space=smem, size = 0x4, offset = 0x4, fixed_abs, tag = 'smem constant byte address 0x4 - core index']
  #allocation1 [shape = 'u32[144,128]{1,0:T(1,128)}', space=vmem, size = 0x12000, scoped, tag = 'internal scratch']
  #allocation2 [shape = 'f32[8,128]{1,0:T(8,128)}', space=vmem, size = 0x1000, scoped, tag = 'scratch operand']
  %s0 = inlined_call_operand.vmem [shape: bf16[8,128], index: 0, kind: input, shape index: {}]
  %s1 = inlined_call_operand.vmem [shape: bf16[128,128], index: 1, kind: input, shape index: {}]
  %s2 = inlined_call_operand.vmem [shape: f32[1,128], index: 2, kind: input, shape index: {}]
  %s3 = inlined_call_operand.vmem [shape: f32[8,128], index: 3, kind: output, shape index: {}]
  %s4 = sld [smem:[#allocation0]]
  $region30: #{forward_count.33} parent=0
    _
  %s6 = ssub.s32 1, %s4
  %s7 = scalar_select 0, %s6, %s4
  // Predicated region
  $region2: #{forward_count.33} parent=0 // pred_check
    _
  $region3: #{forward_count.33} parent=0 // pred_check_branch
    %9 = sbr.rel (0) target = $region5
  $region4: #{forward_count.33} parent=0 // pred_region
    _
  $region5: #{forward_count.33} parent=0 // pred_fallthru
    _
  // Predicated region
  $region6: #{forward_count.33} parent=0 // pred_check
    _
  $region7: #{forward_count.33} parent=0 // pred_check_branch
    %11 = sbr.rel (0) target = $region9
  $region8: #{forward_count.33} parent=0 // pred_region
    _
  $region9: #{forward_count.33} parent=0 // pred_fallthru
    _
  // Predicated region
  $region10: #{forward_count.33} parent=0 // pred_check
    _
  $region11: #{forward_count.33} parent=0 // pred_check_branch
    %13 = sbr.rel (0) target = $region13
  $region12: #{forward_count.33} parent=0 // pred_region
    _
  $region13: #{forward_count.33} parent=0 // pred_fallthru
    _
  %p15 = scmp.eq.s32.totalorder 0, 0
  // Predicated region
  $region14: #{forward_count.33} parent=0 // pred_check
    %p16 = pneg %p15
  $region15: #{forward_count.33} parent=0 // pred_check_branch
    %18 = sbr.rel (%p16) target = $region17
  $region16: #{forward_count.33} parent=0 // pred_region
    %19 = vst [vmem:[#allocation2] sm:$0xff] 0.0
  $region17: #{forward_count.33} parent=0 // pred_fallthru
    _
  %v20 = vld [vmem:[#allocation2] sm:$0xff]
  %v21 = vld [vmem:[%s0] sm:$0xf]
  %v22 = vld [vmem:[%s1] sm:$0xf]
  %v23 = vld [vmem:[%s1 + $0x4] sm:$0xf]
  %v24 = vld [vmem:[%s1 + $0x8] sm:$0xf]
  %v25 = vld [vmem:[%s1 + $0xc] sm:$0xf]
  %v26 = vld [vmem:[%s1 + $0x10] sm:$0xf]
  %v27 = vld [vmem:[%s1 + $0x14] sm:$0xf]
  %v28 = vld [vmem:[%s1 + $0x18] sm:$0xf]
  %v29 = vld [vmem:[%s1 + $0x1c] sm:$0xf]
  %v30 = vld [vmem:[%s1 + $0x20] sm:$0xf]
  %v31 = vld [vmem:[%s1 + $0x24] sm:$0xf]
  %v32 = vld [vmem:[%s1 + $0x28] sm:$0xf]
  %v33 = vld [vmem:[%s1 + $0x2c] sm:$0xf]
  %v34 = vld [vmem:[%s1 + $0x30] sm:$0xf]
  %v35 = vld [vmem:[%s1 + $0x34] sm:$0xf]
  %v36 = vld [vmem:[%s1 + $0x38] sm:$0xf]
  %v37 = vld [vmem:[%s1 + $0x3c] sm:$0xf]
  %v54 = vunpack.c.l.b16 %v22
  %v55 = vunpack.c.l.b16 %v23
  %v56 = vunpack.c.l.b16 %v24
  %v57 = vunpack.c.l.b16 %v25
  %v58 = vunpack.c.l.b16 %v26
  %v59 = vunpack.c.l.b16 %v27
  %v60 = vunpack.c.l.b16 %v28
  %v61 = vunpack.c.l.b16 %v29
  %v62 = vunpack.c.l.b16 %v30
  %v63 = vunpack.c.l.b16 %v31
  %v64 = vunpack.c.l.b16 %v32
  %v65 = vunpack.c.l.b16 %v33
  %v66 = vunpack.c.l.b16 %v34
  %v67 = vunpack.c.l.b16 %v35
  %v68 = vunpack.c.l.b16 %v36
  %v69 = vunpack.c.l.b16 %v37
  %v70 = vpack.c.b16 %v55, %v54
  %v71 = vpack.c.b16 %v57, %v56
  %v72 = vpack.c.b16 %v59, %v58
  %v73 = vpack.c.b16 %v61, %v60
  %v74 = vpack.c.b16 %v63, %v62
  %v75 = vpack.c.b16 %v65, %v64
  %v76 = vpack.c.b16 %v67, %v66
  %v77 = vpack.c.b16 %v69, %v68
  %86 = vmatprep.subr.bf16.mxu0 0
  %87 = vmatpush1.bf16.msra.mxu0 %v70
  %88 = vmatprep.subr.bf16.mxu0 0
  %89 = vmatpush1.bf16.msra.mxu0 %v71
  %90 = vmatprep.subr.bf16.mxu0 0
  %91 = vmatpush1.bf16.msra.mxu0 %v72
  %92 = vmatprep.subr.bf16.mxu0 0
  %93 = vmatpush1.bf16.msra.mxu0 %v73
  %94 = vmatprep.subr.bf16.mxu0 0
  %95 = vmatpush1.bf16.msra.mxu0 %v74
  %96 = vmatprep.subr.bf16.mxu0 0
  %97 = vmatpush1.bf16.msra.mxu0 %v75
  %98 = vmatprep.subr.bf16.mxu0 0
  %99 = vmatpush1.bf16.msra.mxu0 %v76
  %100 = vmatprep.subr.bf16.mxu0 0
  %101 = vmatpush1.bf16.msra.mxu0 %v77
  %102 = vmatprep.subr.bf16.mxu0 0
  %103 = vmatpush1.bf16.msra.mxu0 0
  %104 = vmatprep.subr.bf16.mxu0 0
  %105 = vmatpush1.bf16.msra.mxu0 0
  %106 = vmatprep.subr.bf16.mxu0 0
  %107 = vmatpush1.bf16.msra.mxu0 0
  %108 = vmatprep.subr.bf16.mxu0 0
  %109 = vmatpush1.bf16.msra.mxu0 0
  %110 = vmatprep.subr.bf16.mxu0 0
  %111 = vmatpush1.bf16.msra.mxu0 0
  %112 = vmatprep.subr.bf16.mxu0 0
  %113 = vmatpush1.bf16.msra.mxu0 0
  %114 = vmatprep.subr.bf16.mxu0 0
  %115 = vmatpush1.bf16.msra.mxu0 0
  %116 = vmatprep.subr.bf16.mxu0 0
  %117 = vmatpush1.bf16.msra.mxu0 0
  %118 = vmatprep.mubr.bf16.mxu0 0
  %119 = vmatmul.mubr.bf16.gmra.mrb[0].mxu0 %v21
  %v120 = vpop.f32.mrb[0].mxu0
  %v121 = vadd.f32 0.0, %v120
  %v122 = vpop.f32.mrb[0].mxu0
  %v123 = vpop.f32.mrb[0].mxu0
  %v124 = vpop.f32.mrb[0].mxu0
  %125 = vdwg.mxu0
  %v126 = vadd.f32 %v20, %v121
  %127 = vst [vmem:[#allocation2] sm:$0xff] %v126
  // Predicated region
  $region18: #{forward_count.33} parent=0 // pred_check
    %p128 = pneg %p15
  $region19: #{forward_count.33} parent=0 // pred_check_branch
    %130 = sbr.rel (%p128) target = $region21
  $region20: #{forward_count.33} parent=0 // pred_region
    %v131 = vld [vmem:[#allocation2] sm:$0xff]
    %v132 = vld [vmem:[%s2] sm:$0x1]
    %v134 = vlaneseq
    %v135 = vshrl.u32 %v134, 7
    %v136 = vsub.s32 0, %v135
    %v137 = vrot.slane %v132, %v136
    %v139 = vadd.f32 %v131, %v137
    %140 = vst [vmem:[%s3] sm:$0xff] %v139
  $region21: #{forward_count.33} parent=0 // pred_fallthru
    _
  // Predicated region
  $region22: #{forward_count.33} parent=0 // pred_check
    _
  $region23: #{forward_count.33} parent=0 // pred_check_branch
    %142 = sbr.rel (0) target = $region25
  $region24: #{forward_count.33} parent=0 // pred_region
    _
  $region25: #{forward_count.33} parent=0 // pred_fallthru
    _
  // Predicated region
  $region26: #{forward_count.33} parent=0 // pred_check
    _
  $region27: #{forward_count.33} parent=0 // pred_check_branch
    %144 = sbr.rel (0) target = $region29
  $region28: #{forward_count.33} parent=0 // pred_region
    _
  $region29: #{forward_count.33} parent=0 // pred_fallthru
    _

</llo_original>
